<compile_context>
chip_gen: v6e
topology: v6e:2x2x1
jax: 0.10.0
libtpu: 0.0.40
codegen_flags: <defaults>
</compile_context>

<pallas_src>
import functools

import jax
import jax.numpy as jnp
from jax.experimental import pallas as pl
from jax.experimental.pallas import tpu as pltpu

NEG_SLOPE = 0.2      # GATv2Conv default negative_slope
NEG_INF = -1e30


# ----------------------------------------------------------------------------
# Fused Pallas kernel: whole GNN forward in one launch
# ----------------------------------------------------------------------------
def _gnn_fused_kernel(*refs, num_conv, num_heads, hidden_ch, skip_alpha):
    """refs = (x, adj_bias,
               [wl, bl, wr, br, att, gat_bias] * num_conv,
               lin1_w, lin1_b, lin2_w, lin2_b, out_ref)."""
    x_ref, adj_ref = refs[0], refs[1]
    conv_refs = refs[2:2 + 6 * num_conv]
    lw1_ref, lb1_ref, lw2_ref, lb2_ref = refs[2 + 6 * num_conv:6 + 6 * num_conv]
    out_ref = refs[6 + 6 * num_conv]

    adj_bias = adj_ref[...]        # [N, N] additive mask: 0 (edge) / NEG_INF
    C = hidden_ch

    h = x_ref[...]                 # [N, F_in] f32
    h_first = None

    for layer in range(num_conv):                               # static unroll
        wl, bl, wr, br, att, gbias = (
            r[...] for r in conv_refs[6 * layer:6 * layer + 6])
        # wl/wr: bf16 [F_in, H*C]; bl/br/gbias: f32 [1, H*C]; att: f32 [H, C].

        # Source / target projections for ALL heads at once (bf16 MXU, f32 acc).
        hb = h.astype(jnp.bfloat16)
        xl = jnp.dot(hb, wl, preferred_element_type=jnp.float32) + bl   # [N, H*C]
        xr = jnp.dot(hb, wr, preferred_element_type=jnp.float32) + br   # [N, H*C]

        head_outs = []
        for hh in range(num_heads):                             # static unroll
            xl_h = xl[:, hh * C:(hh + 1) * C]                   # [N, C]  (src proj)
            xr_h = xr[:, hh * C:(hh + 1) * C]                   # [N, C]  (dst proj)
            att_h = att[hh, :]                                  # [C]

            # s[i, j, c] = xr_h[i, c] + xl_h[j, c]   (i = dst, j = src)
            s = xr_h[:, None, :] + xl_h[None, :, :]             # [Nd, Ns, C]
            s = jnp.where(s > 0, s, NEG_SLOPE * s)              # LeakyReLU(0.2)

            # Score contraction on VPU (+XLU lane reduce over C); src ends on lanes.
            e = jnp.sum(s * att_h[None, None, :], axis=-1)      # [Nd, Ns]
            e = e + adj_bias                                    # mask non-edges

            # Softmax over src nodes (last / lane axis).
            e = e - jnp.max(e, axis=-1, keepdims=True)
            p = jnp.exp(e)
            denom = jnp.sum(p, axis=-1, keepdims=True)
            alpha_w = p * pl.reciprocal(denom, approx=True)     # [Nd, Ns]

            # Aggregation: dense per-head MXU matmul alpha @ xl_h.
            agg_h = jnp.dot(alpha_w.astype(jnp.bfloat16),
                            xl_h.astype(jnp.bfloat16),
                            preferred_element_type=jnp.float32)  # [N, C]
            head_outs.append(agg_h)

        agg = jnp.concatenate(head_outs, axis=-1)               # [N, H*C]

        # GATv2 bias + fused ReLU (dropout = identity in eval mode).
        h = jnp.maximum(agg + gbias, 0.0)
        if layer == 0:
            h_first = h

    # InitialConnection skip (identity when only one conv output exists).
    if num_conv > 1:
        x_skip = (1.0 - skip_alpha) * h + skip_alpha * h_first
    else:
        x_skip = h

    # lin1 + ReLU (unpadded, out_ch wide) -> lin2 (output lane-padded) -> sigmoid.
    h1 = jnp.dot(x_skip.astype(jnp.bfloat16), lw1_ref[...],
                 preferred_element_type=jnp.float32) + lb1_ref[...]
    h1 = jnp.maximum(h1, 0.0)                                    # [N, out_ch]
    z = jnp.dot(h1.astype(jnp.bfloat16), lw2_ref[...],
                preferred_element_type=jnp.float32) + lb2_ref[...]   # [N, 128]
    # sigmoid via EUP exp + approx reciprocal; single lane-dense store.
    out_ref[...] = pl.reciprocal(1.0 + jnp.exp(-z), approx=True)


# ----------------------------------------------------------------------------
# Wrapper: data prep (padding, mask, bf16 weights) + single pallas_call
# ----------------------------------------------------------------------------
def gnn_forward(x, edge_index, params, num_layers, num_heads, hidden_ch,
                out_ch, alpha=0.5):
    n = x.shape[0]
    n_pad = max(8, ((n + 7) // 8) * 8)         # sublane-aligned node axis
    num_conv = num_layers - 1

    # Pad nodes.
    x_pad = jnp.zeros((n_pad, x.shape[1]), jnp.float32).at[:n].set(x)

    # Dense adjacency adj[dst, src] with self loops (GATv2 add_self_loops=True),
    # converted once to a single [N, N] additive softmax mask (no per-head copy).
    adj = jnp.zeros((n_pad, n_pad), jnp.float32)
    adj = adj.at[edge_index[1], edge_index[0]].set(1.0)
    adj = jnp.maximum(adj, jnp.eye(n_pad, dtype=jnp.float32))
    adj_bias = jnp.where(adj > 0, 0.0, NEG_INF).astype(jnp.float32)

    # Per-layer conv params; weights pre-cast to bf16 (halves DMA, feeds MXU).
    conv_args = []
    for p in params["convs"]:
        conv_args += [p["wl"].astype(jnp.bfloat16), p["bl"],
                      p["wr"].astype(jnp.bfloat16), p["br"],
                      p["att"], p["bias"]]

    # MLP head: lin1 unpadded; only lin2's OUTPUT dim padded to 128 lanes so the
    # single final store is lane-dense.
    out_pad = ((out_ch + 127) // 128) * 128
    hc = hidden_ch * num_heads
    w1 = params["lin1_w"].astype(jnp.bfloat16)                         # [HC, out_ch]
    b1 = params["lin1_b"]                                              # [1, out_ch]
    w2 = (jnp.zeros((out_ch, out_pad), jnp.float32)
          .at[:, :out_ch].set(params["lin2_w"])).astype(jnp.bfloat16)  # [out_ch, 128]
    b2 = jnp.zeros((1, out_pad), jnp.float32).at[:, :out_ch].set(params["lin2_b"])

    kernel = functools.partial(_gnn_fused_kernel, num_conv=num_conv,
                               num_heads=num_heads, hidden_ch=hidden_ch,
                               skip_alpha=alpha)
    n_in = 2 + 6 * num_conv + 4
    out = pl.pallas_call(
        kernel,
        out_shape=jax.ShapeDtypeStruct((n_pad, out_pad), jnp.float32),
        in_specs=[pl.BlockSpec(memory_space=pltpu.MemorySpace.VMEM)] * n_in,
        out_specs=pl.BlockSpec(memory_space=pltpu.MemorySpace.VMEM),
        compiler_params=pltpu.CompilerParams(
            # Comfortable on all generations at toy N; re-derive with the
            # dst-tiled grid for large graphs (v7x physical VMEM is 64 MiB).
            vmem_limit_bytes=32 * 1024 * 1024),
    )(x_pad, adj_bias, *conv_args, w1, b1, w2, b2)

    return out[:n, :out_ch]


# ----------------------------------------------------------------------------
# Parameter initialization (deterministic, synthetic)
# ----------------------------------------------------------------------------
def _glorot(key, shape):
    fan_in, fan_out = shape[0], shape[-1]
    lim = (6.0 / (fan_in + fan_out)) ** 0.5
    return jax.random.uniform(key, shape, jnp.float32, -lim, lim)


def _init_gat_params(key, f_in, out_ch, heads):
    ks = jax.random.split(key, 6)
    hc = heads * out_ch
    return dict(
        wl=_glorot(ks[0], (f_in, hc)),
        bl=0.01 * jax.random.normal(ks[1], (1, hc), jnp.float32),
        wr=_glorot(ks[2], (f_in, hc)),
        br=0.01 * jax.random.normal(ks[3], (1, hc), jnp.float32),
        att=_glorot(ks[4], (heads, out_ch)),
        bias=0.01 * jax.random.normal(ks[5], (1, hc), jnp.float32),
    )


def init_gnn_params(key, in_ch, hidden_ch, out_ch, num_layers, num_heads):
    keys = jax.random.split(key, num_layers + 4)
    convs = [_init_gat_params(keys[0], in_ch, hidden_ch, num_heads)]
    for i in range(2, num_layers):
        convs.append(_init_gat_params(keys[i - 1], hidden_ch * num_heads,
                                      hidden_ch, num_heads))
    hc = hidden_ch * num_heads
    return dict(
        convs=convs,
        lin1_w=_glorot(keys[-4], (hc, out_ch)),
        lin1_b=0.01 * jax.random.normal(keys[-3], (1, out_ch), jnp.float32),
        lin2_w=_glorot(keys[-2], (out_ch, out_ch)),
        lin2_b=0.01 * jax.random.normal(keys[-1], (1, out_ch), jnp.float32),
    )


# ----------------------------------------------------------------------------
if __name__ == "__main__":
    key = jax.random.PRNGKey(0)
    kx, kp = jax.random.split(key)

    N = 16                       # number of graph nodes
    in_channels = 8
    hidden_channels = 16
    out_channels = 4
    num_layers = 3
    num_heads = 2

    x = jax.random.normal(kx, (N, in_channels), dtype=jnp.float32)

    # Deterministic, duplicate-free edge set (edge_index[0]=src, [1]=dst).
    src, dst = [], []
    for i in range(N):
        for off in (1, 3, 7):
            src.append(i)
            dst.append((i + off) % N)
    edge_index = jnp.array([src, dst], dtype=jnp.int32)     # [2, E]

    params = init_gnn_params(kp, in_channels, hidden_channels, out_channels,
                             num_layers, num_heads)

    out = gnn_forward(x, edge_index, params, num_layers, num_heads,
                      hidden_channels, out_channels)
    out = jax.block_until_ready(out)

    assert out.shape == (N, out_channels)
    assert bool(jnp.all(jnp.isfinite(out)))
    assert bool(jnp.all((out >= 0.0) & (out <= 1.0)))   # sigmoid range
    print("KERNEL_OK")
</pallas_src>

<mosaic_0001>
module attributes {stable_mosaic.version = 11 : i64} {
  func.func @_gnn_fused_kernel(%arg0: memref<16x8xf32, #tpu.memory_space<vmem>>, %arg1: memref<16x16xf32, #tpu.memory_space<vmem>>, %arg2: memref<8x32xbf16, #tpu.memory_space<vmem>>, %arg3: memref<1x32xf32, #tpu.memory_space<vmem>>, %arg4: memref<8x32xbf16, #tpu.memory_space<vmem>>, %arg5: memref<1x32xf32, #tpu.memory_space<vmem>>, %arg6: memref<2x16xf32, #tpu.memory_space<vmem>>, %arg7: memref<1x32xf32, #tpu.memory_space<vmem>>, %arg8: memref<32x32xbf16, #tpu.memory_space<vmem>>, %arg9: memref<1x32xf32, #tpu.memory_space<vmem>>, %arg10: memref<32x32xbf16, #tpu.memory_space<vmem>>, %arg11: memref<1x32xf32, #tpu.memory_space<vmem>>, %arg12: memref<2x16xf32, #tpu.memory_space<vmem>>, %arg13: memref<1x32xf32, #tpu.memory_space<vmem>>, %arg14: memref<32x4xbf16, #tpu.memory_space<vmem>>, %arg15: memref<1x4xf32, #tpu.memory_space<vmem>>, %arg16: memref<4x128xbf16, #tpu.memory_space<vmem>>, %arg17: memref<1x128xf32, #tpu.memory_space<vmem>>, %arg18: memref<16x128xf32, #tpu.memory_space<vmem>>) attributes {dimension_semantics = [], scalar_prefetch = 0 : i64, scratch_operands = 0 : i64, tpu.core_type = #tpu.core_type<tc>} {
    %c0 = arith.constant 0 : index
    %c0_0 = arith.constant 0 : index
    %0 = vector.load %arg1[%c0, %c0_0] : memref<16x16xf32, #tpu.memory_space<vmem>>, vector<16x16xf32>
    %c0_1 = arith.constant 0 : index
    %c0_2 = arith.constant 0 : index
    %1 = vector.load %arg0[%c0_1, %c0_2] : memref<16x8xf32, #tpu.memory_space<vmem>>, vector<16x8xf32>
    %c0_3 = arith.constant 0 : index
    %c0_4 = arith.constant 0 : index
    %2 = vector.load %arg2[%c0_3, %c0_4] : memref<8x32xbf16, #tpu.memory_space<vmem>>, vector<8x32xbf16>
    %c0_5 = arith.constant 0 : index
    %c0_6 = arith.constant 0 : index
    %3 = vector.load %arg3[%c0_5, %c0_6] : memref<1x32xf32, #tpu.memory_space<vmem>>, vector<1x32xf32>
    %c0_7 = arith.constant 0 : index
    %c0_8 = arith.constant 0 : index
    %4 = vector.load %arg4[%c0_7, %c0_8] : memref<8x32xbf16, #tpu.memory_space<vmem>>, vector<8x32xbf16>
    %c0_9 = arith.constant 0 : index
    %c0_10 = arith.constant 0 : index
    %5 = vector.load %arg5[%c0_9, %c0_10] : memref<1x32xf32, #tpu.memory_space<vmem>>, vector<1x32xf32>
    %c0_11 = arith.constant 0 : index
    %c0_12 = arith.constant 0 : index
    %6 = vector.load %arg6[%c0_11, %c0_12] : memref<2x16xf32, #tpu.memory_space<vmem>>, vector<2x16xf32>
    %c0_13 = arith.constant 0 : index
    %c0_14 = arith.constant 0 : index
    %7 = vector.load %arg7[%c0_13, %c0_14] : memref<1x32xf32, #tpu.memory_space<vmem>>, vector<1x32xf32>
    %8 = arith.truncf %1 : vector<16x8xf32> to vector<16x8xbf16>
    %cst = arith.constant dense<0.000000e+00> : vector<16x32xf32>
    %9 = tpu.matmul %8, %2, %cst {dimension_numbers = #tpu.dot_dimension_numbers<[1], [0], [0], [1], [0, 0, 1, 1], [], []>} : vector<16x8xbf16>, vector<8x32xbf16>, vector<16x32xf32> -> vector<16x32xf32>
    %10 = vector.broadcast %3 : vector<1x32xf32> to vector<16x32xf32>
    %11 = arith.addf %9, %10 : vector<16x32xf32>
    %cst_15 = arith.constant dense<0.000000e+00> : vector<16x32xf32>
    %12 = tpu.matmul %8, %4, %cst_15 {dimension_numbers = #tpu.dot_dimension_numbers<[1], [0], [0], [1], [0, 0, 1, 1], [], []>} : vector<16x8xbf16>, vector<8x32xbf16>, vector<16x32xf32> -> vector<16x32xf32>
    %13 = vector.broadcast %5 : vector<1x32xf32> to vector<16x32xf32>
    %14 = arith.addf %12, %13 : vector<16x32xf32>
    %15 = vector.extract_strided_slice %11 {offsets = [0, 0], sizes = [16, 16], strides = [1, 1]} : vector<16x32xf32> to vector<16x16xf32>
    %16 = vector.extract_strided_slice %14 {offsets = [0, 0], sizes = [16, 16], strides = [1, 1]} : vector<16x32xf32> to vector<16x16xf32>
    %17 = vector.extract_strided_slice %6 {offsets = [0, 0], sizes = [1, 16], strides = [1, 1]} : vector<2x16xf32> to vector<1x16xf32>
    %18 = vector.shape_cast %17 : vector<1x16xf32> to vector<16xf32>
    %19 = vector.shape_cast %16 : vector<16x16xf32> to vector<16x1x16xf32>
    %20 = vector.shape_cast %15 : vector<16x16xf32> to vector<1x16x16xf32>
    %21 = vector.broadcast %19 : vector<16x1x16xf32> to vector<16x16x16xf32>
    %22 = vector.broadcast %20 : vector<1x16x16xf32> to vector<16x16x16xf32>
    %23 = arith.addf %21, %22 : vector<16x16x16xf32>
    %cst_16 = arith.constant 0.000000e+00 : f32
    %24 = vector.broadcast %cst_16 : f32 to vector<16x16x16xf32>
    %25 = arith.cmpf ogt, %23, %24 : vector<16x16x16xf32>
    %cst_17 = arith.constant 2.000000e-01 : f32
    %26 = vector.broadcast %cst_17 : f32 to vector<16x16x16xf32>
    %27 = arith.mulf %26, %23 : vector<16x16x16xf32>
    %28 = arith.select %25, %23, %27 : vector<16x16x16xi1>, vector<16x16x16xf32>
    %29 = vector.shape_cast %18 : vector<16xf32> to vector<1x1x16xf32>
    %30 = vector.broadcast %29 : vector<1x1x16xf32> to vector<16x16x16xf32>
    %31 = arith.mulf %28, %30 : vector<16x16x16xf32>
    %cst_18 = arith.constant dense<0.000000e+00> : vector<16x16xf32>
    %32 = vector.multi_reduction <add>, %31, %cst_18 [2] : vector<16x16x16xf32> to vector<16x16xf32>
    %33 = arith.addf %32, %0 : vector<16x16xf32>
    %cst_19 = arith.constant dense<0xFF800000> : vector<16xf32>
    %34 = vector.multi_reduction <maximumf>, %33, %cst_19 [1] : vector<16x16xf32> to vector<16xf32>
    %35 = vector.shape_cast %34 : vector<16xf32> to vector<16x1xf32>
    %36 = vector.broadcast %35 : vector<16x1xf32> to vector<16x16xf32>
    %37 = arith.subf %33, %36 : vector<16x16xf32>
    %38 = math.exp %37 : vector<16x16xf32>
    %cst_20 = arith.constant dense<0.000000e+00> : vector<16xf32>
    %39 = vector.multi_reduction <add>, %38, %cst_20 [1] : vector<16x16xf32> to vector<16xf32>
    %40 = vector.shape_cast %39 : vector<16xf32> to vector<16x1xf32>
    %41 = tpu.reciprocal %40 {approx = true} : vector<16x1xf32> -> vector<16x1xf32>
    %42 = vector.broadcast %41 : vector<16x1xf32> to vector<16x16xf32>
    %43 = arith.mulf %38, %42 : vector<16x16xf32>
    %44 = arith.truncf %43 : vector<16x16xf32> to vector<16x16xbf16>
    %45 = arith.truncf %15 : vector<16x16xf32> to vector<16x16xbf16>
    %cst_21 = arith.constant dense<0.000000e+00> : vector<16x16xf32>
    %46 = tpu.matmul %44, %45, %cst_21 {dimension_numbers = #tpu.dot_dimension_numbers<[1], [0], [0], [1], [0, 0, 1, 1], [], []>} : vector<16x16xbf16>, vector<16x16xbf16>, vector<16x16xf32> -> vector<16x16xf32>
    %47 = vector.extract_strided_slice %11 {offsets = [0, 16], sizes = [16, 16], strides = [1, 1]} : vector<16x32xf32> to vector<16x16xf32>
    %48 = vector.extract_strided_slice %14 {offsets = [0, 16], sizes = [16, 16], strides = [1, 1]} : vector<16x32xf32> to vector<16x16xf32>
    %49 = vector.extract_strided_slice %6 {offsets = [1, 0], sizes = [1, 16], strides = [1, 1]} : vector<2x16xf32> to vector<1x16xf32>
    %50 = vector.shape_cast %49 : vector<1x16xf32> to vector<16xf32>
    %51 = vector.shape_cast %48 : vector<16x16xf32> to vector<16x1x16xf32>
    %52 = vector.shape_cast %47 : vector<16x16xf32> to vector<1x16x16xf32>
    %53 = vector.broadcast %51 : vector<16x1x16xf32> to vector<16x16x16xf32>
    %54 = vector.broadcast %52 : vector<1x16x16xf32> to vector<16x16x16xf32>
    %55 = arith.addf %53, %54 : vector<16x16x16xf32>
    %cst_22 = arith.constant 0.000000e+00 : f32
    %56 = vector.broadcast %cst_22 : f32 to vector<16x16x16xf32>
    %57 = arith.cmpf ogt, %55, %56 : vector<16x16x16xf32>
    %cst_23 = arith.constant 2.000000e-01 : f32
    %58 = vector.broadcast %cst_23 : f32 to vector<16x16x16xf32>
    %59 = arith.mulf %58, %55 : vector<16x16x16xf32>
    %60 = arith.select %57, %55, %59 : vector<16x16x16xi1>, vector<16x16x16xf32>
    %61 = vector.shape_cast %50 : vector<16xf32> to vector<1x1x16xf32>
    %62 = vector.broadcast %61 : vector<1x1x16xf32> to vector<16x16x16xf32>
    %63 = arith.mulf %60, %62 : vector<16x16x16xf32>
    %cst_24 = arith.constant dense<0.000000e+00> : vector<16x16xf32>
    %64 = vector.multi_reduction <add>, %63, %cst_24 [2] : vector<16x16x16xf32> to vector<16x16xf32>
    %65 = arith.addf %64, %0 : vector<16x16xf32>
    %cst_25 = arith.constant dense<0xFF800000> : vector<16xf32>
    %66 = vector.multi_reduction <maximumf>, %65, %cst_25 [1] : vector<16x16xf32> to vector<16xf32>
    %67 = vector.shape_cast %66 : vector<16xf32> to vector<16x1xf32>
    %68 = vector.broadcast %67 : vector<16x1xf32> to vector<16x16xf32>
    %69 = arith.subf %65, %68 : vector<16x16xf32>
    %70 = math.exp %69 : vector<16x16xf32>
    %cst_26 = arith.constant dense<0.000000e+00> : vector<16xf32>
    %71 = vector.multi_reduction <add>, %70, %cst_26 [1] : vector<16x16xf32> to vector<16xf32>
    %72 = vector.shape_cast %71 : vector<16xf32> to vector<16x1xf32>
    %73 = tpu.reciprocal %72 {approx = true} : vector<16x1xf32> -> vector<16x1xf32>
    %74 = vector.broadcast %73 : vector<16x1xf32> to vector<16x16xf32>
    %75 = arith.mulf %70, %74 : vector<16x16xf32>
    %76 = arith.truncf %75 : vector<16x16xf32> to vector<16x16xbf16>
    %77 = arith.truncf %47 : vector<16x16xf32> to vector<16x16xbf16>
    %cst_27 = arith.constant dense<0.000000e+00> : vector<16x16xf32>
    %78 = tpu.matmul %76, %77, %cst_27 {dimension_numbers = #tpu.dot_dimension_numbers<[1], [0], [0], [1], [0, 0, 1, 1], [], []>} : vector<16x16xbf16>, vector<16x16xbf16>, vector<16x16xf32> -> vector<16x16xf32>
    %79 = tpu.concatenate %46, %78 in 1 : vector<16x16xf32>, vector<16x16xf32> -> vector<16x32xf32>
    %80 = vector.broadcast %7 : vector<1x32xf32> to vector<16x32xf32>
    %81 = arith.addf %79, %80 : vector<16x32xf32>
    %cst_28 = arith.constant 0.000000e+00 : f32
    %82 = vector.broadcast %cst_28 : f32 to vector<16x32xf32>
    %83 = arith.maximumf %81, %82 : vector<16x32xf32>
    %c0_29 = arith.constant 0 : index
    %c0_30 = arith.constant 0 : index
    %84 = vector.load %arg8[%c0_29, %c0_30] : memref<32x32xbf16, #tpu.memory_space<vmem>>, vector<32x32xbf16>
    %c0_31 = arith.constant 0 : index
    %c0_32 = arith.constant 0 : index
    %85 = vector.load %arg9[%c0_31, %c0_32] : memref<1x32xf32, #tpu.memory_space<vmem>>, vector<1x32xf32>
    %c0_33 = arith.constant 0 : index
    %c0_34 = arith.constant 0 : index
    %86 = vector.load %arg10[%c0_33, %c0_34] : memref<32x32xbf16, #tpu.memory_space<vmem>>, vector<32x32xbf16>
    %c0_35 = arith.constant 0 : index
    %c0_36 = arith.constant 0 : index
    %87 = vector.load %arg11[%c0_35, %c0_36] : memref<1x32xf32, #tpu.memory_space<vmem>>, vector<1x32xf32>
    %c0_37 = arith.constant 0 : index
    %c0_38 = arith.constant 0 : index
    %88 = vector.load %arg12[%c0_37, %c0_38] : memref<2x16xf32, #tpu.memory_space<vmem>>, vector<2x16xf32>
    %c0_39 = arith.constant 0 : index
    %c0_40 = arith.constant 0 : index
    %89 = vector.load %arg13[%c0_39, %c0_40] : memref<1x32xf32, #tpu.memory_space<vmem>>, vector<1x32xf32>
    %90 = arith.truncf %83 : vector<16x32xf32> to vector<16x32xbf16>
    %cst_41 = arith.constant dense<0.000000e+00> : vector<16x32xf32>
    %91 = tpu.matmul %90, %84, %cst_41 {dimension_numbers = #tpu.dot_dimension_numbers<[1], [0], [0], [1], [0, 0, 1, 1], [], []>} : vector<16x32xbf16>, vector<32x32xbf16>, vector<16x32xf32> -> vector<16x32xf32>
    %92 = vector.broadcast %85 : vector<1x32xf32> to vector<16x32xf32>
    %93 = arith.addf %91, %92 : vector<16x32xf32>
    %cst_42 = arith.constant dense<0.000000e+00> : vector<16x32xf32>
    %94 = tpu.matmul %90, %86, %cst_42 {dimension_numbers = #tpu.dot_dimension_numbers<[1], [0], [0], [1], [0, 0, 1, 1], [], []>} : vector<16x32xbf16>, vector<32x32xbf16>, vector<16x32xf32> -> vector<16x32xf32>
    %95 = vector.broadcast %87 : vector<1x32xf32> to vector<16x32xf32>
    %96 = arith.addf %94, %95 : vector<16x32xf32>
    %97 = vector.extract_strided_slice %93 {offsets = [0, 0], sizes = [16, 16], strides = [1, 1]} : vector<16x32xf32> to vector<16x16xf32>
    %98 = vector.extract_strided_slice %96 {offsets = [0, 0], sizes = [16, 16], strides = [1, 1]} : vector<16x32xf32> to vector<16x16xf32>
    %99 = vector.extract_strided_slice %88 {offsets = [0, 0], sizes = [1, 16], strides = [1, 1]} : vector<2x16xf32> to vector<1x16xf32>
    %100 = vector.shape_cast %99 : vector<1x16xf32> to vector<16xf32>
    %101 = vector.shape_cast %98 : vector<16x16xf32> to vector<16x1x16xf32>
    %102 = vector.shape_cast %97 : vector<16x16xf32> to vector<1x16x16xf32>
    %103 = vector.broadcast %101 : vector<16x1x16xf32> to vector<16x16x16xf32>
    %104 = vector.broadcast %102 : vector<1x16x16xf32> to vector<16x16x16xf32>
    %105 = arith.addf %103, %104 : vector<16x16x16xf32>
    %cst_43 = arith.constant 0.000000e+00 : f32
    %106 = vector.broadcast %cst_43 : f32 to vector<16x16x16xf32>
    %107 = arith.cmpf ogt, %105, %106 : vector<16x16x16xf32>
    %cst_44 = arith.constant 2.000000e-01 : f32
    %108 = vector.broadcast %cst_44 : f32 to vector<16x16x16xf32>
    %109 = arith.mulf %108, %105 : vector<16x16x16xf32>
    %110 = arith.select %107, %105, %109 : vector<16x16x16xi1>, vector<16x16x16xf32>
    %111 = vector.shape_cast %100 : vector<16xf32> to vector<1x1x16xf32>
    %112 = vector.broadcast %111 : vector<1x1x16xf32> to vector<16x16x16xf32>
    %113 = arith.mulf %110, %112 : vector<16x16x16xf32>
    %cst_45 = arith.constant dense<0.000000e+00> : vector<16x16xf32>
    %114 = vector.multi_reduction <add>, %113, %cst_45 [2] : vector<16x16x16xf32> to vector<16x16xf32>
    %115 = arith.addf %114, %0 : vector<16x16xf32>
    %cst_46 = arith.constant dense<0xFF800000> : vector<16xf32>
    %116 = vector.multi_reduction <maximumf>, %115, %cst_46 [1] : vector<16x16xf32> to vector<16xf32>
    %117 = vector.shape_cast %116 : vector<16xf32> to vector<16x1xf32>
    %118 = vector.broadcast %117 : vector<16x1xf32> to vector<16x16xf32>
    %119 = arith.subf %115, %118 : vector<16x16xf32>
    %120 = math.exp %119 : vector<16x16xf32>
    %cst_47 = arith.constant dense<0.000000e+00> : vector<16xf32>
    %121 = vector.multi_reduction <add>, %120, %cst_47 [1] : vector<16x16xf32> to vector<16xf32>
    %122 = vector.shape_cast %121 : vector<16xf32> to vector<16x1xf32>
    %123 = tpu.reciprocal %122 {approx = true} : vector<16x1xf32> -> vector<16x1xf32>
    %124 = vector.broadcast %123 : vector<16x1xf32> to vector<16x16xf32>
    %125 = arith.mulf %120, %124 : vector<16x16xf32>
    %126 = arith.truncf %125 : vector<16x16xf32> to vector<16x16xbf16>
    %127 = arith.truncf %97 : vector<16x16xf32> to vector<16x16xbf16>
    %cst_48 = arith.constant dense<0.000000e+00> : vector<16x16xf32>
    %128 = tpu.matmul %126, %127, %cst_48 {dimension_numbers = #tpu.dot_dimension_numbers<[1], [0], [0], [1], [0, 0, 1, 1], [], []>} : vector<16x16xbf16>, vector<16x16xbf16>, vector<16x16xf32> -> vector<16x16xf32>
    %129 = vector.extract_strided_slice %93 {offsets = [0, 16], sizes = [16, 16], strides = [1, 1]} : vector<16x32xf32> to vector<16x16xf32>
    %130 = vector.extract_strided_slice %96 {offsets = [0, 16], sizes = [16, 16], strides = [1, 1]} : vector<16x32xf32> to vector<16x16xf32>
    %131 = vector.extract_strided_slice %88 {offsets = [1, 0], sizes = [1, 16], strides = [1, 1]} : vector<2x16xf32> to vector<1x16xf32>
    %132 = vector.shape_cast %131 : vector<1x16xf32> to vector<16xf32>
    %133 = vector.shape_cast %130 : vector<16x16xf32> to vector<16x1x16xf32>
    %134 = vector.shape_cast %129 : vector<16x16xf32> to vector<1x16x16xf32>
    %135 = vector.broadcast %133 : vector<16x1x16xf32> to vector<16x16x16xf32>
    %136 = vector.broadcast %134 : vector<1x16x16xf32> to vector<16x16x16xf32>
    %137 = arith.addf %135, %136 : vector<16x16x16xf32>
    %cst_49 = arith.constant 0.000000e+00 : f32
    %138 = vector.broadcast %cst_49 : f32 to vector<16x16x16xf32>
    %139 = arith.cmpf ogt, %137, %138 : vector<16x16x16xf32>
    %cst_50 = arith.constant 2.000000e-01 : f32
    %140 = vector.broadcast %cst_50 : f32 to vector<16x16x16xf32>
    %141 = arith.mulf %140, %137 : vector<16x16x16xf32>
    %142 = arith.select %139, %137, %141 : vector<16x16x16xi1>, vector<16x16x16xf32>
    %143 = vector.shape_cast %132 : vector<16xf32> to vector<1x1x16xf32>
    %144 = vector.broadcast %143 : vector<1x1x16xf32> to vector<16x16x16xf32>
    %145 = arith.mulf %142, %144 : vector<16x16x16xf32>
    %cst_51 = arith.constant dense<0.000000e+00> : vector<16x16xf32>
    %146 = vector.multi_reduction <add>, %145, %cst_51 [2] : vector<16x16x16xf32> to vector<16x16xf32>
    %147 = arith.addf %146, %0 : vector<16x16xf32>
    %cst_52 = arith.constant dense<0xFF800000> : vector<16xf32>
    %148 = vector.multi_reduction <maximumf>, %147, %cst_52 [1] : vector<16x16xf32> to vector<16xf32>
    %149 = vector.shape_cast %148 : vector<16xf32> to vector<16x1xf32>
    %150 = vector.broadcast %149 : vector<16x1xf32> to vector<16x16xf32>
    %151 = arith.subf %147, %150 : vector<16x16xf32>
    %152 = math.exp %151 : vector<16x16xf32>
    %cst_53 = arith.constant dense<0.000000e+00> : vector<16xf32>
    %153 = vector.multi_reduction <add>, %152, %cst_53 [1] : vector<16x16xf32> to vector<16xf32>
    %154 = vector.shape_cast %153 : vector<16xf32> to vector<16x1xf32>
    %155 = tpu.reciprocal %154 {approx = true} : vector<16x1xf32> -> vector<16x1xf32>
    %156 = vector.broadcast %155 : vector<16x1xf32> to vector<16x16xf32>
    %157 = arith.mulf %152, %156 : vector<16x16xf32>
    %158 = arith.truncf %157 : vector<16x16xf32> to vector<16x16xbf16>
    %159 = arith.truncf %129 : vector<16x16xf32> to vector<16x16xbf16>
    %cst_54 = arith.constant dense<0.000000e+00> : vector<16x16xf32>
    %160 = tpu.matmul %158, %159, %cst_54 {dimension_numbers = #tpu.dot_dimension_numbers<[1], [0], [0], [1], [0, 0, 1, 1], [], []>} : vector<16x16xbf16>, vector<16x16xbf16>, vector<16x16xf32> -> vector<16x16xf32>
    %161 = tpu.concatenate %128, %160 in 1 : vector<16x16xf32>, vector<16x16xf32> -> vector<16x32xf32>
    %162 = vector.broadcast %89 : vector<1x32xf32> to vector<16x32xf32>
    %163 = arith.addf %161, %162 : vector<16x32xf32>
    %cst_55 = arith.constant 0.000000e+00 : f32
    %164 = vector.broadcast %cst_55 : f32 to vector<16x32xf32>
    %165 = arith.maximumf %163, %164 : vector<16x32xf32>
    %cst_56 = arith.constant 5.000000e-01 : f32
    %166 = vector.broadcast %cst_56 : f32 to vector<16x32xf32>
    %167 = arith.mulf %166, %165 : vector<16x32xf32>
    %cst_57 = arith.constant 5.000000e-01 : f32
    %168 = vector.broadcast %cst_57 : f32 to vector<16x32xf32>
    %169 = arith.mulf %168, %83 : vector<16x32xf32>
    %170 = arith.addf %167, %169 : vector<16x32xf32>
    %171 = arith.truncf %170 : vector<16x32xf32> to vector<16x32xbf16>
    %c0_58 = arith.constant 0 : index
    %c0_59 = arith.constant 0 : index
    %172 = vector.load %arg14[%c0_58, %c0_59] : memref<32x4xbf16, #tpu.memory_space<vmem>>, vector<32x4xbf16>
    %cst_60 = arith.constant dense<0.000000e+00> : vector<16x4xf32>
    %173 = tpu.matmul %171, %172, %cst_60 {dimension_numbers = #tpu.dot_dimension_numbers<[1], [0], [0], [1], [0, 0, 1, 1], [], []>} : vector<16x32xbf16>, vector<32x4xbf16>, vector<16x4xf32> -> vector<16x4xf32>
    %c0_61 = arith.constant 0 : index
    %c0_62 = arith.constant 0 : index
    %174 = vector.load %arg15[%c0_61, %c0_62] : memref<1x4xf32, #tpu.memory_space<vmem>>, vector<1x4xf32>
    %175 = vector.broadcast %174 : vector<1x4xf32> to vector<16x4xf32>
    %176 = arith.addf %173, %175 : vector<16x4xf32>
    %cst_63 = arith.constant 0.000000e+00 : f32
    %177 = vector.broadcast %cst_63 : f32 to vector<16x4xf32>
    %178 = arith.maximumf %176, %177 : vector<16x4xf32>
    %179 = arith.truncf %178 : vector<16x4xf32> to vector<16x4xbf16>
    %c0_64 = arith.constant 0 : index
    %c0_65 = arith.constant 0 : index
    %180 = vector.load %arg16[%c0_64, %c0_65] : memref<4x128xbf16, #tpu.memory_space<vmem>>, vector<4x128xbf16>
    %cst_66 = arith.constant dense<0.000000e+00> : vector<16x128xf32>
    %181 = tpu.matmul %179, %180, %cst_66 {dimension_numbers = #tpu.dot_dimension_numbers<[1], [0], [0], [1], [0, 0, 1, 1], [], []>} : vector<16x4xbf16>, vector<4x128xbf16>, vector<16x128xf32> -> vector<16x128xf32>
    %c0_67 = arith.constant 0 : index
    %c0_68 = arith.constant 0 : index
    %182 = vector.load %arg17[%c0_67, %c0_68] : memref<1x128xf32, #tpu.memory_space<vmem>>, vector<1x128xf32>
    %183 = vector.broadcast %182 : vector<1x128xf32> to vector<16x128xf32>
    %184 = arith.addf %181, %183 : vector<16x128xf32>
    %cst_69 = arith.constant 0.000000e+00 : f32
    %185 = vector.broadcast %cst_69 : f32 to vector<16x128xf32>
    %186 = arith.subf %185, %184 : vector<16x128xf32>
    %187 = math.exp %186 : vector<16x128xf32>
    %cst_70 = arith.constant 1.000000e+00 : f32
    %188 = vector.broadcast %cst_70 : f32 to vector<16x128xf32>
    %189 = arith.addf %188, %187 : vector<16x128xf32>
    %190 = tpu.reciprocal %189 {approx = true} : vector<16x128xf32> -> vector<16x128xf32>
    %c0_71 = arith.constant 0 : index
    %c0_72 = arith.constant 0 : index
    %191 = vector.load %arg18[%c0_71, %c0_72] : memref<16x128xf32, #tpu.memory_space<vmem>>, vector<16x128xf32>
    tpu.vector_store %arg18[%c0_71, %c0_72], %190 {strides = array<i32>} : memref<16x128xf32, #tpu.memory_space<vmem>>, vector<16x128xf32>,
    return
  }
}

</mosaic_0001>

<llo_original>
// kernel: tpu_custom_call.1
$region0: #{tpu_custom_call.1}
  #allocation0 [shape = 'u32[]', space=smem, size = 0x4, offset = 0x4, fixed_abs, tag = 'smem constant byte address 0x4 - core index']
  #allocation1 [shape = 'u32[144,128]{1,0:T(1,128)}', space=vmem, size = 0x12000, scoped, tag = 'internal scratch']
  %s0 = inlined_call_operand.vmem [shape: f32[16,8], index: 0, kind: input, shape index: {}]
  %s1 = inlined_call_operand.vmem [shape: f32[16,16], index: 1, kind: input, shape index: {}]
  %s2 = inlined_call_operand.hbm [shape: bf16[8,32], index: 2, kind: input, shape index: {}]
  %s3 = inlined_call_operand.hbm [shape: f32[1,32], index: 3, kind: input, shape index: {}]
  %s4 = inlined_call_operand.hbm [shape: bf16[8,32], index: 4, kind: input, shape index: {}]
  %s5 = inlined_call_operand.hbm [shape: f32[1,32], index: 5, kind: input, shape index: {}]
  %s6 = inlined_call_operand.vmem [shape: f32[2,16], index: 6, kind: input, shape index: {}]
  %s7 = inlined_call_operand.hbm [shape: f32[1,32], index: 7, kind: input, shape index: {}]
  %s8 = inlined_call_operand.vmem [shape: bf16[32,32], index: 8, kind: input, shape index: {}]
  %s9 = inlined_call_operand.vmem [shape: f32[1,32], index: 9, kind: input, shape index: {}]
  %s10 = inlined_call_operand.vmem [shape: bf16[32,32], index: 10, kind: input, shape index: {}]
  %s11 = inlined_call_operand.vmem [shape: f32[1,32], index: 11, kind: input, shape index: {}]
  %s12 = inlined_call_operand.vmem [shape: f32[2,16], index: 12, kind: input, shape index: {}]
  %s13 = inlined_call_operand.vmem [shape: f32[1,32], index: 13, kind: input, shape index: {}]
  %s14 = inlined_call_operand.vmem [shape: bf16[32,4], index: 14, kind: input, shape index: {}]
  %s15 = inlined_call_operand.vmem [shape: f32[1,4], index: 15, kind: input, shape index: {}]
  %s16 = inlined_call_operand.vmem [shape: bf16[4,128], index: 16, kind: input, shape index: {}]
  %s17 = inlined_call_operand.vmem [shape: f32[1,128], index: 17, kind: input, shape index: {}]
  %s18 = inlined_call_operand.hbm [shape: f32[16,128], index: 18, kind: output, shape index: {}]
  %s19 = sld [smem:[#allocation0]]
  $region102: #{tpu_custom_call.1} parent=0
    _
  %s21 = ssub.s32 1, %s19
  %s22 = scalar_select 0, %s21, %s19
  $region1: #{tpu_custom_call.1} parent=0
    #allocation2 [shape = 'u8[2048]{0}', space=vmem, size = 0x800, scoped, tag = 'input window, operand 2, single buffered']
    #allocation3 [shape = 's32[1]{0}', space=sflag, size = 0x4, scoped, tag = 'scoped memory for tpu_custom_call.1']
    #allocation4 [shape = 's32[1]{0}', space=sflag, size = 0x4, scoped, tag = 'scoped memory for tpu_custom_call.1']
    #allocation5 [shape = 'u8[512]{0}', space=vmem, size = 0x400, scoped, tag = 'input window, operand 3, single buffered']
    #allocation6 [shape = 's32[1]{0}', space=sflag, size = 0x4, scoped, tag = 'scoped memory for tpu_custom_call.1']
    #allocation7 [shape = 'u8[2048]{0}', space=vmem, size = 0x800, scoped, tag = 'input window, operand 4, single buffered']
    #allocation8 [shape = 'u8[512]{0}', space=vmem, size = 0x400, scoped, tag = 'input window, operand 5, single buffered']
    #allocation9 [shape = 's32[1]{0}', space=sflag, size = 0x4, scoped, tag = 'scoped memory for tpu_custom_call.1']
    #allocation10 [shape = 'u8[512]{0}', space=vmem, size = 0x400, scoped, tag = 'input window, operand 7, single buffered']
    #allocation11 [shape = 'u8[8192]{0}', space=vmem, size = 0x2000, scoped, tag = 'output window, operand 0, single buffered']
    %23 = vsyncpa [#allocation3], 0
    %24 = vsyncpa [#allocation6], 0
    %25 = vsyncpa [#allocation9], 0
    %26 = vsyncpa [#allocation4], 0
    // Predicated region
    $region2: #{tpu_custom_call.1} parent=1 // pred_check
      _
    $region3: #{tpu_custom_call.1} parent=1 // pred_check_branch
      %28 = sbr.rel (0) target = $region5
    $region4: #{tpu_custom_call.1} parent=1 // pred_region
      _
    $region5: #{tpu_custom_call.1} parent=1 // pred_fallthru
      _
    // Predicated region
    $region6: #{tpu_custom_call.1} parent=1 // pred_check
      _
    $region7: #{tpu_custom_call.1} parent=1 // pred_check_branch
      %30 = sbr.rel (0) target = $region9
    $region8: #{tpu_custom_call.1} parent=1 // pred_region
      _
    $region9: #{tpu_custom_call.1} parent=1 // pred_fallthru
      _
    // Predicated region
    $region10: #{tpu_custom_call.1} parent=1 // pred_check
      _
    $region11: #{tpu_custom_call.1} parent=1 // pred_check_branch
      %32 = sbr.rel (0) target = $region13
    $region12: #{tpu_custom_call.1} parent=1 // pred_region
      %s34 = ssub.s32 64, 64
      %35 = vsyncadd [#allocation3], %s34
      %s37 = sshll.u32 [#allocation2], 4
      %s38 = int_to_ptr.vmem [resolvable:$true] %s37
      %40 = dma.hbm_to_vmem [thread:$0]  %s2, 64, %s38, [#allocation3]
    $region13: #{tpu_custom_call.1} parent=1 // pred_fallthru
      _
    // Predicated region
    $region14: #{tpu_custom_call.1} parent=1 // pred_check
      _
    $region15: #{tpu_custom_call.1} parent=1 // pred_check_branch
      %42 = sbr.rel (0) target = $region17
    $region16: #{tpu_custom_call.1} parent=1 // pred_region
      %s44 = ssub.s32 16, 16
      %45 = vsyncadd [#allocation6], %s44
      %s47 = sshll.u32 [#allocation5], 4
      %s48 = int_to_ptr.vmem [resolvable:$true] %s47
      %50 = dma.hbm_to_vmem [thread:$0]  %s3, 16, %s48, [#allocation6]
    $region17: #{tpu_custom_call.1} parent=1 // pred_fallthru
      _
    // Predicated region
    $region18: #{tpu_custom_call.1} parent=1 // pred_check
      _
    $region19: #{tpu_custom_call.1} parent=1 // pred_check_branch
      %52 = sbr.rel (0) target = $region21
    $region20: #{tpu_custom_call.1} parent=1 // pred_region
      %s54 = ssub.s32 64, 64
      %55 = vsyncadd [#allocation6], %s54
      %s57 = sshll.u32 [#allocation7], 4
      %s58 = int_to_ptr.vmem [resolvable:$true] %s57
      %60 = dma.hbm_to_vmem [thread:$0]  %s4, 64, %s58, [#allocation6]
    $region21: #{tpu_custom_call.1} parent=1 // pred_fallthru
      _
    // Predicated region
    $region22: #{tpu_custom_call.1} parent=1 // pred_check
      _
    $region23: #{tpu_custom_call.1} parent=1 // pred_check_branch
      %62 = sbr.rel (0) target = $region25
    $region24: #{tpu_custom_call.1} parent=1 // pred_region
      %s64 = ssub.s32 16, 16
      %65 = vsyncadd [#allocation9], %s64
      %s67 = sshll.u32 [#allocation8], 4
      %s68 = int_to_ptr.vmem [resolvable:$true] %s67
      %70 = dma.hbm_to_vmem [thread:$0]  %s5, 16, %s68, [#allocation9]
    $region25: #{tpu_custom_call.1} parent=1 // pred_fallthru
      _
    // Predicated region
    $region26: #{tpu_custom_call.1} parent=1 // pred_check
      _
    $region27: #{tpu_custom_call.1} parent=1 // pred_check_branch
      %72 = sbr.rel (0) target = $region29
    $region28: #{tpu_custom_call.1} parent=1 // pred_region
      _
    $region29: #{tpu_custom_call.1} parent=1 // pred_fallthru
      _
    // Predicated region
    $region30: #{tpu_custom_call.1} parent=1 // pred_check
      _
    $region31: #{tpu_custom_call.1} parent=1 // pred_check_branch
      %74 = sbr.rel (0) target = $region33
    $region32: #{tpu_custom_call.1} parent=1 // pred_region
      %s76 = ssub.s32 16, 16
      %77 = vsyncadd [#allocation9], %s76
      %s79 = sshll.u32 [#allocation10], 4
      %s80 = int_to_ptr.vmem [resolvable:$true] %s79
      %82 = dma.hbm_to_vmem [thread:$0]  %s7, 16, %s80, [#allocation9]
    $region33: #{tpu_custom_call.1} parent=1 // pred_fallthru
      _
    // Predicated region
    $region34: #{tpu_custom_call.1} parent=1 // pred_check
      _
    $region35: #{tpu_custom_call.1} parent=1 // pred_check_branch
      %84 = sbr.rel (0) target = $region37
    $region36: #{tpu_custom_call.1} parent=1 // pred_region
      _
    $region37: #{tpu_custom_call.1} parent=1 // pred_fallthru
      _
    // Predicated region
    $region38: #{tpu_custom_call.1} parent=1 // pred_check
      _
    $region39: #{tpu_custom_call.1} parent=1 // pred_check_branch
      %86 = sbr.rel (0) target = $region41
    $region40: #{tpu_custom_call.1} parent=1 // pred_region
      _
    $region41: #{tpu_custom_call.1} parent=1 // pred_fallthru
      _
    // Predicated region
    $region42: #{tpu_custom_call.1} parent=1 // pred_check
      _
    $region43: #{tpu_custom_call.1} parent=1 // pred_check_branch
      %88 = sbr.rel (0) target = $region45
    $region44: #{tpu_custom_call.1} parent=1 // pred_region
      _
    $region45: #{tpu_custom_call.1} parent=1 // pred_fallthru
      _
    // Predicated region
    $region46: #{tpu_custom_call.1} parent=1 // pred_check
      _
    $region47: #{tpu_custom_call.1} parent=1 // pred_check_branch
      %90 = sbr.rel (0) target = $region49
    $region48: #{tpu_custom_call.1} parent=1 // pred_region
      _
    $region49: #{tpu_custom_call.1} parent=1 // pred_fallthru
      _
    // Predicated region
    $region50: #{tpu_custom_call.1} parent=1 // pred_check
      _
    $region51: #{tpu_custom_call.1} parent=1 // pred_check_branch
      %92 = sbr.rel (0) target = $region53
    $region52: #{tpu_custom_call.1} parent=1 // pred_region
      _
    $region53: #{tpu_custom_call.1} parent=1 // pred_fallthru
      _
    // Predicated region
    $region54: #{tpu_custom_call.1} parent=1 // pred_check
      _
    $region55: #{tpu_custom_call.1} parent=1 // pred_check_branch
      %94 = sbr.rel (0) target = $region57
    $region56: #{tpu_custom_call.1} parent=1 // pred_region
      _
    $region57: #{tpu_custom_call.1} parent=1 // pred_fallthru
      _
    // Predicated region
    $region58: #{tpu_custom_call.1} parent=1 // pred_check
      _
    $region59: #{tpu_custom_call.1} parent=1 // pred_check_branch
      %96 = sbr.rel (0) target = $region61
    $region60: #{tpu_custom_call.1} parent=1 // pred_region
      _
    $region61: #{tpu_custom_call.1} parent=1 // pred_fallthru
      _
    // Predicated region
    $region62: #{tpu_custom_call.1} parent=1 // pred_check
      _
    $region63: #{tpu_custom_call.1} parent=1 // pred_check_branch
      %98 = sbr.rel (0) target = $region65
    $region64: #{tpu_custom_call.1} parent=1 // pred_region
      _
    $region65: #{tpu_custom_call.1} parent=1 // pred_fallthru
      _
    // Predicated region
    $region66: #{tpu_custom_call.1} parent=1 // pred_check
      _
    $region67: #{tpu_custom_call.1} parent=1 // pred_check_branch
      %100 = sbr.rel (0) target = $region69
    $region68: #{tpu_custom_call.1} parent=1 // pred_region
      _
    $region69: #{tpu_custom_call.1} parent=1 // pred_fallthru
      _
    // Predicated region
    $region70: #{tpu_custom_call.1} parent=1 // pred_check
      _
    $region71: #{tpu_custom_call.1} parent=1 // pred_check_branch
      %102 = sbr.rel (0) target = $region73
    $region72: #{tpu_custom_call.1} parent=1 // pred_region
      _
    $region73: #{tpu_custom_call.1} parent=1 // pred_fallthru
      _
    // Predicated region
    $region74: #{tpu_custom_call.1} parent=1 // pred_check
      _
    $region75: #{tpu_custom_call.1} parent=1 // pred_check_branch
      %104 = sbr.rel (0) target = $region77
    $region76: #{tpu_custom_call.1} parent=1 // pred_region
      %105 = dma.done [#allocation3], 64
    $region77: #{tpu_custom_call.1} parent=1 // pred_fallthru
      _
    // Predicated region
    $region78: #{tpu_custom_call.1} parent=1 // pred_check
      _
    $region79: #{tpu_custom_call.1} parent=1 // pred_check_branch
      %107 = sbr.rel (0) target = $region81
    $region80: #{tpu_custom_call.1} parent=1 // pred_region
      %108 = dma.done [#allocation6], 16
    $region81: #{tpu_custom_call.1} parent=1 // pred_fallthru
      _
    // Predicated region
    $region82: #{tpu_custom_call.1} parent=1 // pred_check
      _
    $region83: #{tpu_custom_call.1} parent=1 // pred_check_branch
      %110 = sbr.rel (0) target = $region85
    $region84: #{tpu_custom_call.1} parent=1 // pred_region
      %111 = dma.done [#allocation6], 64
    $region85: #{tpu_custom_call.1} parent=1 // pred_fallthru
      _
    // Predicated region
    $region86: #{tpu_custom_call.1} parent=1 // pred_check
      _
    $region87: #{tpu_custom_call.1} parent=1 // pred_check_branch
      %113 = sbr.rel (0) target = $region89
    $region88: #{tpu_custom_call.1} parent=1 // pred_region
      %114 = dma.done [#allocation9], 16
    $region89: #{tpu_custom_call.1} parent=1 // pred_fallthru
      _
    // Predicated region
    $region90: #{tpu_custom_call.1} parent=1 // pred_check
      _
    $region91: #{tpu_custom_call.1} parent=1 // pred_check_branch
      %116 = sbr.rel (0) target = $region93
    $region92: #{tpu_custom_call.1} parent=1 // pred_region
      %117 = dma.done [#allocation9], 16
    $region93: #{tpu_custom_call.1} parent=1 // pred_fallthru
      _
    %v119 = vld [vmem:[%s1] sm:$0xff]
    %v120 = vld [vmem:[%s1 + $0x8] sm:$0xff]
    %v121 = vld [vmem:[%s0] sm:$0xff]
    %v122 = vld [vmem:[%s0 + $0x8] sm:$0xff]
    %v123 = vld [vmem:[#allocation2] sm:$0xf]
    %v124 = vld [vmem:[#allocation5] sm:$0x1]
    %v125 = vld [vmem:[#allocation7] sm:$0xf]
    %v126 = vld [vmem:[#allocation8] sm:$0x1]
    %v127 = vld [vmem:[%s6] sm:$0x3]
    %v128 = vld [vmem:[#allocation10] sm:$0x1]
    %v129 = vpack.c.bf16 %v122, %v121
    %v131 = vlaneseq
    %v132 = vshrl.u32 %v131, 7
    %v133 = vsub.s32 0, %v132
    %v134 = vrot.slane %v124, %v133
    %vm136 = vcmask 64512
    %v138 = vsel %vm136, %v129, 0
    %vm140 = vcmask 1043456
    %v142 = vsel %vm140, %v123, 0
    %144 = vmatprep.subr.bf16.mxu0 0
    %145 = vmatpush1.bf16.msra.mxu0 0
    %146 = vmatprep.subr.bf16.mxu0 0
    %147 = vmatpush1.bf16.msra.mxu0 0
    %148 = vmatprep.subr.bf16.mxu0 0
    %149 = vmatpush1.bf16.msra.mxu0 0
    %150 = vmatprep.subr.bf16.mxu0 0
    %151 = vmatpush1.bf16.msra.mxu0 0
    %152 = vmatprep.subr.bf16.mxu0 0
    %153 = vmatpush1.bf16.msra.mxu0 0
    %154 = vmatprep.subr.bf16.mxu0 0
    %155 = vmatpush1.bf16.msra.mxu0 0
    %156 = vmatprep.subr.bf16.mxu0 0
    %157 = vmatpush1.bf16.msra.mxu0 0
    %158 = vmatprep.subr.bf16.mxu0 0
    %159 = vmatpush1.bf16.msra.mxu0 %v142
    %160 = vmatprep.subr.bf16.mxu0 0
    %161 = vmatpush2.bf16.msra.mxu0 0
    %162 = vmatprep.subr.bf16.mxu0 0
    %163 = vmatpush2.bf16.msra.mxu0 0
    %164 = vmatprep.subr.bf16.mxu0 0
    %165 = vmatpush2.bf16.msra.mxu0 0
    %166 = vmatprep.subr.bf16.mxu0 0
    %167 = vmatpush2.bf16.msra.mxu0 0
    %168 = vmatprep.subr.bf16.mxu0 0
    %169 = vmatpush2.bf16.msra.mxu0 0
    %170 = vmatprep.subr.bf16.mxu0 0
    %171 = vmatpush2.bf16.msra.mxu0 0
    %172 = vmatprep.subr.bf16.mxu0 0
    %173 = vmatpush2.bf16.msra.mxu0 0
    %174 = vmatprep.subr.bf16.mxu0 0
    %175 = vmatpush2.bf16.msra.mxu0 0
    %176 = vmatprep.mubr.bf16.mxu0 0
    %177 = vmatmul.mubr.bf16.gmra.mxu0 %v138
    %v178 = vpop.f32.mrf.mxu0
    %v179 = vadd.f32 %v134, %v178
    %v180 = vpop.f32.mrf.mxu0
    %v181 = vpop.f32.mrf.mxu0
    %v182 = vadd.f32 %v134, %v181
    %v183 = vpop.f32.mrf.mxu0
    %184 = vdwg.mxu0
    %v186 = vlaneseq
    %v187 = vshrl.u32 %v186, 7
    %v188 = vsub.s32 0, %v187
    %v189 = vrot.slane %v126, %v188
    %v192 = vsel %vm140, %v125, 0
    %194 = vmatprep.subr.bf16.mxu0 0
    %195 = vmatpush1.bf16.msra.mxu0 0
    %196 = vmatprep.subr.bf16.mxu0 0
    %197 = vmatpush1.bf16.msra.mxu0 0
    %198 = vmatprep.subr.bf16.mxu0 0
    %199 = vmatpush1.bf16.msra.mxu0 0
    %200 = vmatprep.subr.bf16.mxu0 0
    %201 = vmatpush1.bf16.msra.mxu0 0
    %202 = vmatprep.subr.bf16.mxu0 0
    %203 = vmatpush1.bf16.msra.mxu0 0
    %204 = vmatprep.subr.bf16.mxu0 0
    %205 = vmatpush1.bf16.msra.mxu0 0
    %206 = vmatprep.subr.bf16.mxu0 0
    %207 = vmatpush1.bf16.msra.mxu0 0
    %208 = vmatprep.subr.bf16.mxu0 0
    %209 = vmatpush1.bf16.msra.mxu0 %v192
    %210 = vmatprep.subr.bf16.mxu0 0
    %211 = vmatpush2.bf16.msra.mxu0 0
    %212 = vmatprep.subr.bf16.mxu0 0
    %213 = vmatpush2.bf16.msra.mxu0 0
    %214 = vmatprep.subr.bf16.mxu0 0
    %215 = vmatpush2.bf16.msra.mxu0 0
    %216 = vmatprep.subr.bf16.mxu0 0
    %217 = vmatpush2.bf16.msra.mxu0 0
    %218 = vmatprep.subr.bf16.mxu0 0
    %219 = vmatpush2.bf16.msra.mxu0 0
    %220 = vmatprep.subr.bf16.mxu0 0
    %221 = vmatpush2.bf16.msra.mxu0 0
    %222 = vmatprep.subr.bf16.mxu0 0
    %223 = vmatpush2.bf16.msra.mxu0 0
    %224 = vmatprep.subr.bf16.mxu0 0
    %225 = vmatpush2.bf16.msra.mxu0 0
    %226 = vmatprep.mubr.bf16.mxu0 0
    %227 = vmatmul.mubr.bf16.gmra.mxu0 %v138
    %v228 = vpop.f32.mrf.mxu0
    %v229 = vadd.f32 %v189, %v228
    %v230 = vpop.f32.mrf.mxu0
    %v231 = vpop.f32.mrf.mxu0
    %v232 = vadd.f32 %v189, %v231
    %v233 = vpop.f32.mrf.mxu0
    %234 = vdwg.mxu0
    %v237 = vcombine.high %v229, %v229
    %v239 = vunpack.c.l.s4 1966171168
    %v240 = vunpack.c.0.s8 %v239
    %v241 = vlaneseq
    %v242 = vshrl.u32 %v241, 7
    %v243 = vsub.s32 %v240, %v242
    %v244 = vrot.slane %v229, %v243
    %v246 = vunpack.c.l.s4 1966171168
    %v247 = vunpack.c.0.s8 %v246
    %v248 = vlaneseq
    %v249 = vshrl.u32 %v248, 7
    %v250 = vsub.s32 %v247, %v249
    %v251 = vrot.slane %v237, %v250
    %v252 = vcombine.high %v244, %v244
    %v253 = vcombine.high %v251, %v251
    %v255 = vunpack.c.l.s4 1966171168
    %v256 = vunpack.c.0.s8 %v255
    %v257 = vlaneseq
    %v258 = vshrl.u32 %v257, 7
    %v259 = vsub.s32 %v256, %v258
    %v260 = vrot.slane %v244, %v259
    %v262 = vunpack.c.l.s4 1966171168
    %v263 = vunpack.c.0.s8 %v262
    %v264 = vlaneseq
    %v265 = vshrl.u32 %v264, 7
    %v266 = vsub.s32 %v263, %v265
    %v267 = vrot.slane %v251, %v266
    %v269 = vunpack.c.l.s4 1966171168
    %v270 = vunpack.c.0.s8 %v269
    %v271 = vlaneseq
    %v272 = vshrl.u32 %v271, 7
    %v273 = vsub.s32 %v270, %v272
    %v274 = vrot.slane %v252, %v273
    %v276 = vunpack.c.l.s4 1966171168
    %v277 = vunpack.c.0.s8 %v276
    %v278 = vlaneseq
    %v279 = vshrl.u32 %v278, 7
    %v280 = vsub.s32 %v277, %v279
    %v281 = vrot.slane %v253, %v280
    %v282 = vcombine.high %v260, %v260
    %v283 = vcombine.high %v267, %v267
    %v284 = vcombine.high %v274, %v274
    %v285 = vcombine.high %v281, %v281
    %v286 = vcombine.high %v232, %v232
    %v288 = vunpack.c.l.s4 1966171168
    %v289 = vunpack.c.0.s8 %v288
    %v290 = vlaneseq
    %v291 = vshrl.u32 %v290, 7
    %v292 = vsub.s32 %v289, %v291
    %v293 = vrot.slane %v232, %v292
    %v295 = vunpack.c.l.s4 1966171168
    %v296 = vunpack.c.0.s8 %v295
    %v297 = vlaneseq
    %v298 = vshrl.u32 %v297, 7
    %v299 = vsub.s32 %v296, %v298
    %v300 = vrot.slane %v286, %v299
    %v301 = vcombine.high %v293, %v293
    %v302 = vcombine.high %v300, %v300
    %v304 = vunpack.c.l.s4 1966171168
    %v305 = vunpack.c.0.s8 %v304
    %v306 = vlaneseq
    %v307 = vshrl.u32 %v306, 7
    %v308 = vsub.s32 %v305, %v307
    %v309 = vrot.slane %v293, %v308
    %v311 = vunpack.c.l.s4 1966171168
    %v312 = vunpack.c.0.s8 %v311
    %v313 = vlaneseq
    %v314 = vshrl.u32 %v313, 7
    %v315 = vsub.s32 %v312, %v314
    %v316 = vrot.slane %v300, %v315
    %v318 = vunpack.c.l.s4 1966171168
    %v319 = vunpack.c.0.s8 %v318
    %v320 = vlaneseq
    %v321 = vshrl.u32 %v320, 7
    %v322 = vsub.s32 %v319, %v321
    %v323 = vrot.slane %v301, %v322
    %v325 = vunpack.c.l.s4 1966171168
    %v326 = vunpack.c.0.s8 %v325
    %v327 = vlaneseq
    %v328 = vshrl.u32 %v327, 7
    %v329 = vsub.s32 %v326, %v328
    %v330 = vrot.slane %v302, %v329
    %v331 = vcombine.high %v309, %v309
    %v332 = vcombine.high %v316, %v316
    %v333 = vcombine.high %v323, %v323
    %v334 = vcombine.high %v330, %v330
    %v335 = vlaneseq
    %v336 = vshrl.u32 %v335, 7
    %v337 = vsub.s32 0, %v336
    %v338 = vrot.slane %v260, %v337
    %v339 = vlaneseq
    %v340 = vshrl.u32 %v339, 7
    %v341 = vsub.s32 0, %v340
    %v342 = vrot.slane %v274, %v341
    %v343 = vlaneseq
    %v344 = vshrl.u32 %v343, 7
    %v345 = vsub.s32 0, %v344
    %v346 = vrot.slane %v282, %v345
    %v347 = vlaneseq
    %v348 = vshrl.u32 %v347, 7
    %v349 = vsub.s32 0, %v348
    %v350 = vrot.slane %v284, %v349
    %v351 = vlaneseq
    %v352 = vshrl.u32 %v351, 7
    %v353 = vsub.s32 0, %v352
    %v354 = vrot.slane %v267, %v353
    %v355 = vlaneseq
    %v356 = vshrl.u32 %v355, 7
    %v357 = vsub.s32 0, %v356
    %v358 = vrot.slane %v281, %v357
    %v359 = vlaneseq
    %v360 = vshrl.u32 %v359, 7
    %v361 = vsub.s32 0, %v360
    %v362 = vrot.slane %v283, %v361
    %v363 = vlaneseq
    %v364 = vshrl.u32 %v363, 7
    %v365 = vsub.s32 0, %v364
    %v366 = vrot.slane %v285, %v365
    %v367 = vlaneseq
    %v368 = vshrl.u32 %v367, 7
    %v369 = vsub.s32 0, %v368
    %v370 = vrot.slane %v309, %v369
    %v371 = vlaneseq
    %v372 = vshrl.u32 %v371, 7
    %v373 = vsub.s32 0, %v372
    %v374 = vrot.slane %v323, %v373
    %v375 = vlaneseq
    %v376 = vshrl.u32 %v375, 7
    %v377 = vsub.s32 0, %v376
    %v378 = vrot.slane %v331, %v377
    %v379 = vlaneseq
    %v380 = vshrl.u32 %v379, 7
    %v381 = vsub.s32 0, %v380
    %v382 = vrot.slane %v333, %v381
    %v383 = vlaneseq
    %v384 = vshrl.u32 %v383, 7
    %v385 = vsub.s32 0, %v384
    %v386 = vrot.slane %v316, %v385
    %v387 = vlaneseq
    %v388 = vshrl.u32 %v387, 7
    %v389 = vsub.s32 0, %v388
    %v390 = vrot.slane %v330, %v389
    %v391 = vlaneseq
    %v392 = vshrl.u32 %v391, 7
    %v393 = vsub.s32 0, %v392
    %v394 = vrot.slane %v332, %v393
    %v395 = vlaneseq
    %v396 = vshrl.u32 %v395, 7
    %v397 = vsub.s32 0, %v396
    %v398 = vrot.slane %v334, %v397
    %v415 = vadd.f32 %v338, %v179
    %v416 = vadd.f32 %v338, %v182
    %v417 = vadd.f32 %v342, %v179
    %v418 = vadd.f32 %v342, %v182
    %v419 = vadd.f32 %v346, %v179
    %v420 = vadd.f32 %v346, %v182
    %v421 = vadd.f32 %v350, %v179
    %v422 = vadd.f32 %v350, %v182
    %v423 = vadd.f32 %v354, %v179
    %v424 = vadd.f32 %v354, %v182
    %v425 = vadd.f32 %v358, %v179
    %v426 = vadd.f32 %v358, %v182
    %v427 = vadd.f32 %v362, %v179
    %v428 = vadd.f32 %v362, %v182
    %v429 = vadd.f32 %v366, %v179
    %v430 = vadd.f32 %v366, %v182
    %v431 = vadd.f32 %v370, %v179
    %v432 = vadd.f32 %v370, %v182
    %v433 = vadd.f32 %v374, %v179
    %v434 = vadd.f32 %v374, %v182
    %v435 = vadd.f32 %v378, %v179
    %v436 = vadd.f32 %v378, %v182
    %v437 = vadd.f32 %v382, %v179
    %v438 = vadd.f32 %v382, %v182
    %v439 = vadd.f32 %v386, %v179
    %v440 = vadd.f32 %v386, %v182
    %v441 = vadd.f32 %v390, %v179
    %v442 = vadd.f32 %v390, %v182
    %v443 = vadd.f32 %v394, %v179
    %v444 = vadd.f32 %v394, %v182
    %v445 = vadd.f32 %v398, %v179
    %v446 = vadd.f32 %v398, %v182
    %vm447 = vcmp.gt.f32.partialorder %v415, 0.0
    %vm448 = vcmp.gt.f32.partialorder %v416, 0.0
    %vm449 = vcmp.gt.f32.partialorder %v417, 0.0
    %vm450 = vcmp.gt.f32.partialorder %v418, 0.0
    %vm451 = vcmp.gt.f32.partialorder %v419, 0.0
    %vm452 = vcmp.gt.f32.partialorder %v420, 0.0
    %vm453 = vcmp.gt.f32.partialorder %v421, 0.0
    %vm454 = vcmp.gt.f32.partialorder %v422, 0.0
    %vm455 = vcmp.gt.f32.partialorder %v423, 0.0
    %vm456 = vcmp.gt.f32.partialorder %v424, 0.0
    %vm457 = vcmp.gt.f32.partialorder %v425, 0.0
    %vm458 = vcmp.gt.f32.partialorder %v426, 0.0
    %vm459 = vcmp.gt.f32.partialorder %v427, 0.0
    %vm460 = vcmp.gt.f32.partialorder %v428, 0.0
    %vm461 = vcmp.gt.f32.partialorder %v429, 0.0
    %vm462 = vcmp.gt.f32.partialorder %v430, 0.0
    %vm463 = vcmp.gt.f32.partialorder %v431, 0.0
    %vm464 = vcmp.gt.f32.partialorder %v432, 0.0
    %vm465 = vcmp.gt.f32.partialorder %v433, 0.0
    %vm466 = vcmp.gt.f32.partialorder %v434, 0.0
    %vm467 = vcmp.gt.f32.partialorder %v435, 0.0
    %vm468 = vcmp.gt.f32.partialorder %v436, 0.0
    %vm469 = vcmp.gt.f32.partialorder %v437, 0.0
    %vm470 = vcmp.gt.f32.partialorder %v438, 0.0
    %vm471 = vcmp.gt.f32.partialorder %v439, 0.0
    %vm472 = vcmp.gt.f32.partialorder %v440, 0.0
    %vm473 = vcmp.gt.f32.partialorder %v441, 0.0
    %vm474 = vcmp.gt.f32.partialorder %v442, 0.0
    %vm475 = vcmp.gt.f32.partialorder %v443, 0.0
    %vm476 = vcmp.gt.f32.partialorder %v444, 0.0
    %vm477 = vcmp.gt.f32.partialorder %v445, 0.0
    %vm478 = vcmp.gt.f32.partialorder %v446, 0.0
    %v479 = vmul.f32 %v415, 0.2
    %v480 = vmul.f32 %v416, 0.2
    %v481 = vmul.f32 %v417, 0.2
    %v482 = vmul.f32 %v418, 0.2
    %v483 = vmul.f32 %v419, 0.2
    %v484 = vmul.f32 %v420, 0.2
    %v485 = vmul.f32 %v421, 0.2
    %v486 = vmul.f32 %v422, 0.2
    %v487 = vmul.f32 %v423, 0.2
    %v488 = vmul.f32 %v424, 0.2
    %v489 = vmul.f32 %v425, 0.2
    %v490 = vmul.f32 %v426, 0.2
    %v491 = vmul.f32 %v427, 0.2
    %v492 = vmul.f32 %v428, 0.2
    %v493 = vmul.f32 %v429, 0.2
    %v494 = vmul.f32 %v430, 0.2
    %v495 = vmul.f32 %v431, 0.2
    %v496 = vmul.f32 %v432, 0.2
    %v497 = vmul.f32 %v433, 0.2
    %v498 = vmul.f32 %v434, 0.2
    %v499 = vmul.f32 %v435, 0.2
    %v500 = vmul.f32 %v436, 0.2
    %v501 = vmul.f32 %v437, 0.2
    %v502 = vmul.f32 %v438, 0.2
    %v503 = vmul.f32 %v439, 0.2
    %v504 = vmul.f32 %v440, 0.2
    %v505 = vmul.f32 %v441, 0.2
    %v506 = vmul.f32 %v442, 0.2
    %v507 = vmul.f32 %v443, 0.2
    %v508 = vmul.f32 %v444, 0.2
    %v509 = vmul.f32 %v445, 0.2
    %v510 = vmul.f32 %v446, 0.2
    %v511 = vsel %vm447, %v415, %v479
    %v512 = vsel %vm448, %v416, %v480
    %v513 = vsel %vm449, %v417, %v481
    %v514 = vsel %vm450, %v418, %v482
    %v515 = vsel %vm451, %v419, %v483
    %v516 = vsel %vm452, %v420, %v484
    %v517 = vsel %vm453, %v421, %v485
    %v518 = vsel %vm454, %v422, %v486
    %v519 = vsel %vm455, %v423, %v487
    %v520 = vsel %vm456, %v424, %v488
    %v521 = vsel %vm457, %v425, %v489
    %v522 = vsel %vm458, %v426, %v490
    %v523 = vsel %vm459, %v427, %v491
    %v524 = vsel %vm460, %v428, %v492
    %v525 = vsel %vm461, %v429, %v493
    %v526 = vsel %vm462, %v430, %v494
    %v527 = vsel %vm463, %v431, %v495
    %v528 = vsel %vm464, %v432, %v496
    %v529 = vsel %vm465, %v433, %v497
    %v530 = vsel %vm466, %v434, %v498
    %v531 = vsel %vm467, %v435, %v499
    %v532 = vsel %vm468, %v436, %v500
    %v533 = vsel %vm469, %v437, %v501
    %v534 = vsel %vm470, %v438, %v502
    %v535 = vsel %vm471, %v439, %v503
    %v536 = vsel %vm472, %v440, %v504
    %v537 = vsel %vm473, %v441, %v505
    %v538 = vsel %vm474, %v442, %v506
    %v539 = vsel %vm475, %v443, %v507
    %v540 = vsel %vm476, %v444, %v508
    %v541 = vsel %vm477, %v445, %v509
    %v542 = vsel %vm478, %v446, %v510
    %v543 = vlaneseq
    %v544 = vshrl.u32 %v543, 7
    %v545 = vsub.s32 0, %v544
    %v546 = vrot.slane %v127, %v545
    %v547 = vmul.f32 %v511, %v546
    %v548 = vmul.f32 %v512, %v546
    %v549 = vmul.f32 %v513, %v546
    %v550 = vmul.f32 %v514, %v546
    %v551 = vmul.f32 %v515, %v546
    %v552 = vmul.f32 %v516, %v546
    %v553 = vmul.f32 %v517, %v546
    %v554 = vmul.f32 %v518, %v546
    %v555 = vmul.f32 %v519, %v546
    %v556 = vmul.f32 %v520, %v546
    %v557 = vmul.f32 %v521, %v546
    %v558 = vmul.f32 %v522, %v546
    %v559 = vmul.f32 %v523, %v546
    %v560 = vmul.f32 %v524, %v546
    %v561 = vmul.f32 %v525, %v546
    %v562 = vmul.f32 %v526, %v546
    %v563 = vmul.f32 %v527, %v546
    %v564 = vmul.f32 %v528, %v546
    %v565 = vmul.f32 %v529, %v546
    %v566 = vmul.f32 %v530, %v546
    %v567 = vmul.f32 %v531, %v546
    %v568 = vmul.f32 %v532, %v546
    %v569 = vmul.f32 %v533, %v546
    %v570 = vmul.f32 %v534, %v546
    %v571 = vmul.f32 %v535, %v546
    %v572 = vmul.f32 %v536, %v546
    %v573 = vmul.f32 %v537, %v546
    %v574 = vmul.f32 %v538, %v546
    %v575 = vmul.f32 %v539, %v546
    %v576 = vmul.f32 %v540, %v546
    %v577 = vmul.f32 %v541, %v546
    %v578 = vmul.f32 %v542, %v546
    %vm579 = vcmask 130048
    %v580 = vsel %vm579, %v547, 0.0
    %581 = vadd.xlane.f32.xlu0 %v580
    %v582 = vpop.xlane.xlu0 %581
    %v583 = vsel %vm579, %v548, 0.0
    %584 = vadd.xlane.f32.xlu0 %v583
    %v585 = vpop.xlane.xlu0 %584
    %v586 = vsel %vm579, %v549, 0.0
    %587 = vadd.xlane.f32.xlu0 %v586
    %v588 = vpop.xlane.xlu0 %587
    %v589 = vsel %vm579, %v550, 0.0
    %590 = vadd.xlane.f32.xlu0 %v589
    %v591 = vpop.xlane.xlu0 %590
    %v592 = vsel %vm579, %v551, 0.0
    %593 = vadd.xlane.f32.xlu0 %v592
    %v594 = vpop.xlane.xlu0 %593
    %v595 = vsel %vm579, %v552, 0.0
    %596 = vadd.xlane.f32.xlu0 %v595
    %v597 = vpop.xlane.xlu0 %596
    %v598 = vsel %vm579, %v553, 0.0
    %599 = vadd.xlane.f32.xlu0 %v598
    %v600 = vpop.xlane.xlu0 %599
    %v601 = vsel %vm579, %v554, 0.0
    %602 = vadd.xlane.f32.xlu0 %v601
    %v603 = vpop.xlane.xlu0 %602
    %v604 = vsel %vm579, %v555, 0.0
    %605 = vadd.xlane.f32.xlu0 %v604
    %v606 = vpop.xlane.xlu0 %605
    %v607 = vsel %vm579, %v556, 0.0
    %608 = vadd.xlane.f32.xlu0 %v607
    %v609 = vpop.xlane.xlu0 %608
    %v610 = vsel %vm579, %v557, 0.0
    %611 = vadd.xlane.f32.xlu0 %v610
    %v612 = vpop.xlane.xlu0 %611
    %v613 = vsel %vm579, %v558, 0.0
    %614 = vadd.xlane.f32.xlu0 %v613
    %v615 = vpop.xlane.xlu0 %614
    %v616 = vsel %vm579, %v559, 0.0
    %617 = vadd.xlane.f32.xlu0 %v616
    %v618 = vpop.xlane.xlu0 %617
    %v619 = vsel %vm579, %v560, 0.0
    %620 = vadd.xlane.f32.xlu0 %v619
    %v621 = vpop.xlane.xlu0 %620
    %v622 = vsel %vm579, %v561, 0.0
    %623 = vadd.xlane.f32.xlu0 %v622
    %v624 = vpop.xlane.xlu0 %623
    %v625 = vsel %vm579, %v562, 0.0
    %626 = vadd.xlane.f32.xlu0 %v625
    %v627 = vpop.xlane.xlu0 %626
    %v628 = vsel %vm579, %v563, 0.0
    %629 = vadd.xlane.f32.xlu0 %v628
    %v630 = vpop.xlane.xlu0 %629
    %v631 = vsel %vm579, %v564, 0.0
    %632 = vadd.xlane.f32.xlu0 %v631
    %v633 = vpop.xlane.xlu0 %632
    %v634 = vsel %vm579, %v565, 0.0
    %635 = vadd.xlane.f32.xlu0 %v634
    %v636 = vpop.xlane.xlu0 %635
    %v637 = vsel %vm579, %v566, 0.0
    %638 = vadd.xlane.f32.xlu0 %v637
    %v639 = vpop.xlane.xlu0 %638
    %v640 = vsel %vm579, %v567, 0.0
    %641 = vadd.xlane.f32.xlu0 %v640
    %v642 = vpop.xlane.xlu0 %641
    %v643 = vsel %vm579, %v568, 0.0
    %644 = vadd.xlane.f32.xlu0 %v643
    %v645 = vpop.xlane.xlu0 %644
    %v646 = vsel %vm579, %v569, 0.0
    %647 = vadd.xlane.f32.xlu0 %v646
    %v648 = vpop.xlane.xlu0 %647
    %v649 = vsel %vm579, %v570, 0.0
    %650 = vadd.xlane.f32.xlu0 %v649
    %v651 = vpop.xlane.xlu0 %650
    %v652 = vsel %vm579, %v571, 0.0
    %653 = vadd.xlane.f32.xlu0 %v652
    %v654 = vpop.xlane.xlu0 %653
    %v655 = vsel %vm579, %v572, 0.0
    %656 = vadd.xlane.f32.xlu0 %v655
    %v657 = vpop.xlane.xlu0 %656
    %v658 = vsel %vm579, %v573, 0.0
    %659 = vadd.xlane.f32.xlu0 %v658
    %v660 = vpop.xlane.xlu0 %659
    %v661 = vsel %vm579, %v574, 0.0
    %662 = vadd.xlane.f32.xlu0 %v661
    %v663 = vpop.xlane.xlu0 %662
    %v664 = vsel %vm579, %v575, 0.0
    %665 = vadd.xlane.f32.xlu0 %v664
    %v666 = vpop.xlane.xlu0 %665
    %v667 = vsel %vm579, %v576, 0.0
    %668 = vadd.xlane.f32.xlu0 %v667
    %v669 = vpop.xlane.xlu0 %668
    %v670 = vsel %vm579, %v577, 0.0
    %671 = vadd.xlane.f32.xlu0 %v670
    %v672 = vpop.xlane.xlu0 %671
    %v673 = vsel %vm579, %v578, 0.0
    %674 = vadd.xlane.f32.xlu0 %v673
    %v675 = vpop.xlane.xlu0 %674
    %v678 = vlaneseq
    %v679 = vshrl.u32 %v678, 7
    %v680 = vsub.s32 0, %v679
    %v681 = vrot.slane %v119, %v680
    %683 = vbcast.lane.b32.xlu0 %v681, 256
    %v684 = vpop.permute.xlu0 %683
    %s686 = sor.u32 256, 8
    %687 = vbcast.lane.b32.xlu0 %v681, %s686
    %v688 = vpop.permute.xlu0 %687
    %v689 = vlaneseq
    %v690 = vshrl.u32 %v689, 7
    %v691 = vsub.s32 1, %v690
    %v692 = vrot.slane %v119, %v691
    %694 = vbcast.lane.b32.xlu0 %v692, 256
    %v695 = vpop.permute.xlu0 %694
    %s697 = sor.u32 256, 8
    %698 = vbcast.lane.b32.xlu0 %v692, %s697
    %v699 = vpop.permute.xlu0 %698
    %v700 = vlaneseq
    %v701 = vshrl.u32 %v700, 7
    %v702 = vsub.s32 2, %v701
    %v703 = vrot.slane %v119, %v702
    %705 = vbcast.lane.b32.xlu0 %v703, 256
    %v706 = vpop.permute.xlu0 %705
    %s708 = sor.u32 256, 8
    %709 = vbcast.lane.b32.xlu0 %v703, %s708
    %v710 = vpop.permute.xlu0 %709
    %v711 = vlaneseq
    %v712 = vshrl.u32 %v711, 7
    %v713 = vsub.s32 3, %v712
    %v714 = vrot.slane %v119, %v713
    %716 = vbcast.lane.b32.xlu0 %v714, 256
    %v717 = vpop.permute.xlu0 %716
    %s719 = sor.u32 256, 8
    %720 = vbcast.lane.b32.xlu0 %v714, %s719
    %v721 = vpop.permute.xlu0 %720
    %v722 = vlaneseq
    %v723 = vshrl.u32 %v722, 7
    %v724 = vsub.s32 4, %v723
    %v725 = vrot.slane %v119, %v724
    %727 = vbcast.lane.b32.xlu0 %v725, 256
    %v728 = vpop.permute.xlu0 %727
    %s730 = sor.u32 256, 8
    %731 = vbcast.lane.b32.xlu0 %v725, %s730
    %v732 = vpop.permute.xlu0 %731
    %v733 = vlaneseq
    %v734 = vshrl.u32 %v733, 7
    %v735 = vsub.s32 5, %v734
    %v736 = vrot.slane %v119, %v735
    %738 = vbcast.lane.b32.xlu0 %v736, 256
    %v739 = vpop.permute.xlu0 %738
    %s741 = sor.u32 256, 8
    %742 = vbcast.lane.b32.xlu0 %v736, %s741
    %v743 = vpop.permute.xlu0 %742
    %v744 = vlaneseq
    %v745 = vshrl.u32 %v744, 7
    %v746 = vsub.s32 6, %v745
    %v747 = vrot.slane %v119, %v746
    %749 = vbcast.lane.b32.xlu0 %v747, 256
    %v750 = vpop.permute.xlu0 %749
    %s752 = sor.u32 256, 8
    %753 = vbcast.lane.b32.xlu0 %v747, %s752
    %v754 = vpop.permute.xlu0 %753
    %v755 = vlaneseq
    %v756 = vshrl.u32 %v755, 7
    %v757 = vsub.s32 7, %v756
    %v758 = vrot.slane %v119, %v757
    %760 = vbcast.lane.b32.xlu0 %v758, 256
    %v761 = vpop.permute.xlu0 %760
    %s763 = sor.u32 256, 8
    %764 = vbcast.lane.b32.xlu0 %v758, %s763
    %v765 = vpop.permute.xlu0 %764
    %v766 = vlaneseq
    %v767 = vshrl.u32 %v766, 7
    %v768 = vsub.s32 0, %v767
    %v769 = vrot.slane %v120, %v768
    %771 = vbcast.lane.b32.xlu0 %v769, 256
    %v772 = vpop.permute.xlu0 %771
    %s774 = sor.u32 256, 8
    %775 = vbcast.lane.b32.xlu0 %v769, %s774
    %v776 = vpop.permute.xlu0 %775
    %v777 = vlaneseq
    %v778 = vshrl.u32 %v777, 7
    %v779 = vsub.s32 1, %v778
    %v780 = vrot.slane %v120, %v779
    %782 = vbcast.lane.b32.xlu0 %v780, 256
    %v783 = vpop.permute.xlu0 %782
    %s785 = sor.u32 256, 8
    %786 = vbcast.lane.b32.xlu0 %v780, %s785
    %v787 = vpop.permute.xlu0 %786
    %v788 = vlaneseq
    %v789 = vshrl.u32 %v788, 7
    %v790 = vsub.s32 2, %v789
    %v791 = vrot.slane %v120, %v790
    %793 = vbcast.lane.b32.xlu0 %v791, 256
    %v794 = vpop.permute.xlu0 %793
    %s796 = sor.u32 256, 8
    %797 = vbcast.lane.b32.xlu0 %v791, %s796
    %v798 = vpop.permute.xlu0 %797
    %v799 = vlaneseq
    %v800 = vshrl.u32 %v799, 7
    %v801 = vsub.s32 3, %v800
    %v802 = vrot.slane %v120, %v801
    %804 = vbcast.lane.b32.xlu0 %v802, 256
    %v805 = vpop.permute.xlu0 %804
    %s807 = sor.u32 256, 8
    %808 = vbcast.lane.b32.xlu0 %v802, %s807
    %v809 = vpop.permute.xlu0 %808
    %v810 = vlaneseq
    %v811 = vshrl.u32 %v810, 7
    %v812 = vsub.s32 4, %v811
    %v813 = vrot.slane %v120, %v812
    %815 = vbcast.lane.b32.xlu0 %v813, 256
    %v816 = vpop.permute.xlu0 %815
    %s818 = sor.u32 256, 8
    %819 = vbcast.lane.b32.xlu0 %v813, %s818
    %v820 = vpop.permute.xlu0 %819
    %v821 = vlaneseq
    %v822 = vshrl.u32 %v821, 7
    %v823 = vsub.s32 5, %v822
    %v824 = vrot.slane %v120, %v823
    %826 = vbcast.lane.b32.xlu0 %v824, 256
    %v827 = vpop.permute.xlu0 %826
    %s829 = sor.u32 256, 8
    %830 = vbcast.lane.b32.xlu0 %v824, %s829
    %v831 = vpop.permute.xlu0 %830
    %v832 = vlaneseq
    %v833 = vshrl.u32 %v832, 7
    %v834 = vsub.s32 6, %v833
    %v835 = vrot.slane %v120, %v834
    %837 = vbcast.lane.b32.xlu0 %v835, 256
    %v838 = vpop.permute.xlu0 %837
    %s840 = sor.u32 256, 8
    %841 = vbcast.lane.b32.xlu0 %v835, %s840
    %v842 = vpop.permute.xlu0 %841
    %v843 = vlaneseq
    %v844 = vshrl.u32 %v843, 7
    %v845 = vsub.s32 7, %v844
    %v846 = vrot.slane %v120, %v845
    %848 = vbcast.lane.b32.xlu0 %v846, 256
    %v849 = vpop.permute.xlu0 %848
    %s851 = sor.u32 256, 8
    %852 = vbcast.lane.b32.xlu0 %v846, %s851
    %v853 = vpop.permute.xlu0 %852
    %v886 = vadd.f32 %v582, %v684
    %v887 = vadd.f32 %v585, %v688
    %v888 = vadd.f32 %v588, %v695
    %v889 = vadd.f32 %v591, %v699
    %v890 = vadd.f32 %v594, %v706
    %v891 = vadd.f32 %v597, %v710
    %v892 = vadd.f32 %v600, %v717
    %v893 = vadd.f32 %v603, %v721
    %v894 = vadd.f32 %v606, %v728
    %v895 = vadd.f32 %v609, %v732
    %v896 = vadd.f32 %v612, %v739
    %v897 = vadd.f32 %v615, %v743
    %v898 = vadd.f32 %v618, %v750
    %v899 = vadd.f32 %v621, %v754
    %v900 = vadd.f32 %v624, %v761
    %v901 = vadd.f32 %v627, %v765
    %v902 = vadd.f32 %v630, %v772
    %v903 = vadd.f32 %v633, %v776
    %v904 = vadd.f32 %v636, %v783
    %v905 = vadd.f32 %v639, %v787
    %v906 = vadd.f32 %v642, %v794
    %v907 = vadd.f32 %v645, %v798
    %v908 = vadd.f32 %v648, %v805
    %v909 = vadd.f32 %v651, %v809
    %v910 = vadd.f32 %v654, %v816
    %v911 = vadd.f32 %v657, %v820
    %v912 = vadd.f32 %v660, %v827
    %v913 = vadd.f32 %v663, %v831
    %v914 = vadd.f32 %v666, %v838
    %v915 = vadd.f32 %v669, %v842
    %v916 = vadd.f32 %v672, %v849
    %v917 = vadd.f32 %v675, %v853
    %950 = vset.pattern.permute.xlu0 0
    %951 = vperm.xlu0 %950, %v886
    %v952 = vpop.permute.xlu0 %951
    %953 = vset.pattern.permute.xlu0 0
    %954 = vperm.xlu0 %953, %v887
    %v955 = vpop.permute.xlu0 %954
    %956 = vset.pattern.permute.xlu0 0
    %957 = vperm.xlu0 %956, %v888
    %v958 = vpop.permute.xlu0 %957
    %959 = vset.pattern.permute.xlu0 0
    %960 = vperm.xlu0 %959, %v889
    %v961 = vpop.permute.xlu0 %960
    %962 = vset.pattern.permute.xlu0 0
    %963 = vperm.xlu0 %962, %v890
    %v964 = vpop.permute.xlu0 %963
    %965 = vset.pattern.permute.xlu0 0
    %966 = vperm.xlu0 %965, %v891
    %v967 = vpop.permute.xlu0 %966
    %968 = vset.pattern.permute.xlu0 0
    %969 = vperm.xlu0 %968, %v892
    %v970 = vpop.permute.xlu0 %969
    %971 = vset.pattern.permute.xlu0 0
    %972 = vperm.xlu0 %971, %v893
    %v973 = vpop.permute.xlu0 %972
    %974 = vset.pattern.permute.xlu0 0
    %975 = vperm.xlu0 %974, %v894
    %v976 = vpop.permute.xlu0 %975
    %977 = vset.pattern.permute.xlu0 0
    %978 = vperm.xlu0 %977, %v895
    %v979 = vpop.permute.xlu0 %978
    %980 = vset.pattern.permute.xlu0 0
    %981 = vperm.xlu0 %980, %v896
    %v982 = vpop.permute.xlu0 %981
    %983 = vset.pattern.permute.xlu0 0
    %984 = vperm.xlu0 %983, %v897
    %v985 = vpop.permute.xlu0 %984
    %986 = vset.pattern.permute.xlu0 0
    %987 = vperm.xlu0 %986, %v898
    %v988 = vpop.permute.xlu0 %987
    %989 = vset.pattern.permute.xlu0 0
    %990 = vperm.xlu0 %989, %v899
    %v991 = vpop.permute.xlu0 %990
    %992 = vset.pattern.permute.xlu0 0
    %993 = vperm.xlu0 %992, %v900
    %v994 = vpop.permute.xlu0 %993
    %995 = vset.pattern.permute.xlu0 0
    %996 = vperm.xlu0 %995, %v901
    %v997 = vpop.permute.xlu0 %996
    %998 = vset.pattern.permute.xlu0 0
    %999 = vperm.xlu0 %998, %v902
    %v1000 = vpop.permute.xlu0 %999
    %1001 = vset.pattern.permute.xlu0 0
    %1002 = vperm.xlu0 %1001, %v903
    %v1003 = vpop.permute.xlu0 %1002
    %1004 = vset.pattern.permute.xlu0 0
    %1005 = vperm.xlu0 %1004, %v904
    %v1006 = vpop.permute.xlu0 %1005
    %1007 = vset.pattern.permute.xlu0 0
    %1008 = vperm.xlu0 %1007, %v905
    %v1009 = vpop.permute.xlu0 %1008
    %1010 = vset.pattern.permute.xlu0 0
    %1011 = vperm.xlu0 %1010, %v906
    %v1012 = vpop.permute.xlu0 %1011
    %1013 = vset.pattern.permute.xlu0 0
    %1014 = vperm.xlu0 %1013, %v907
    %v1015 = vpop.permute.xlu0 %1014
    %1016 = vset.pattern.permute.xlu0 0
    %1017 = vperm.xlu0 %1016, %v908
    %v1018 = vpop.permute.xlu0 %1017
    %1019 = vset.pattern.permute.xlu0 0
    %1020 = vperm.xlu0 %1019, %v909
    %v1021 = vpop.permute.xlu0 %1020
    %1022 = vset.pattern.permute.xlu0 0
    %1023 = vperm.xlu0 %1022, %v910
    %v1024 = vpop.permute.xlu0 %1023
    %1025 = vset.pattern.permute.xlu0 0
    %1026 = vperm.xlu0 %1025, %v911
    %v1027 = vpop.permute.xlu0 %1026
    %1028 = vset.pattern.permute.xlu0 0
    %1029 = vperm.xlu0 %1028, %v912
    %v1030 = vpop.permute.xlu0 %1029
    %1031 = vset.pattern.permute.xlu0 0
    %1032 = vperm.xlu0 %1031, %v913
    %v1033 = vpop.permute.xlu0 %1032
    %1034 = vset.pattern.permute.xlu0 0
    %1035 = vperm.xlu0 %1034, %v914
    %v1036 = vpop.permute.xlu0 %1035
    %1037 = vset.pattern.permute.xlu0 0
    %1038 = vperm.xlu0 %1037, %v915
    %v1039 = vpop.permute.xlu0 %1038
    %1040 = vset.pattern.permute.xlu0 0
    %1041 = vperm.xlu0 %1040, %v916
    %v1042 = vpop.permute.xlu0 %1041
    %1043 = vset.pattern.permute.xlu0 0
    %1044 = vperm.xlu0 %1043, %v917
    %v1045 = vpop.permute.xlu0 %1044
    %v1046 = vlaneseq
    %v1047 = vand.u32 %v1046, 127
    %v1048 = vlaneseq
    %v1049 = vshrl.u32 %v1048, 7
    %v1050 = vsub.s32 %v1047, %v1049
    %v1051 = vrot.slane %v952, %v1050
    %v1052 = vadd.s32 %v1047, 4294967288
    %v1053 = vlaneseq
    %v1054 = vshrl.u32 %v1053, 7
    %v1055 = vsub.s32 %v1052, %v1054
    %v1056 = vrot.slane %v955, %v1055
    %vm1057 = vcmask 130112
    %v1058 = vsel %vm1057, %v1056, %v1051
    %v1059 = vlaneseq
    %v1060 = vshrl.u32 %v1059, 7
    %v1061 = vsub.s32 %v1047, %v1060
    %v1062 = vrot.slane %v958, %v1061
    %v1063 = vlaneseq
    %v1064 = vshrl.u32 %v1063, 7
    %v1065 = vsub.s32 %v1052, %v1064
    %v1066 = vrot.slane %v961, %v1065
    %v1067 = vsel %vm1057, %v1066, %v1062
    %v1068 = vlaneseq
    %v1069 = vshrl.u32 %v1068, 7
    %v1070 = vsub.s32 %v1047, %v1069
    %v1071 = vrot.slane %v964, %v1070
    %v1072 = vlaneseq
    %v1073 = vshrl.u32 %v1072, 7
    %v1074 = vsub.s32 %v1052, %v1073
    %v1075 = vrot.slane %v967, %v1074
    %v1076 = vsel %vm1057, %v1075, %v1071
    %v1077 = vlaneseq
    %v1078 = vshrl.u32 %v1077, 7
    %v1079 = vsub.s32 %v1047, %v1078
    %v1080 = vrot.slane %v970, %v1079
    %v1081 = vlaneseq
    %v1082 = vshrl.u32 %v1081, 7
    %v1083 = vsub.s32 %v1052, %v1082
    %v1084 = vrot.slane %v973, %v1083
    %v1085 = vsel %vm1057, %v1084, %v1080
    %v1086 = vlaneseq
    %v1087 = vshrl.u32 %v1086, 7
    %v1088 = vsub.s32 %v1047, %v1087
    %v1089 = vrot.slane %v976, %v1088
    %v1090 = vlaneseq
    %v1091 = vshrl.u32 %v1090, 7
    %v1092 = vsub.s32 %v1052, %v1091
    %v1093 = vrot.slane %v979, %v1092
    %v1094 = vsel %vm1057, %v1093, %v1089
    %v1095 = vlaneseq
    %v1096 = vshrl.u32 %v1095, 7
    %v1097 = vsub.s32 %v1047, %v1096
    %v1098 = vrot.slane %v982, %v1097
    %v1099 = vlaneseq
    %v1100 = vshrl.u32 %v1099, 7
    %v1101 = vsub.s32 %v1052, %v1100
    %v1102 = vrot.slane %v985, %v1101
    %v1103 = vsel %vm1057, %v1102, %v1098
    %v1104 = vlaneseq
    %v1105 = vshrl.u32 %v1104, 7
    %v1106 = vsub.s32 %v1047, %v1105
    %v1107 = vrot.slane %v988, %v1106
    %v1108 = vlaneseq
    %v1109 = vshrl.u32 %v1108, 7
    %v1110 = vsub.s32 %v1052, %v1109
    %v1111 = vrot.slane %v991, %v1110
    %v1112 = vsel %vm1057, %v1111, %v1107
    %v1113 = vlaneseq
    %v1114 = vshrl.u32 %v1113, 7
    %v1115 = vsub.s32 %v1047, %v1114
    %v1116 = vrot.slane %v994, %v1115
    %v1117 = vlaneseq
    %v1118 = vshrl.u32 %v1117, 7
    %v1119 = vsub.s32 %v1052, %v1118
    %v1120 = vrot.slane %v997, %v1119
    %v1121 = vsel %vm1057, %v1120, %v1116
    %v1122 = vlaneseq
    %v1123 = vshrl.u32 %v1122, 7
    %v1124 = vsub.s32 %v1047, %v1123
    %v1125 = vrot.slane %v1000, %v1124
    %v1126 = vlaneseq
    %v1127 = vshrl.u32 %v1126, 7
    %v1128 = vsub.s32 %v1052, %v1127
    %v1129 = vrot.slane %v1003, %v1128
    %v1130 = vsel %vm1057, %v1129, %v1125
    %v1131 = vlaneseq
    %v1132 = vshrl.u32 %v1131, 7
    %v1133 = vsub.s32 %v1047, %v1132
    %v1134 = vrot.slane %v1006, %v1133
    %v1135 = vlaneseq
    %v1136 = vshrl.u32 %v1135, 7
    %v1137 = vsub.s32 %v1052, %v1136
    %v1138 = vrot.slane %v1009, %v1137
    %v1139 = vsel %vm1057, %v1138, %v1134
    %v1140 = vlaneseq
    %v1141 = vshrl.u32 %v1140, 7
    %v1142 = vsub.s32 %v1047, %v1141
    %v1143 = vrot.slane %v1012, %v1142
    %v1144 = vlaneseq
    %v1145 = vshrl.u32 %v1144, 7
    %v1146 = vsub.s32 %v1052, %v1145
    %v1147 = vrot.slane %v1015, %v1146
    %v1148 = vsel %vm1057, %v1147, %v1143
    %v1149 = vlaneseq
    %v1150 = vshrl.u32 %v1149, 7
    %v1151 = vsub.s32 %v1047, %v1150
    %v1152 = vrot.slane %v1018, %v1151
    %v1153 = vlaneseq
    %v1154 = vshrl.u32 %v1153, 7
    %v1155 = vsub.s32 %v1052, %v1154
    %v1156 = vrot.slane %v1021, %v1155
    %v1157 = vsel %vm1057, %v1156, %v1152
    %v1158 = vlaneseq
    %v1159 = vshrl.u32 %v1158, 7
    %v1160 = vsub.s32 %v1047, %v1159
    %v1161 = vrot.slane %v1024, %v1160
    %v1162 = vlaneseq
    %v1163 = vshrl.u32 %v1162, 7
    %v1164 = vsub.s32 %v1052, %v1163
    %v1165 = vrot.slane %v1027, %v1164
    %v1166 = vsel %vm1057, %v1165, %v1161
    %v1167 = vlaneseq
    %v1168 = vshrl.u32 %v1167, 7
    %v1169 = vsub.s32 %v1047, %v1168
    %v1170 = vrot.slane %v1030, %v1169
    %v1171 = vlaneseq
    %v1172 = vshrl.u32 %v1171, 7
    %v1173 = vsub.s32 %v1052, %v1172
    %v1174 = vrot.slane %v1033, %v1173
    %v1175 = vsel %vm1057, %v1174, %v1170
    %v1176 = vlaneseq
    %v1177 = vshrl.u32 %v1176, 7
    %v1178 = vsub.s32 %v1047, %v1177
    %v1179 = vrot.slane %v1036, %v1178
    %v1180 = vlaneseq
    %v1181 = vshrl.u32 %v1180, 7
    %v1182 = vsub.s32 %v1052, %v1181
    %v1183 = vrot.slane %v1039, %v1182
    %v1184 = vsel %vm1057, %v1183, %v1179
    %v1185 = vlaneseq
    %v1186 = vshrl.u32 %v1185, 7
    %v1187 = vsub.s32 %v1047, %v1186
    %v1188 = vrot.slane %v1042, %v1187
    %v1189 = vlaneseq
    %v1190 = vshrl.u32 %v1189, 7
    %v1191 = vsub.s32 %v1052, %v1190
    %v1192 = vrot.slane %v1045, %v1191
    %v1193 = vsel %vm1057, %v1192, %v1188
    %vm1194 = vcmask 1041409
    %v1195 = vsel %vm1194, %v1067, %v1058
    %vm1196 = vcmask 1042434
    %v1197 = vsel %vm1196, %v1076, %v1195
    %vm1198 = vcmask 1043459
    %v1199 = vsel %vm1198, %v1085, %v1197
    %vm1200 = vcmask 1044484
    %v1201 = vsel %vm1200, %v1094, %v1199
    %vm1202 = vcmask 1045509
    %v1203 = vsel %vm1202, %v1103, %v1201
    %vm1204 = vcmask 1046534
    %v1205 = vsel %vm1204, %v1112, %v1203
    %vm1206 = vcmask 1047559
    %v1207 = vsel %vm1206, %v1121, %v1205
    %v1208 = vsel %vm1194, %v1139, %v1130
    %v1209 = vsel %vm1196, %v1148, %v1208
    %v1210 = vsel %vm1198, %v1157, %v1209
    %v1211 = vsel %vm1200, %v1166, %v1210
    %v1212 = vsel %vm1202, %v1175, %v1211
    %v1213 = vsel %vm1204, %v1184, %v1212
    %v1214 = vsel %vm1206, %v1193, %v1213
    %v1217 = vsel %vm579, %v1207, -inf
    %1218 = vmax.xlane.f32.xlu0 %v1217
    %v1219 = vpop.xlane.xlu0 %1218
    %v1220 = vsel %vm579, %v1214, -inf
    %1221 = vmax.xlane.f32.xlu0 %v1220
    %v1222 = vpop.xlane.xlu0 %1221
    %v1225 = vlaneseq
    %v1226 = vshrl.u32 %v1225, 7
    %v1227 = vsub.s32 0, %v1226
    %v1228 = vrot.slane %v1219, %v1227
    %v1229 = vlaneseq
    %v1230 = vshrl.u32 %v1229, 7
    %v1231 = vsub.s32 1, %v1230
    %v1232 = vrot.slane %v1219, %v1231
    %v1233 = vlaneseq
    %v1234 = vshrl.u32 %v1233, 7
    %v1235 = vsub.s32 2, %v1234
    %v1236 = vrot.slane %v1219, %v1235
    %v1237 = vlaneseq
    %v1238 = vshrl.u32 %v1237, 7
    %v1239 = vsub.s32 3, %v1238
    %v1240 = vrot.slane %v1219, %v1239
    %v1241 = vlaneseq
    %v1242 = vshrl.u32 %v1241, 7
    %v1243 = vsub.s32 4, %v1242
    %v1244 = vrot.slane %v1219, %v1243
    %v1245 = vlaneseq
    %v1246 = vshrl.u32 %v1245, 7
    %v1247 = vsub.s32 5, %v1246
    %v1248 = vrot.slane %v1219, %v1247
    %v1249 = vlaneseq
    %v1250 = vshrl.u32 %v1249, 7
    %v1251 = vsub.s32 6, %v1250
    %v1252 = vrot.slane %v1219, %v1251
    %v1253 = vlaneseq
    %v1254 = vshrl.u32 %v1253, 7
    %v1255 = vsub.s32 7, %v1254
    %v1256 = vrot.slane %v1219, %v1255
    %v1257 = vlaneseq
    %v1258 = vshrl.u32 %v1257, 7
    %v1259 = vsub.s32 0, %v1258
    %v1260 = vrot.slane %v1222, %v1259
    %v1261 = vlaneseq
    %v1262 = vshrl.u32 %v1261, 7
    %v1263 = vsub.s32 1, %v1262
    %v1264 = vrot.slane %v1222, %v1263
    %v1265 = vlaneseq
    %v1266 = vshrl.u32 %v1265, 7
    %v1267 = vsub.s32 2, %v1266
    %v1268 = vrot.slane %v1222, %v1267
    %v1269 = vlaneseq
    %v1270 = vshrl.u32 %v1269, 7
    %v1271 = vsub.s32 3, %v1270
    %v1272 = vrot.slane %v1222, %v1271
    %v1273 = vlaneseq
    %v1274 = vshrl.u32 %v1273, 7
    %v1275 = vsub.s32 4, %v1274
    %v1276 = vrot.slane %v1222, %v1275
    %v1277 = vlaneseq
    %v1278 = vshrl.u32 %v1277, 7
    %v1279 = vsub.s32 5, %v1278
    %v1280 = vrot.slane %v1222, %v1279
    %v1281 = vlaneseq
    %v1282 = vshrl.u32 %v1281, 7
    %v1283 = vsub.s32 6, %v1282
    %v1284 = vrot.slane %v1222, %v1283
    %v1285 = vlaneseq
    %v1286 = vshrl.u32 %v1285, 7
    %v1287 = vsub.s32 7, %v1286
    %v1288 = vrot.slane %v1222, %v1287
    %v1305 = vsub.f32 %v886, %v1228
    %v1306 = vsub.f32 %v887, %v1228
    %v1307 = vsub.f32 %v888, %v1232
    %v1308 = vsub.f32 %v889, %v1232
    %v1309 = vsub.f32 %v890, %v1236
    %v1310 = vsub.f32 %v891, %v1236
    %v1311 = vsub.f32 %v892, %v1240
    %v1312 = vsub.f32 %v893, %v1240
    %v1313 = vsub.f32 %v894, %v1244
    %v1314 = vsub.f32 %v895, %v1244
    %v1315 = vsub.f32 %v896, %v1248
    %v1316 = vsub.f32 %v897, %v1248
    %v1317 = vsub.f32 %v898, %v1252
    %v1318 = vsub.f32 %v899, %v1252
    %v1319 = vsub.f32 %v900, %v1256
    %v1320 = vsub.f32 %v901, %v1256
    %v1321 = vsub.f32 %v902, %v1260
    %v1322 = vsub.f32 %v903, %v1260
    %v1323 = vsub.f32 %v904, %v1264
    %v1324 = vsub.f32 %v905, %v1264
    %v1325 = vsub.f32 %v906, %v1268
    %v1326 = vsub.f32 %v907, %v1268
    %v1327 = vsub.f32 %v908, %v1272
    %v1328 = vsub.f32 %v909, %v1272
    %v1329 = vsub.f32 %v910, %v1276
    %v1330 = vsub.f32 %v911, %v1276
    %v1331 = vsub.f32 %v912, %v1280
    %v1332 = vsub.f32 %v913, %v1280
    %v1333 = vsub.f32 %v914, %v1284
    %v1334 = vsub.f32 %v915, %v1284
    %v1335 = vsub.f32 %v916, %v1288
    %v1336 = vsub.f32 %v917, %v1288
    %v1337 = vmul.f32 %v1305, 1.442695
    %v1338 = vpow.pop %v1337
    %v1339 = vmul.f32 %v1306, 1.442695
    %v1340 = vpow.pop %v1339
    %v1341 = vmul.f32 %v1307, 1.442695
    %v1342 = vpow.pop %v1341
    %v1343 = vmul.f32 %v1308, 1.442695
    %v1344 = vpow.pop %v1343
    %v1345 = vmul.f32 %v1309, 1.442695
    %v1346 = vpow.pop %v1345
    %v1347 = vmul.f32 %v1310, 1.442695
    %v1348 = vpow.pop %v1347
    %v1349 = vmul.f32 %v1311, 1.442695
    %v1350 = vpow.pop %v1349
    %v1351 = vmul.f32 %v1312, 1.442695
    %v1352 = vpow.pop %v1351
    %v1353 = vmul.f32 %v1313, 1.442695
    %v1354 = vpow.pop %v1353
    %v1355 = vmul.f32 %v1314, 1.442695
    %v1356 = vpow.pop %v1355
    %v1357 = vmul.f32 %v1315, 1.442695
    %v1358 = vpow.pop %v1357
    %v1359 = vmul.f32 %v1316, 1.442695
    %v1360 = vpow.pop %v1359
    %v1361 = vmul.f32 %v1317, 1.442695
    %v1362 = vpow.pop %v1361
    %v1363 = vmul.f32 %v1318, 1.442695
    %v1364 = vpow.pop %v1363
    %v1365 = vmul.f32 %v1319, 1.442695
    %v1366 = vpow.pop %v1365
    %v1367 = vmul.f32 %v1320, 1.442695
    %v1368 = vpow.pop %v1367
    %v1369 = vmul.f32 %v1321, 1.442695
    %v1370 = vpow.pop %v1369
    %v1371 = vmul.f32 %v1322, 1.442695
    %v1372 = vpow.pop %v1371
    %v1373 = vmul.f32 %v1323, 1.442695
    %v1374 = vpow.pop %v1373
    %v1375 = vmul.f32 %v1324, 1.442695
    %v1376 = vpow.pop %v1375
    %v1377 = vmul.f32 %v1325, 1.442695
    %v1378 = vpow.pop %v1377
    %v1379 = vmul.f32 %v1326, 1.442695
    %v1380 = vpow.pop %v1379
    %v1381 = vmul.f32 %v1327, 1.442695
    %v1382 = vpow.pop %v1381
    %v1383 = vmul.f32 %v1328, 1.442695
    %v1384 = vpow.pop %v1383
    %v1385 = vmul.f32 %v1329, 1.442695
    %v1386 = vpow.pop %v1385
    %v1387 = vmul.f32 %v1330, 1.442695
    %v1388 = vpow.pop %v1387
    %v1389 = vmul.f32 %v1331, 1.442695
    %v1390 = vpow.pop %v1389
    %v1391 = vmul.f32 %v1332, 1.442695
    %v1392 = vpow.pop %v1391
    %v1393 = vmul.f32 %v1333, 1.442695
    %v1394 = vpow.pop %v1393
    %v1395 = vmul.f32 %v1334, 1.442695
    %v1396 = vpow.pop %v1395
    %v1397 = vmul.f32 %v1335, 1.442695
    %v1398 = vpow.pop %v1397
    %v1399 = vmul.f32 %v1336, 1.442695
    %v1400 = vpow.pop %v1399
    %1433 = vset.pattern.permute.xlu0 0
    %1434 = vperm.xlu0 %1433, %v1338
    %v1435 = vpop.permute.xlu0 %1434
    %1436 = vset.pattern.permute.xlu0 0
    %1437 = vperm.xlu0 %1436, %v1340
    %v1438 = vpop.permute.xlu0 %1437
    %1439 = vset.pattern.permute.xlu0 0
    %1440 = vperm.xlu0 %1439, %v1342
    %v1441 = vpop.permute.xlu0 %1440
    %1442 = vset.pattern.permute.xlu0 0
    %1443 = vperm.xlu0 %1442, %v1344
    %v1444 = vpop.permute.xlu0 %1443
    %1445 = vset.pattern.permute.xlu0 0
    %1446 = vperm.xlu0 %1445, %v1346
    %v1447 = vpop.permute.xlu0 %1446
    %1448 = vset.pattern.permute.xlu0 0
    %1449 = vperm.xlu0 %1448, %v1348
    %v1450 = vpop.permute.xlu0 %1449
    %1451 = vset.pattern.permute.xlu0 0
    %1452 = vperm.xlu0 %1451, %v1350
    %v1453 = vpop.permute.xlu0 %1452
    %1454 = vset.pattern.permute.xlu0 0
    %1455 = vperm.xlu0 %1454, %v1352
    %v1456 = vpop.permute.xlu0 %1455
    %1457 = vset.pattern.permute.xlu0 0
    %1458 = vperm.xlu0 %1457, %v1354
    %v1459 = vpop.permute.xlu0 %1458
    %1460 = vset.pattern.permute.xlu0 0
    %1461 = vperm.xlu0 %1460, %v1356
    %v1462 = vpop.permute.xlu0 %1461
    %1463 = vset.pattern.permute.xlu0 0
    %1464 = vperm.xlu0 %1463, %v1358
    %v1465 = vpop.permute.xlu0 %1464
    %1466 = vset.pattern.permute.xlu0 0
    %1467 = vperm.xlu0 %1466, %v1360
    %v1468 = vpop.permute.xlu0 %1467
    %1469 = vset.pattern.permute.xlu0 0
    %1470 = vperm.xlu0 %1469, %v1362
    %v1471 = vpop.permute.xlu0 %1470
    %1472 = vset.pattern.permute.xlu0 0
    %1473 = vperm.xlu0 %1472, %v1364
    %v1474 = vpop.permute.xlu0 %1473
    %1475 = vset.pattern.permute.xlu0 0
    %1476 = vperm.xlu0 %1475, %v1366
    %v1477 = vpop.permute.xlu0 %1476
    %1478 = vset.pattern.permute.xlu0 0
    %1479 = vperm.xlu0 %1478, %v1368
    %v1480 = vpop.permute.xlu0 %1479
    %1481 = vset.pattern.permute.xlu0 0
    %1482 = vperm.xlu0 %1481, %v1370
    %v1483 = vpop.permute.xlu0 %1482
    %1484 = vset.pattern.permute.xlu0 0
    %1485 = vperm.xlu0 %1484, %v1372
    %v1486 = vpop.permute.xlu0 %1485
    %1487 = vset.pattern.permute.xlu0 0
    %1488 = vperm.xlu0 %1487, %v1374
    %v1489 = vpop.permute.xlu0 %1488
    %1490 = vset.pattern.permute.xlu0 0
    %1491 = vperm.xlu0 %1490, %v1376
    %v1492 = vpop.permute.xlu0 %1491
    %1493 = vset.pattern.permute.xlu0 0
    %1494 = vperm.xlu0 %1493, %v1378
    %v1495 = vpop.permute.xlu0 %1494
    %1496 = vset.pattern.permute.xlu0 0
    %1497 = vperm.xlu0 %1496, %v1380
    %v1498 = vpop.permute.xlu0 %1497
    %1499 = vset.pattern.permute.xlu0 0
    %1500 = vperm.xlu0 %1499, %v1382
    %v1501 = vpop.permute.xlu0 %1500
    %1502 = vset.pattern.permute.xlu0 0
    %1503 = vperm.xlu0 %1502, %v1384
    %v1504 = vpop.permute.xlu0 %1503
    %1505 = vset.pattern.permute.xlu0 0
    %1506 = vperm.xlu0 %1505, %v1386
    %v1507 = vpop.permute.xlu0 %1506
    %1508 = vset.pattern.permute.xlu0 0
    %1509 = vperm.xlu0 %1508, %v1388
    %v1510 = vpop.permute.xlu0 %1509
    %1511 = vset.pattern.permute.xlu0 0
    %1512 = vperm.xlu0 %1511, %v1390
    %v1513 = vpop.permute.xlu0 %1512
    %1514 = vset.pattern.permute.xlu0 0
    %1515 = vperm.xlu0 %1514, %v1392
    %v1516 = vpop.permute.xlu0 %1515
    %1517 = vset.pattern.permute.xlu0 0
    %1518 = vperm.xlu0 %1517, %v1394
    %v1519 = vpop.permute.xlu0 %1518
    %1520 = vset.pattern.permute.xlu0 0
    %1521 = vperm.xlu0 %1520, %v1396
    %v1522 = vpop.permute.xlu0 %1521
    %1523 = vset.pattern.permute.xlu0 0
    %1524 = vperm.xlu0 %1523, %v1398
    %v1525 = vpop.permute.xlu0 %1524
    %1526 = vset.pattern.permute.xlu0 0
    %1527 = vperm.xlu0 %1526, %v1400
    %v1528 = vpop.permute.xlu0 %1527
    %v1529 = vlaneseq
    %v1530 = vshrl.u32 %v1529, 7
    %v1531 = vsub.s32 %v1047, %v1530
    %v1532 = vrot.slane %v1435, %v1531
    %v1533 = vlaneseq
    %v1534 = vshrl.u32 %v1533, 7
    %v1535 = vsub.s32 %v1052, %v1534
    %v1536 = vrot.slane %v1438, %v1535
    %v1537 = vsel %vm1057, %v1536, %v1532
    %v1538 = vlaneseq
    %v1539 = vshrl.u32 %v1538, 7
    %v1540 = vsub.s32 %v1047, %v1539
    %v1541 = vrot.slane %v1441, %v1540
    %v1542 = vlaneseq
    %v1543 = vshrl.u32 %v1542, 7
    %v1544 = vsub.s32 %v1052, %v1543
    %v1545 = vrot.slane %v1444, %v1544
    %v1546 = vsel %vm1057, %v1545, %v1541
    %v1547 = vlaneseq
    %v1548 = vshrl.u32 %v1547, 7
    %v1549 = vsub.s32 %v1047, %v1548
    %v1550 = vrot.slane %v1447, %v1549
    %v1551 = vlaneseq
    %v1552 = vshrl.u32 %v1551, 7
    %v1553 = vsub.s32 %v1052, %v1552
    %v1554 = vrot.slane %v1450, %v1553
    %v1555 = vsel %vm1057, %v1554, %v1550
    %v1556 = vlaneseq
    %v1557 = vshrl.u32 %v1556, 7
    %v1558 = vsub.s32 %v1047, %v1557
    %v1559 = vrot.slane %v1453, %v1558
    %v1560 = vlaneseq
    %v1561 = vshrl.u32 %v1560, 7
    %v1562 = vsub.s32 %v1052, %v1561
    %v1563 = vrot.slane %v1456, %v1562
    %v1564 = vsel %vm1057, %v1563, %v1559
    %v1565 = vlaneseq
    %v1566 = vshrl.u32 %v1565, 7
    %v1567 = vsub.s32 %v1047, %v1566
    %v1568 = vrot.slane %v1459, %v1567
    %v1569 = vlaneseq
    %v1570 = vshrl.u32 %v1569, 7
    %v1571 = vsub.s32 %v1052, %v1570
    %v1572 = vrot.slane %v1462, %v1571
    %v1573 = vsel %vm1057, %v1572, %v1568
    %v1574 = vlaneseq
    %v1575 = vshrl.u32 %v1574, 7
    %v1576 = vsub.s32 %v1047, %v1575
    %v1577 = vrot.slane %v1465, %v1576
    %v1578 = vlaneseq
    %v1579 = vshrl.u32 %v1578, 7
    %v1580 = vsub.s32 %v1052, %v1579
    %v1581 = vrot.slane %v1468, %v1580
    %v1582 = vsel %vm1057, %v1581, %v1577
    %v1583 = vlaneseq
    %v1584 = vshrl.u32 %v1583, 7
    %v1585 = vsub.s32 %v1047, %v1584
    %v1586 = vrot.slane %v1471, %v1585
    %v1587 = vlaneseq
    %v1588 = vshrl.u32 %v1587, 7
    %v1589 = vsub.s32 %v1052, %v1588
    %v1590 = vrot.slane %v1474, %v1589
    %v1591 = vsel %vm1057, %v1590, %v1586
    %v1592 = vlaneseq
    %v1593 = vshrl.u32 %v1592, 7
    %v1594 = vsub.s32 %v1047, %v1593
    %v1595 = vrot.slane %v1477, %v1594
    %v1596 = vlaneseq
    %v1597 = vshrl.u32 %v1596, 7
    %v1598 = vsub.s32 %v1052, %v1597
    %v1599 = vrot.slane %v1480, %v1598
    %v1600 = vsel %vm1057, %v1599, %v1595
    %v1601 = vlaneseq
    %v1602 = vshrl.u32 %v1601, 7
    %v1603 = vsub.s32 %v1047, %v1602
    %v1604 = vrot.slane %v1483, %v1603
    %v1605 = vlaneseq
    %v1606 = vshrl.u32 %v1605, 7
    %v1607 = vsub.s32 %v1052, %v1606
    %v1608 = vrot.slane %v1486, %v1607
    %v1609 = vsel %vm1057, %v1608, %v1604
    %v1610 = vlaneseq
    %v1611 = vshrl.u32 %v1610, 7
    %v1612 = vsub.s32 %v1047, %v1611
    %v1613 = vrot.slane %v1489, %v1612
    %v1614 = vlaneseq
    %v1615 = vshrl.u32 %v1614, 7
    %v1616 = vsub.s32 %v1052, %v1615
    %v1617 = vrot.slane %v1492, %v1616
    %v1618 = vsel %vm1057, %v1617, %v1613
    %v1619 = vlaneseq
    %v1620 = vshrl.u32 %v1619, 7
    %v1621 = vsub.s32 %v1047, %v1620
    %v1622 = vrot.slane %v1495, %v1621
    %v1623 = vlaneseq
    %v1624 = vshrl.u32 %v1623, 7
    %v1625 = vsub.s32 %v1052, %v1624
    %v1626 = vrot.slane %v1498, %v1625
    %v1627 = vsel %vm1057, %v1626, %v1622
    %v1628 = vlaneseq
    %v1629 = vshrl.u32 %v1628, 7
    %v1630 = vsub.s32 %v1047, %v1629
    %v1631 = vrot.slane %v1501, %v1630
    %v1632 = vlaneseq
    %v1633 = vshrl.u32 %v1632, 7
    %v1634 = vsub.s32 %v1052, %v1633
    %v1635 = vrot.slane %v1504, %v1634
    %v1636 = vsel %vm1057, %v1635, %v1631
    %v1637 = vlaneseq
    %v1638 = vshrl.u32 %v1637, 7
    %v1639 = vsub.s32 %v1047, %v1638
    %v1640 = vrot.slane %v1507, %v1639
    %v1641 = vlaneseq
    %v1642 = vshrl.u32 %v1641, 7
    %v1643 = vsub.s32 %v1052, %v1642
    %v1644 = vrot.slane %v1510, %v1643
    %v1645 = vsel %vm1057, %v1644, %v1640
    %v1646 = vlaneseq
    %v1647 = vshrl.u32 %v1646, 7
    %v1648 = vsub.s32 %v1047, %v1647
    %v1649 = vrot.slane %v1513, %v1648
    %v1650 = vlaneseq
    %v1651 = vshrl.u32 %v1650, 7
    %v1652 = vsub.s32 %v1052, %v1651
    %v1653 = vrot.slane %v1516, %v1652
    %v1654 = vsel %vm1057, %v1653, %v1649
    %v1655 = vlaneseq
    %v1656 = vshrl.u32 %v1655, 7
    %v1657 = vsub.s32 %v1047, %v1656
    %v1658 = vrot.slane %v1519, %v1657
    %v1659 = vlaneseq
    %v1660 = vshrl.u32 %v1659, 7
    %v1661 = vsub.s32 %v1052, %v1660
    %v1662 = vrot.slane %v1522, %v1661
    %v1663 = vsel %vm1057, %v1662, %v1658
    %v1664 = vlaneseq
    %v1665 = vshrl.u32 %v1664, 7
    %v1666 = vsub.s32 %v1047, %v1665
    %v1667 = vrot.slane %v1525, %v1666
    %v1668 = vlaneseq
    %v1669 = vshrl.u32 %v1668, 7
    %v1670 = vsub.s32 %v1052, %v1669
    %v1671 = vrot.slane %v1528, %v1670
    %v1672 = vsel %vm1057, %v1671, %v1667
    %v1673 = vsel %vm1194, %v1546, %v1537
    %v1674 = vsel %vm1196, %v1555, %v1673
    %v1675 = vsel %vm1198, %v1564, %v1674
    %v1676 = vsel %vm1200, %v1573, %v1675
    %v1677 = vsel %vm1202, %v1582, %v1676
    %v1678 = vsel %vm1204, %v1591, %v1677
    %v1679 = vsel %vm1206, %v1600, %v1678
    %v1680 = vsel %vm1194, %v1618, %v1609
    %v1681 = vsel %vm1196, %v1627, %v1680
    %v1682 = vsel %vm1198, %v1636, %v1681
    %v1683 = vsel %vm1200, %v1645, %v1682
    %v1684 = vsel %vm1202, %v1654, %v1683
    %v1685 = vsel %vm1204, %v1663, %v1684
    %v1686 = vsel %vm1206, %v1672, %v1685
    %v1689 = vsel %vm579, %v1679, 0.0
    %1690 = vadd.xlane.f32.xlu0 %v1689
    %v1691 = vpop.xlane.xlu0 %1690
    %v1692 = vsel %vm579, %v1686, 0.0
    %1693 = vadd.xlane.f32.xlu0 %v1692
    %v1694 = vpop.xlane.xlu0 %1693
    %v1695 = vrcp.pop %v1691
    %v1696 = vrcp.pop %v1694
    %v1699 = vlaneseq
    %v1700 = vshrl.u32 %v1699, 7
    %v1701 = vsub.s32 0, %v1700
    %v1702 = vrot.slane %v1695, %v1701
    %v1703 = vlaneseq
    %v1704 = vshrl.u32 %v1703, 7
    %v1705 = vsub.s32 1, %v1704
    %v1706 = vrot.slane %v1695, %v1705
    %v1707 = vlaneseq
    %v1708 = vshrl.u32 %v1707, 7
    %v1709 = vsub.s32 2, %v1708
    %v1710 = vrot.slane %v1695, %v1709
    %v1711 = vlaneseq
    %v1712 = vshrl.u32 %v1711, 7
    %v1713 = vsub.s32 3, %v1712
    %v1714 = vrot.slane %v1695, %v1713
    %v1715 = vlaneseq
    %v1716 = vshrl.u32 %v1715, 7
    %v1717 = vsub.s32 4, %v1716
    %v1718 = vrot.slane %v1695, %v1717
    %v1719 = vlaneseq
    %v1720 = vshrl.u32 %v1719, 7
    %v1721 = vsub.s32 5, %v1720
    %v1722 = vrot.slane %v1695, %v1721
    %v1723 = vlaneseq
    %v1724 = vshrl.u32 %v1723, 7
    %v1725 = vsub.s32 6, %v1724
    %v1726 = vrot.slane %v1695, %v1725
    %v1727 = vlaneseq
    %v1728 = vshrl.u32 %v1727, 7
    %v1729 = vsub.s32 7, %v1728
    %v1730 = vrot.slane %v1695, %v1729
    %v1731 = vlaneseq
    %v1732 = vshrl.u32 %v1731, 7
    %v1733 = vsub.s32 0, %v1732
    %v1734 = vrot.slane %v1696, %v1733
    %v1735 = vlaneseq
    %v1736 = vshrl.u32 %v1735, 7
    %v1737 = vsub.s32 1, %v1736
    %v1738 = vrot.slane %v1696, %v1737
    %v1739 = vlaneseq
    %v1740 = vshrl.u32 %v1739, 7
    %v1741 = vsub.s32 2, %v1740
    %v1742 = vrot.slane %v1696, %v1741
    %v1743 = vlaneseq
    %v1744 = vshrl.u32 %v1743, 7
    %v1745 = vsub.s32 3, %v1744
    %v1746 = vrot.slane %v1696, %v1745
    %v1747 = vlaneseq
    %v1748 = vshrl.u32 %v1747, 7
    %v1749 = vsub.s32 4, %v1748
    %v1750 = vrot.slane %v1696, %v1749
    %v1751 = vlaneseq
    %v1752 = vshrl.u32 %v1751, 7
    %v1753 = vsub.s32 5, %v1752
    %v1754 = vrot.slane %v1696, %v1753
    %v1755 = vlaneseq
    %v1756 = vshrl.u32 %v1755, 7
    %v1757 = vsub.s32 6, %v1756
    %v1758 = vrot.slane %v1696, %v1757
    %v1759 = vlaneseq
    %v1760 = vshrl.u32 %v1759, 7
    %v1761 = vsub.s32 7, %v1760
    %v1762 = vrot.slane %v1696, %v1761
    %v1779 = vmul.f32 %v1338, %v1702
    %v1780 = vmul.f32 %v1340, %v1702
    %v1781 = vmul.f32 %v1342, %v1706
    %v1782 = vmul.f32 %v1344, %v1706
    %v1783 = vmul.f32 %v1346, %v1710
    %v1784 = vmul.f32 %v1348, %v1710
    %v1785 = vmul.f32 %v1350, %v1714
    %v1786 = vmul.f32 %v1352, %v1714
    %v1787 = vmul.f32 %v1354, %v1718
    %v1788 = vmul.f32 %v1356, %v1718
    %v1789 = vmul.f32 %v1358, %v1722
    %v1790 = vmul.f32 %v1360, %v1722
    %v1791 = vmul.f32 %v1362, %v1726
    %v1792 = vmul.f32 %v1364, %v1726
    %v1793 = vmul.f32 %v1366, %v1730
    %v1794 = vmul.f32 %v1368, %v1730
    %v1795 = vmul.f32 %v1370, %v1734
    %v1796 = vmul.f32 %v1372, %v1734
    %v1797 = vmul.f32 %v1374, %v1738
    %v1798 = vmul.f32 %v1376, %v1738
    %v1799 = vmul.f32 %v1378, %v1742
    %v1800 = vmul.f32 %v1380, %v1742
    %v1801 = vmul.f32 %v1382, %v1746
    %v1802 = vmul.f32 %v1384, %v1746
    %v1803 = vmul.f32 %v1386, %v1750
    %v1804 = vmul.f32 %v1388, %v1750
    %v1805 = vmul.f32 %v1390, %v1754
    %v1806 = vmul.f32 %v1392, %v1754
    %v1807 = vmul.f32 %v1394, %v1758
    %v1808 = vmul.f32 %v1396, %v1758
    %v1809 = vmul.f32 %v1398, %v1762
    %v1810 = vmul.f32 %v1400, %v1762
    %v1811 = vpack.c.bf16 %v1780, %v1779
    %v1812 = vpack.c.bf16 %v1782, %v1781
    %v1813 = vpack.c.bf16 %v1784, %v1783
    %v1814 = vpack.c.bf16 %v1786, %v1785
    %v1815 = vpack.c.bf16 %v1788, %v1787
    %v1816 = vpack.c.bf16 %v1790, %v1789
    %v1817 = vpack.c.bf16 %v1792, %v1791
    %v1818 = vpack.c.bf16 %v1794, %v1793
    %v1819 = vpack.c.bf16 %v1796, %v1795
    %v1820 = vpack.c.bf16 %v1798, %v1797
    %v1821 = vpack.c.bf16 %v1800, %v1799
    %v1822 = vpack.c.bf16 %v1802, %v1801
    %v1823 = vpack.c.bf16 %v1804, %v1803
    %v1824 = vpack.c.bf16 %v1806, %v1805
    %v1825 = vpack.c.bf16 %v1808, %v1807
    %v1826 = vpack.c.bf16 %v1810, %v1809
    %v1827 = vpack.c.bf16 %v182, %v179
    %v1844 = vunpack.c.l.b16 %v1811
    %v1845 = vunpack.c.h.b16 %v1811
    %v1846 = vunpack.c.l.b16 %v1812
    %v1847 = vunpack.c.h.b16 %v1812
    %v1848 = vunpack.c.l.b16 %v1813
    %v1849 = vunpack.c.h.b16 %v1813
    %v1850 = vunpack.c.l.b16 %v1814
    %v1851 = vunpack.c.h.b16 %v1814
    %v1852 = vunpack.c.l.b16 %v1815
    %v1853 = vunpack.c.h.b16 %v1815
    %v1854 = vunpack.c.l.b16 %v1816
    %v1855 = vunpack.c.h.b16 %v1816
    %v1856 = vunpack.c.l.b16 %v1817
    %v1857 = vunpack.c.h.b16 %v1817
    %v1858 = vunpack.c.l.b16 %v1818
    %v1859 = vunpack.c.h.b16 %v1818
    %v1860 = vunpack.c.l.b16 %v1819
    %v1861 = vunpack.c.h.b16 %v1819
    %v1862 = vunpack.c.l.b16 %v1820
    %v1863 = vunpack.c.h.b16 %v1820
    %v1864 = vunpack.c.l.b16 %v1821
    %v1865 = vunpack.c.h.b16 %v1821
    %v1866 = vunpack.c.l.b16 %v1822
    %v1867 = vunpack.c.h.b16 %v1822
    %v1868 = vunpack.c.l.b16 %v1823
    %v1869 = vunpack.c.h.b16 %v1823
    %v1870 = vunpack.c.l.b16 %v1824
    %v1871 = vunpack.c.h.b16 %v1824
    %v1872 = vunpack.c.l.b16 %v1825
    %v1873 = vunpack.c.h.b16 %v1825
    %v1874 = vunpack.c.l.b16 %v1826
    %v1875 = vunpack.c.h.b16 %v1826
    %1876 = vset.pattern.permute.xlu0 0
    %1877 = vperm.xlu0 %1876, %v1844
    %v1878 = vpop.permute.xlu0 %1877
    %1879 = vset.pattern.permute.xlu0 0
    %1880 = vperm.xlu0 %1879, %v1845
    %v1881 = vpop.permute.xlu0 %1880
    %1882 = vset.pattern.permute.xlu0 0
    %1883 = vperm.xlu0 %1882, %v1846
    %v1884 = vpop.permute.xlu0 %1883
    %1885 = vset.pattern.permute.xlu0 0
    %1886 = vperm.xlu0 %1885, %v1847
    %v1887 = vpop.permute.xlu0 %1886
    %1888 = vset.pattern.permute.xlu0 0
    %1889 = vperm.xlu0 %1888, %v1848
    %v1890 = vpop.permute.xlu0 %1889
    %1891 = vset.pattern.permute.xlu0 0
    %1892 = vperm.xlu0 %1891, %v1849
    %v1893 = vpop.permute.xlu0 %1892
    %1894 = vset.pattern.permute.xlu0 0
    %1895 = vperm.xlu0 %1894, %v1850
    %v1896 = vpop.permute.xlu0 %1895
    %1897 = vset.pattern.permute.xlu0 0
    %1898 = vperm.xlu0 %1897, %v1851
    %v1899 = vpop.permute.xlu0 %1898
    %1900 = vset.pattern.permute.xlu0 0
    %1901 = vperm.xlu0 %1900, %v1852
    %v1902 = vpop.permute.xlu0 %1901
    %1903 = vset.pattern.permute.xlu0 0
    %1904 = vperm.xlu0 %1903, %v1853
    %v1905 = vpop.permute.xlu0 %1904
    %1906 = vset.pattern.permute.xlu0 0
    %1907 = vperm.xlu0 %1906, %v1854
    %v1908 = vpop.permute.xlu0 %1907
    %1909 = vset.pattern.permute.xlu0 0
    %1910 = vperm.xlu0 %1909, %v1855
    %v1911 = vpop.permute.xlu0 %1910
    %1912 = vset.pattern.permute.xlu0 0
    %1913 = vperm.xlu0 %1912, %v1856
    %v1914 = vpop.permute.xlu0 %1913
    %1915 = vset.pattern.permute.xlu0 0
    %1916 = vperm.xlu0 %1915, %v1857
    %v1917 = vpop.permute.xlu0 %1916
    %1918 = vset.pattern.permute.xlu0 0
    %1919 = vperm.xlu0 %1918, %v1858
    %v1920 = vpop.permute.xlu0 %1919
    %1921 = vset.pattern.permute.xlu0 0
    %1922 = vperm.xlu0 %1921, %v1859
    %v1923 = vpop.permute.xlu0 %1922
    %1924 = vset.pattern.permute.xlu0 0
    %1925 = vperm.xlu0 %1924, %v1860
    %v1926 = vpop.permute.xlu0 %1925
    %1927 = vset.pattern.permute.xlu0 0
    %1928 = vperm.xlu0 %1927, %v1861
    %v1929 = vpop.permute.xlu0 %1928
    %1930 = vset.pattern.permute.xlu0 0
    %1931 = vperm.xlu0 %1930, %v1862
    %v1932 = vpop.permute.xlu0 %1931
    %1933 = vset.pattern.permute.xlu0 0
    %1934 = vperm.xlu0 %1933, %v1863
    %v1935 = vpop.permute.xlu0 %1934
    %1936 = vset.pattern.permute.xlu0 0
    %1937 = vperm.xlu0 %1936, %v1864
    %v1938 = vpop.permute.xlu0 %1937
    %1939 = vset.pattern.permute.xlu0 0
    %1940 = vperm.xlu0 %1939, %v1865
    %v1941 = vpop.permute.xlu0 %1940
    %1942 = vset.pattern.permute.xlu0 0
    %1943 = vperm.xlu0 %1942, %v1866
    %v1944 = vpop.permute.xlu0 %1943
    %1945 = vset.pattern.permute.xlu0 0
    %1946 = vperm.xlu0 %1945, %v1867
    %v1947 = vpop.permute.xlu0 %1946
    %1948 = vset.pattern.permute.xlu0 0
    %1949 = vperm.xlu0 %1948, %v1868
    %v1950 = vpop.permute.xlu0 %1949
    %1951 = vset.pattern.permute.xlu0 0
    %1952 = vperm.xlu0 %1951, %v1869
    %v1953 = vpop.permute.xlu0 %1952
    %1954 = vset.pattern.permute.xlu0 0
    %1955 = vperm.xlu0 %1954, %v1870
    %v1956 = vpop.permute.xlu0 %1955
    %1957 = vset.pattern.permute.xlu0 0
    %1958 = vperm.xlu0 %1957, %v1871
    %v1959 = vpop.permute.xlu0 %1958
    %1960 = vset.pattern.permute.xlu0 0
    %1961 = vperm.xlu0 %1960, %v1872
    %v1962 = vpop.permute.xlu0 %1961
    %1963 = vset.pattern.permute.xlu0 0
    %1964 = vperm.xlu0 %1963, %v1873
    %v1965 = vpop.permute.xlu0 %1964
    %1966 = vset.pattern.permute.xlu0 0
    %1967 = vperm.xlu0 %1966, %v1874
    %v1968 = vpop.permute.xlu0 %1967
    %1969 = vset.pattern.permute.xlu0 0
    %1970 = vperm.xlu0 %1969, %v1875
    %v1971 = vpop.permute.xlu0 %1970
    %v1972 = vlaneseq
    %v1973 = vshrl.u32 %v1972, 7
    %v1974 = vsub.s32 %v1047, %v1973
    %v1975 = vrot.slane %v1878, %v1974
    %v1976 = vlaneseq
    %v1977 = vshrl.u32 %v1976, 7
    %v1978 = vsub.s32 %v1052, %v1977
    %v1979 = vrot.slane %v1881, %v1978
    %v1980 = vsel %vm1057, %v1979, %v1975
    %v1981 = vlaneseq
    %v1982 = vshrl.u32 %v1981, 7
    %v1983 = vsub.s32 %v1047, %v1982
    %v1984 = vrot.slane %v1884, %v1983
    %v1985 = vlaneseq
    %v1986 = vshrl.u32 %v1985, 7
    %v1987 = vsub.s32 %v1052, %v1986
    %v1988 = vrot.slane %v1887, %v1987
    %v1989 = vsel %vm1057, %v1988, %v1984
    %v1990 = vlaneseq
    %v1991 = vshrl.u32 %v1990, 7
    %v1992 = vsub.s32 %v1047, %v1991
    %v1993 = vrot.slane %v1890, %v1992
    %v1994 = vlaneseq
    %v1995 = vshrl.u32 %v1994, 7
    %v1996 = vsub.s32 %v1052, %v1995
    %v1997 = vrot.slane %v1893, %v1996
    %v1998 = vsel %vm1057, %v1997, %v1993
    %v1999 = vlaneseq
    %v2000 = vshrl.u32 %v1999, 7
    %v2001 = vsub.s32 %v1047, %v2000
    %v2002 = vrot.slane %v1896, %v2001
    %v2003 = vlaneseq
    %v2004 = vshrl.u32 %v2003, 7
    %v2005 = vsub.s32 %v1052, %v2004
    %v2006 = vrot.slane %v1899, %v2005
    %v2007 = vsel %vm1057, %v2006, %v2002
    %v2008 = vlaneseq
    %v2009 = vshrl.u32 %v2008, 7
    %v2010 = vsub.s32 %v1047, %v2009
    %v2011 = vrot.slane %v1902, %v2010
    %v2012 = vlaneseq
    %v2013 = vshrl.u32 %v2012, 7
    %v2014 = vsub.s32 %v1052, %v2013
    %v2015 = vrot.slane %v1905, %v2014
    %v2016 = vsel %vm1057, %v2015, %v2011
    %v2017 = vlaneseq
    %v2018 = vshrl.u32 %v2017, 7
    %v2019 = vsub.s32 %v1047, %v2018
    %v2020 = vrot.slane %v1908, %v2019
    %v2021 = vlaneseq
    %v2022 = vshrl.u32 %v2021, 7
    %v2023 = vsub.s32 %v1052, %v2022
    %v2024 = vrot.slane %v1911, %v2023
    %v2025 = vsel %vm1057, %v2024, %v2020
    %v2026 = vlaneseq
    %v2027 = vshrl.u32 %v2026, 7
    %v2028 = vsub.s32 %v1047, %v2027
    %v2029 = vrot.slane %v1914, %v2028
    %v2030 = vlaneseq
    %v2031 = vshrl.u32 %v2030, 7
    %v2032 = vsub.s32 %v1052, %v2031
    %v2033 = vrot.slane %v1917, %v2032
    %v2034 = vsel %vm1057, %v2033, %v2029
    %v2035 = vlaneseq
    %v2036 = vshrl.u32 %v2035, 7
    %v2037 = vsub.s32 %v1047, %v2036
    %v2038 = vrot.slane %v1920, %v2037
    %v2039 = vlaneseq
    %v2040 = vshrl.u32 %v2039, 7
    %v2041 = vsub.s32 %v1052, %v2040
    %v2042 = vrot.slane %v1923, %v2041
    %v2043 = vsel %vm1057, %v2042, %v2038
    %v2044 = vlaneseq
    %v2045 = vshrl.u32 %v2044, 7
    %v2046 = vsub.s32 %v1047, %v2045
    %v2047 = vrot.slane %v1926, %v2046
    %v2048 = vlaneseq
    %v2049 = vshrl.u32 %v2048, 7
    %v2050 = vsub.s32 %v1052, %v2049
    %v2051 = vrot.slane %v1929, %v2050
    %v2052 = vsel %vm1057, %v2051, %v2047
    %v2053 = vlaneseq
    %v2054 = vshrl.u32 %v2053, 7
    %v2055 = vsub.s32 %v1047, %v2054
    %v2056 = vrot.slane %v1932, %v2055
    %v2057 = vlaneseq
    %v2058 = vshrl.u32 %v2057, 7
    %v2059 = vsub.s32 %v1052, %v2058
    %v2060 = vrot.slane %v1935, %v2059
    %v2061 = vsel %vm1057, %v2060, %v2056
    %v2062 = vlaneseq
    %v2063 = vshrl.u32 %v2062, 7
    %v2064 = vsub.s32 %v1047, %v2063
    %v2065 = vrot.slane %v1938, %v2064
    %v2066 = vlaneseq
    %v2067 = vshrl.u32 %v2066, 7
    %v2068 = vsub.s32 %v1052, %v2067
    %v2069 = vrot.slane %v1941, %v2068
    %v2070 = vsel %vm1057, %v2069, %v2065
    %v2071 = vlaneseq
    %v2072 = vshrl.u32 %v2071, 7
    %v2073 = vsub.s32 %v1047, %v2072
    %v2074 = vrot.slane %v1944, %v2073
    %v2075 = vlaneseq
    %v2076 = vshrl.u32 %v2075, 7
    %v2077 = vsub.s32 %v1052, %v2076
    %v2078 = vrot.slane %v1947, %v2077
    %v2079 = vsel %vm1057, %v2078, %v2074
    %v2080 = vlaneseq
    %v2081 = vshrl.u32 %v2080, 7
    %v2082 = vsub.s32 %v1047, %v2081
    %v2083 = vrot.slane %v1950, %v2082
    %v2084 = vlaneseq
    %v2085 = vshrl.u32 %v2084, 7
    %v2086 = vsub.s32 %v1052, %v2085
    %v2087 = vrot.slane %v1953, %v2086
    %v2088 = vsel %vm1057, %v2087, %v2083
    %v2089 = vlaneseq
    %v2090 = vshrl.u32 %v2089, 7
    %v2091 = vsub.s32 %v1047, %v2090
    %v2092 = vrot.slane %v1956, %v2091
    %v2093 = vlaneseq
    %v2094 = vshrl.u32 %v2093, 7
    %v2095 = vsub.s32 %v1052, %v2094
    %v2096 = vrot.slane %v1959, %v2095
    %v2097 = vsel %vm1057, %v2096, %v2092
    %v2098 = vlaneseq
    %v2099 = vshrl.u32 %v2098, 7
    %v2100 = vsub.s32 %v1047, %v2099
    %v2101 = vrot.slane %v1962, %v2100
    %v2102 = vlaneseq
    %v2103 = vshrl.u32 %v2102, 7
    %v2104 = vsub.s32 %v1052, %v2103
    %v2105 = vrot.slane %v1965, %v2104
    %v2106 = vsel %vm1057, %v2105, %v2101
    %v2107 = vlaneseq
    %v2108 = vshrl.u32 %v2107, 7
    %v2109 = vsub.s32 %v1047, %v2108
    %v2110 = vrot.slane %v1968, %v2109
    %v2111 = vlaneseq
    %v2112 = vshrl.u32 %v2111, 7
    %v2113 = vsub.s32 %v1052, %v2112
    %v2114 = vrot.slane %v1971, %v2113
    %v2115 = vsel %vm1057, %v2114, %v2110
    %v2116 = vsel %vm1194, %v1989, %v1980
    %v2117 = vsel %vm1196, %v1998, %v2116
    %v2118 = vsel %vm1198, %v2007, %v2117
    %v2119 = vsel %vm1200, %v2016, %v2118
    %v2120 = vsel %vm1202, %v2025, %v2119
    %v2121 = vsel %vm1204, %v2034, %v2120
    %v2122 = vsel %vm1206, %v2043, %v2121
    %v2123 = vsel %vm1194, %v2061, %v2052
    %v2124 = vsel %vm1196, %v2070, %v2123
    %v2125 = vsel %vm1198, %v2079, %v2124
    %v2126 = vsel %vm1200, %v2088, %v2125
    %v2127 = vsel %vm1202, %v2097, %v2126
    %v2128 = vsel %vm1204, %v2106, %v2127
    %v2129 = vsel %vm1206, %v2115, %v2128
    %v2130 = vpack.c.b16 %v2129, %v2122
    %v2132 = vsel %vm579, %v2130, 0
    %2134 = vmatprep.subr.bf16.mxu0 0
    %2135 = vmatpush1.bf16.msra.mxu0 0
    %2136 = vmatprep.subr.bf16.mxu0 0
    %2137 = vmatpush1.bf16.msra.mxu0 0
    %2138 = vmatprep.subr.bf16.mxu0 0
    %2139 = vmatpush1.bf16.msra.mxu0 0
    %2140 = vmatprep.subr.bf16.mxu0 0
    %2141 = vmatpush1.bf16.msra.mxu0 0
    %2142 = vmatprep.subr.bf16.mxu0 0
    %2143 = vmatpush1.bf16.msra.mxu0 0
    %2144 = vmatprep.subr.bf16.mxu0 0
    %2145 = vmatpush1.bf16.msra.mxu0 0
    %2146 = vmatprep.subr.bf16.mxu0 0
    %2147 = vmatpush1.bf16.msra.mxu0 0
    %2148 = vmatprep.subr.bf16.mxu0 0
    %2149 = vmatpush1.bf16.msra.mxu0 %v1827
    %2150 = vmatprep.subr.bf16.mxu0 0
    %2151 = vmatpush2.bf16.msra.mxu0 0
    %2152 = vmatprep.subr.bf16.mxu0 0
    %2153 = vmatpush2.bf16.msra.mxu0 0
    %2154 = vmatprep.subr.bf16.mxu0 0
    %2155 = vmatpush2.bf16.msra.mxu0 0
    %2156 = vmatprep.subr.bf16.mxu0 0
    %2157 = vmatpush2.bf16.msra.mxu0 0
    %2158 = vmatprep.subr.bf16.mxu0 0
    %2159 = vmatpush2.bf16.msra.mxu0 0
    %2160 = vmatprep.subr.bf16.mxu0 0
    %2161 = vmatpush2.bf16.msra.mxu0 0
    %2162 = vmatprep.subr.bf16.mxu0 0
    %2163 = vmatpush2.bf16.msra.mxu0 0
    %2164 = vmatprep.subr.bf16.mxu0 0
    %2165 = vmatpush2.bf16.msra.mxu0 0
    %2166 = vmatprep.mubr.bf16.mxu0 0
    %2167 = vmatmul.mubr.bf16.gmra.mxu0 %v2132
    %v2168 = vpop.f32.mrf.mxu0
    %v2169 = vadd.f32 0.0, %v2168
    %v2170 = vpop.f32.mrf.mxu0
    %v2171 = vpop.f32.mrf.mxu0
    %v2172 = vadd.f32 0.0, %v2171
    %v2173 = vpop.f32.mrf.mxu0
    %2174 = vdwg.mxu0
    %v2175 = vlaneseq
    %v2176 = vshrl.u32 %v2175, 7
    %v2177 = vsub.s32 1, %v2176
    %v2178 = vrot.slane %v127, %v2177
    %2180 = vrot.lane.b32.xlu0 %v2178, 16
    %v2181 = vpop.permute.xlu0 %2180
    %v2183 = vmul.f32 %v511, %v2181
    %v2184 = vmul.f32 %v512, %v2181
    %v2185 = vmul.f32 %v513, %v2181
    %v2186 = vmul.f32 %v514, %v2181
    %v2187 = vmul.f32 %v515, %v2181
    %v2188 = vmul.f32 %v516, %v2181
    %v2189 = vmul.f32 %v517, %v2181
    %v2190 = vmul.f32 %v518, %v2181
    %v2191 = vmul.f32 %v519, %v2181
    %v2192 = vmul.f32 %v520, %v2181
    %v2193 = vmul.f32 %v521, %v2181
    %v2194 = vmul.f32 %v522, %v2181
    %v2195 = vmul.f32 %v523, %v2181
    %v2196 = vmul.f32 %v524, %v2181
    %v2197 = vmul.f32 %v525, %v2181
    %v2198 = vmul.f32 %v526, %v2181
    %v2199 = vmul.f32 %v527, %v2181
    %v2200 = vmul.f32 %v528, %v2181
    %v2201 = vmul.f32 %v529, %v2181
    %v2202 = vmul.f32 %v530, %v2181
    %v2203 = vmul.f32 %v531, %v2181
    %v2204 = vmul.f32 %v532, %v2181
    %v2205 = vmul.f32 %v533, %v2181
    %v2206 = vmul.f32 %v534, %v2181
    %v2207 = vmul.f32 %v535, %v2181
    %v2208 = vmul.f32 %v536, %v2181
    %v2209 = vmul.f32 %v537, %v2181
    %v2210 = vmul.f32 %v538, %v2181
    %v2211 = vmul.f32 %v539, %v2181
    %v2212 = vmul.f32 %v540, %v2181
    %v2213 = vmul.f32 %v541, %v2181
    %v2214 = vmul.f32 %v542, %v2181
    %2247 = vrot.lane.b32.xlu0 %v2183, 112
    %v2248 = vpop.permute.xlu0 %2247
    %2249 = vrot.lane.b32.xlu0 %v2184, 112
    %v2250 = vpop.permute.xlu0 %2249
    %2251 = vrot.lane.b32.xlu0 %v2185, 112
    %v2252 = vpop.permute.xlu0 %2251
    %2253 = vrot.lane.b32.xlu0 %v2186, 112
    %v2254 = vpop.permute.xlu0 %2253
    %2255 = vrot.lane.b32.xlu0 %v2187, 112
    %v2256 = vpop.permute.xlu0 %2255
    %2257 = vrot.lane.b32.xlu0 %v2188, 112
    %v2258 = vpop.permute.xlu0 %2257
    %2259 = vrot.lane.b32.xlu0 %v2189, 112
    %v2260 = vpop.permute.xlu0 %2259
    %2261 = vrot.lane.b32.xlu0 %v2190, 112
    %v2262 = vpop.permute.xlu0 %2261
    %2263 = vrot.lane.b32.xlu0 %v2191, 112
    %v2264 = vpop.permute.xlu0 %2263
    %2265 = vrot.lane.b32.xlu0 %v2192, 112
    %v2266 = vpop.permute.xlu0 %2265
    %2267 = vrot.lane.b32.xlu0 %v2193, 112
    %v2268 = vpop.permute.xlu0 %2267
    %2269 = vrot.lane.b32.xlu0 %v2194, 112
    %v2270 = vpop.permute.xlu0 %2269
    %2271 = vrot.lane.b32.xlu0 %v2195, 112
    %v2272 = vpop.permute.xlu0 %2271
    %2273 = vrot.lane.b32.xlu0 %v2196, 112
    %v2274 = vpop.permute.xlu0 %2273
    %2275 = vrot.lane.b32.xlu0 %v2197, 112
    %v2276 = vpop.permute.xlu0 %2275
    %2277 = vrot.lane.b32.xlu0 %v2198, 112
    %v2278 = vpop.permute.xlu0 %2277
    %2279 = vrot.lane.b32.xlu0 %v2199, 112
    %v2280 = vpop.permute.xlu0 %2279
    %2281 = vrot.lane.b32.xlu0 %v2200, 112
    %v2282 = vpop.permute.xlu0 %2281
    %2283 = vrot.lane.b32.xlu0 %v2201, 112
    %v2284 = vpop.permute.xlu0 %2283
    %2285 = vrot.lane.b32.xlu0 %v2202, 112
    %v2286 = vpop.permute.xlu0 %2285
    %2287 = vrot.lane.b32.xlu0 %v2203, 112
    %v2288 = vpop.permute.xlu0 %2287
    %2289 = vrot.lane.b32.xlu0 %v2204, 112
    %v2290 = vpop.permute.xlu0 %2289
    %2291 = vrot.lane.b32.xlu0 %v2205, 112
    %v2292 = vpop.permute.xlu0 %2291
    %2293 = vrot.lane.b32.xlu0 %v2206, 112
    %v2294 = vpop.permute.xlu0 %2293
    %2295 = vrot.lane.b32.xlu0 %v2207, 112
    %v2296 = vpop.permute.xlu0 %2295
    %2297 = vrot.lane.b32.xlu0 %v2208, 112
    %v2298 = vpop.permute.xlu0 %2297
    %2299 = vrot.lane.b32.xlu0 %v2209, 112
    %v2300 = vpop.permute.xlu0 %2299
    %2301 = vrot.lane.b32.xlu0 %v2210, 112
    %v2302 = vpop.permute.xlu0 %2301
    %2303 = vrot.lane.b32.xlu0 %v2211, 112
    %v2304 = vpop.permute.xlu0 %2303
    %2305 = vrot.lane.b32.xlu0 %v2212, 112
    %v2306 = vpop.permute.xlu0 %2305
    %2307 = vrot.lane.b32.xlu0 %v2213, 112
    %v2308 = vpop.permute.xlu0 %2307
    %2309 = vrot.lane.b32.xlu0 %v2214, 112
    %v2310 = vpop.permute.xlu0 %2309
    %v2343 = vsel %vm579, %v2248, 0.0
    %2344 = vadd.xlane.f32.xlu0 %v2343
    %v2345 = vpop.xlane.xlu0 %2344
    %v2346 = vsel %vm579, %v2250, 0.0
    %2347 = vadd.xlane.f32.xlu0 %v2346
    %v2348 = vpop.xlane.xlu0 %2347
    %v2349 = vsel %vm579, %v2252, 0.0
    %2350 = vadd.xlane.f32.xlu0 %v2349
    %v2351 = vpop.xlane.xlu0 %2350
    %v2352 = vsel %vm579, %v2254, 0.0
    %2353 = vadd.xlane.f32.xlu0 %v2352
    %v2354 = vpop.xlane.xlu0 %2353
    %v2355 = vsel %vm579, %v2256, 0.0
    %2356 = vadd.xlane.f32.xlu0 %v2355
    %v2357 = vpop.xlane.xlu0 %2356
    %v2358 = vsel %vm579, %v2258, 0.0
    %2359 = vadd.xlane.f32.xlu0 %v2358
    %v2360 = vpop.xlane.xlu0 %2359
    %v2361 = vsel %vm579, %v2260, 0.0
    %2362 = vadd.xlane.f32.xlu0 %v2361
    %v2363 = vpop.xlane.xlu0 %2362
    %v2364 = vsel %vm579, %v2262, 0.0
    %2365 = vadd.xlane.f32.xlu0 %v2364
    %v2366 = vpop.xlane.xlu0 %2365
    %v2367 = vsel %vm579, %v2264, 0.0
    %2368 = vadd.xlane.f32.xlu0 %v2367
    %v2369 = vpop.xlane.xlu0 %2368
    %v2370 = vsel %vm579, %v2266, 0.0
    %2371 = vadd.xlane.f32.xlu0 %v2370
    %v2372 = vpop.xlane.xlu0 %2371
    %v2373 = vsel %vm579, %v2268, 0.0
    %2374 = vadd.xlane.f32.xlu0 %v2373
    %v2375 = vpop.xlane.xlu0 %2374
    %v2376 = vsel %vm579, %v2270, 0.0
    %2377 = vadd.xlane.f32.xlu0 %v2376
    %v2378 = vpop.xlane.xlu0 %2377
    %v2379 = vsel %vm579, %v2272, 0.0
    %2380 = vadd.xlane.f32.xlu0 %v2379
    %v2381 = vpop.xlane.xlu0 %2380
    %v2382 = vsel %vm579, %v2274, 0.0
    %2383 = vadd.xlane.f32.xlu0 %v2382
    %v2384 = vpop.xlane.xlu0 %2383
    %v2385 = vsel %vm579, %v2276, 0.0
    %2386 = vadd.xlane.f32.xlu0 %v2385
    %v2387 = vpop.xlane.xlu0 %2386
    %v2388 = vsel %vm579, %v2278, 0.0
    %2389 = vadd.xlane.f32.xlu0 %v2388
    %v2390 = vpop.xlane.xlu0 %2389
    %v2391 = vsel %vm579, %v2280, 0.0
    %2392 = vadd.xlane.f32.xlu0 %v2391
    %v2393 = vpop.xlane.xlu0 %2392
    %v2394 = vsel %vm579, %v2282, 0.0
    %2395 = vadd.xlane.f32.xlu0 %v2394
    %v2396 = vpop.xlane.xlu0 %2395
    %v2397 = vsel %vm579, %v2284, 0.0
    %2398 = vadd.xlane.f32.xlu0 %v2397
    %v2399 = vpop.xlane.xlu0 %2398
    %v2400 = vsel %vm579, %v2286, 0.0
    %2401 = vadd.xlane.f32.xlu0 %v2400
    %v2402 = vpop.xlane.xlu0 %2401
    %v2403 = vsel %vm579, %v2288, 0.0
    %2404 = vadd.xlane.f32.xlu0 %v2403
    %v2405 = vpop.xlane.xlu0 %2404
    %v2406 = vsel %vm579, %v2290, 0.0
    %2407 = vadd.xlane.f32.xlu0 %v2406
    %v2408 = vpop.xlane.xlu0 %2407
    %v2409 = vsel %vm579, %v2292, 0.0
    %2410 = vadd.xlane.f32.xlu0 %v2409
    %v2411 = vpop.xlane.xlu0 %2410
    %v2412 = vsel %vm579, %v2294, 0.0
    %2413 = vadd.xlane.f32.xlu0 %v2412
    %v2414 = vpop.xlane.xlu0 %2413
    %v2415 = vsel %vm579, %v2296, 0.0
    %2416 = vadd.xlane.f32.xlu0 %v2415
    %v2417 = vpop.xlane.xlu0 %2416
    %v2418 = vsel %vm579, %v2298, 0.0
    %2419 = vadd.xlane.f32.xlu0 %v2418
    %v2420 = vpop.xlane.xlu0 %2419
    %v2421 = vsel %vm579, %v2300, 0.0
    %2422 = vadd.xlane.f32.xlu0 %v2421
    %v2423 = vpop.xlane.xlu0 %2422
    %v2424 = vsel %vm579, %v2302, 0.0
    %2425 = vadd.xlane.f32.xlu0 %v2424
    %v2426 = vpop.xlane.xlu0 %2425
    %v2427 = vsel %vm579, %v2304, 0.0
    %2428 = vadd.xlane.f32.xlu0 %v2427
    %v2429 = vpop.xlane.xlu0 %2428
    %v2430 = vsel %vm579, %v2306, 0.0
    %2431 = vadd.xlane.f32.xlu0 %v2430
    %v2432 = vpop.xlane.xlu0 %2431
    %v2433 = vsel %vm579, %v2308, 0.0
    %2434 = vadd.xlane.f32.xlu0 %v2433
    %v2435 = vpop.xlane.xlu0 %2434
    %v2436 = vsel %vm579, %v2310, 0.0
    %2437 = vadd.xlane.f32.xlu0 %v2436
    %v2438 = vpop.xlane.xlu0 %2437
    %v2439 = vadd.f32 %v2345, %v684
    %v2440 = vadd.f32 %v2348, %v688
    %v2441 = vadd.f32 %v2351, %v695
    %v2442 = vadd.f32 %v2354, %v699
    %v2443 = vadd.f32 %v2357, %v706
    %v2444 = vadd.f32 %v2360, %v710
    %v2445 = vadd.f32 %v2363, %v717
    %v2446 = vadd.f32 %v2366, %v721
    %v2447 = vadd.f32 %v2369, %v728
    %v2448 = vadd.f32 %v2372, %v732
    %v2449 = vadd.f32 %v2375, %v739
    %v2450 = vadd.f32 %v2378, %v743
    %v2451 = vadd.f32 %v2381, %v750
    %v2452 = vadd.f32 %v2384, %v754
    %v2453 = vadd.f32 %v2387, %v761
    %v2454 = vadd.f32 %v2390, %v765
    %v2455 = vadd.f32 %v2393, %v772
    %v2456 = vadd.f32 %v2396, %v776
    %v2457 = vadd.f32 %v2399, %v783
    %v2458 = vadd.f32 %v2402, %v787
    %v2459 = vadd.f32 %v2405, %v794
    %v2460 = vadd.f32 %v2408, %v798
    %v2461 = vadd.f32 %v2411, %v805
    %v2462 = vadd.f32 %v2414, %v809
    %v2463 = vadd.f32 %v2417, %v816
    %v2464 = vadd.f32 %v2420, %v820
    %v2465 = vadd.f32 %v2423, %v827
    %v2466 = vadd.f32 %v2426, %v831
    %v2467 = vadd.f32 %v2429, %v838
    %v2468 = vadd.f32 %v2432, %v842
    %v2469 = vadd.f32 %v2435, %v849
    %v2470 = vadd.f32 %v2438, %v853
    %2503 = vset.pattern.permute.xlu0 0
    %2504 = vperm.xlu0 %2503, %v2439
    %v2505 = vpop.permute.xlu0 %2504
    %2506 = vset.pattern.permute.xlu0 0
    %2507 = vperm.xlu0 %2506, %v2440
    %v2508 = vpop.permute.xlu0 %2507
    %2509 = vset.pattern.permute.xlu0 0
    %2510 = vperm.xlu0 %2509, %v2441
    %v2511 = vpop.permute.xlu0 %2510
    %2512 = vset.pattern.permute.xlu0 0
    %2513 = vperm.xlu0 %2512, %v2442
    %v2514 = vpop.permute.xlu0 %2513
    %2515 = vset.pattern.permute.xlu0 0
    %2516 = vperm.xlu0 %2515, %v2443
    %v2517 = vpop.permute.xlu0 %2516
    %2518 = vset.pattern.permute.xlu0 0
    %2519 = vperm.xlu0 %2518, %v2444
    %v2520 = vpop.permute.xlu0 %2519
    %2521 = vset.pattern.permute.xlu0 0
    %2522 = vperm.xlu0 %2521, %v2445
    %v2523 = vpop.permute.xlu0 %2522
    %2524 = vset.pattern.permute.xlu0 0
    %2525 = vperm.xlu0 %2524, %v2446
    %v2526 = vpop.permute.xlu0 %2525
    %2527 = vset.pattern.permute.xlu0 0
    %2528 = vperm.xlu0 %2527, %v2447
    %v2529 = vpop.permute.xlu0 %2528
    %2530 = vset.pattern.permute.xlu0 0
    %2531 = vperm.xlu0 %2530, %v2448
    %v2532 = vpop.permute.xlu0 %2531
    %2533 = vset.pattern.permute.xlu0 0
    %2534 = vperm.xlu0 %2533, %v2449
    %v2535 = vpop.permute.xlu0 %2534
    %2536 = vset.pattern.permute.xlu0 0
    %2537 = vperm.xlu0 %2536, %v2450
    %v2538 = vpop.permute.xlu0 %2537
    %2539 = vset.pattern.permute.xlu0 0
    %2540 = vperm.xlu0 %2539, %v2451
    %v2541 = vpop.permute.xlu0 %2540
    %2542 = vset.pattern.permute.xlu0 0
    %2543 = vperm.xlu0 %2542, %v2452
    %v2544 = vpop.permute.xlu0 %2543
    %2545 = vset.pattern.permute.xlu0 0
    %2546 = vperm.xlu0 %2545, %v2453
    %v2547 = vpop.permute.xlu0 %2546
    %2548 = vset.pattern.permute.xlu0 0
    %2549 = vperm.xlu0 %2548, %v2454
    %v2550 = vpop.permute.xlu0 %2549
    %2551 = vset.pattern.permute.xlu0 0
    %2552 = vperm.xlu0 %2551, %v2455
    %v2553 = vpop.permute.xlu0 %2552
    %2554 = vset.pattern.permute.xlu0 0
    %2555 = vperm.xlu0 %2554, %v2456
    %v2556 = vpop.permute.xlu0 %2555
    %2557 = vset.pattern.permute.xlu0 0
    %2558 = vperm.xlu0 %2557, %v2457
    %v2559 = vpop.permute.xlu0 %2558
    %2560 = vset.pattern.permute.xlu0 0
    %2561 = vperm.xlu0 %2560, %v2458
    %v2562 = vpop.permute.xlu0 %2561
    %2563 = vset.pattern.permute.xlu0 0
    %2564 = vperm.xlu0 %2563, %v2459
    %v2565 = vpop.permute.xlu0 %2564
    %2566 = vset.pattern.permute.xlu0 0
    %2567 = vperm.xlu0 %2566, %v2460
    %v2568 = vpop.permute.xlu0 %2567
    %2569 = vset.pattern.permute.xlu0 0
    %2570 = vperm.xlu0 %2569, %v2461
    %v2571 = vpop.permute.xlu0 %2570
    %2572 = vset.pattern.permute.xlu0 0
    %2573 = vperm.xlu0 %2572, %v2462
    %v2574 = vpop.permute.xlu0 %2573
    %2575 = vset.pattern.permute.xlu0 0
    %2576 = vperm.xlu0 %2575, %v2463
    %v2577 = vpop.permute.xlu0 %2576
    %2578 = vset.pattern.permute.xlu0 0
    %2579 = vperm.xlu0 %2578, %v2464
    %v2580 = vpop.permute.xlu0 %2579
    %2581 = vset.pattern.permute.xlu0 0
    %2582 = vperm.xlu0 %2581, %v2465
    %v2583 = vpop.permute.xlu0 %2582
    %2584 = vset.pattern.permute.xlu0 0
    %2585 = vperm.xlu0 %2584, %v2466
    %v2586 = vpop.permute.xlu0 %2585
    %2587 = vset.pattern.permute.xlu0 0
    %2588 = vperm.xlu0 %2587, %v2467
    %v2589 = vpop.permute.xlu0 %2588
    %2590 = vset.pattern.permute.xlu0 0
    %2591 = vperm.xlu0 %2590, %v2468
    %v2592 = vpop.permute.xlu0 %2591
    %2593 = vset.pattern.permute.xlu0 0
    %2594 = vperm.xlu0 %2593, %v2469
    %v2595 = vpop.permute.xlu0 %2594
    %2596 = vset.pattern.permute.xlu0 0
    %2597 = vperm.xlu0 %2596, %v2470
    %v2598 = vpop.permute.xlu0 %2597
    %v2599 = vlaneseq
    %v2600 = vshrl.u32 %v2599, 7
    %v2601 = vsub.s32 %v1047, %v2600
    %v2602 = vrot.slane %v2505, %v2601
    %v2603 = vlaneseq
    %v2604 = vshrl.u32 %v2603, 7
    %v2605 = vsub.s32 %v1052, %v2604
    %v2606 = vrot.slane %v2508, %v2605
    %v2607 = vsel %vm1057, %v2606, %v2602
    %v2608 = vlaneseq
    %v2609 = vshrl.u32 %v2608, 7
    %v2610 = vsub.s32 %v1047, %v2609
    %v2611 = vrot.slane %v2511, %v2610
    %v2612 = vlaneseq
    %v2613 = vshrl.u32 %v2612, 7
    %v2614 = vsub.s32 %v1052, %v2613
    %v2615 = vrot.slane %v2514, %v2614
    %v2616 = vsel %vm1057, %v2615, %v2611
    %v2617 = vlaneseq
    %v2618 = vshrl.u32 %v2617, 7
    %v2619 = vsub.s32 %v1047, %v2618
    %v2620 = vrot.slane %v2517, %v2619
    %v2621 = vlaneseq
    %v2622 = vshrl.u32 %v2621, 7
    %v2623 = vsub.s32 %v1052, %v2622
    %v2624 = vrot.slane %v2520, %v2623
    %v2625 = vsel %vm1057, %v2624, %v2620
    %v2626 = vlaneseq
    %v2627 = vshrl.u32 %v2626, 7
    %v2628 = vsub.s32 %v1047, %v2627
    %v2629 = vrot.slane %v2523, %v2628
    %v2630 = vlaneseq
    %v2631 = vshrl.u32 %v2630, 7
    %v2632 = vsub.s32 %v1052, %v2631
    %v2633 = vrot.slane %v2526, %v2632
    %v2634 = vsel %vm1057, %v2633, %v2629
    %v2635 = vlaneseq
    %v2636 = vshrl.u32 %v2635, 7
    %v2637 = vsub.s32 %v1047, %v2636
    %v2638 = vrot.slane %v2529, %v2637
    %v2639 = vlaneseq
    %v2640 = vshrl.u32 %v2639, 7
    %v2641 = vsub.s32 %v1052, %v2640
    %v2642 = vrot.slane %v2532, %v2641
    %v2643 = vsel %vm1057, %v2642, %v2638
    %v2644 = vlaneseq
    %v2645 = vshrl.u32 %v2644, 7
    %v2646 = vsub.s32 %v1047, %v2645
    %v2647 = vrot.slane %v2535, %v2646
    %v2648 = vlaneseq
    %v2649 = vshrl.u32 %v2648, 7
    %v2650 = vsub.s32 %v1052, %v2649
    %v2651 = vrot.slane %v2538, %v2650
    %v2652 = vsel %vm1057, %v2651, %v2647
    %v2653 = vlaneseq
    %v2654 = vshrl.u32 %v2653, 7
    %v2655 = vsub.s32 %v1047, %v2654
    %v2656 = vrot.slane %v2541, %v2655
    %v2657 = vlaneseq
    %v2658 = vshrl.u32 %v2657, 7
    %v2659 = vsub.s32 %v1052, %v2658
    %v2660 = vrot.slane %v2544, %v2659
    %v2661 = vsel %vm1057, %v2660, %v2656
    %v2662 = vlaneseq
    %v2663 = vshrl.u32 %v2662, 7
    %v2664 = vsub.s32 %v1047, %v2663
    %v2665 = vrot.slane %v2547, %v2664
    %v2666 = vlaneseq
    %v2667 = vshrl.u32 %v2666, 7
    %v2668 = vsub.s32 %v1052, %v2667
    %v2669 = vrot.slane %v2550, %v2668
    %v2670 = vsel %vm1057, %v2669, %v2665
    %v2671 = vlaneseq
    %v2672 = vshrl.u32 %v2671, 7
    %v2673 = vsub.s32 %v1047, %v2672
    %v2674 = vrot.slane %v2553, %v2673
    %v2675 = vlaneseq
    %v2676 = vshrl.u32 %v2675, 7
    %v2677 = vsub.s32 %v1052, %v2676
    %v2678 = vrot.slane %v2556, %v2677
    %v2679 = vsel %vm1057, %v2678, %v2674
    %v2680 = vlaneseq
    %v2681 = vshrl.u32 %v2680, 7
    %v2682 = vsub.s32 %v1047, %v2681
    %v2683 = vrot.slane %v2559, %v2682
    %v2684 = vlaneseq
    %v2685 = vshrl.u32 %v2684, 7
    %v2686 = vsub.s32 %v1052, %v2685
    %v2687 = vrot.slane %v2562, %v2686
    %v2688 = vsel %vm1057, %v2687, %v2683
    %v2689 = vlaneseq
    %v2690 = vshrl.u32 %v2689, 7
    %v2691 = vsub.s32 %v1047, %v2690
    %v2692 = vrot.slane %v2565, %v2691
    %v2693 = vlaneseq
    %v2694 = vshrl.u32 %v2693, 7
    %v2695 = vsub.s32 %v1052, %v2694
    %v2696 = vrot.slane %v2568, %v2695
    %v2697 = vsel %vm1057, %v2696, %v2692
    %v2698 = vlaneseq
    %v2699 = vshrl.u32 %v2698, 7
    %v2700 = vsub.s32 %v1047, %v2699
    %v2701 = vrot.slane %v2571, %v2700
    %v2702 = vlaneseq
    %v2703 = vshrl.u32 %v2702, 7
    %v2704 = vsub.s32 %v1052, %v2703
    %v2705 = vrot.slane %v2574, %v2704
    %v2706 = vsel %vm1057, %v2705, %v2701
    %v2707 = vlaneseq
    %v2708 = vshrl.u32 %v2707, 7
    %v2709 = vsub.s32 %v1047, %v2708
    %v2710 = vrot.slane %v2577, %v2709
    %v2711 = vlaneseq
    %v2712 = vshrl.u32 %v2711, 7
    %v2713 = vsub.s32 %v1052, %v2712
    %v2714 = vrot.slane %v2580, %v2713
    %v2715 = vsel %vm1057, %v2714, %v2710
    %v2716 = vlaneseq
    %v2717 = vshrl.u32 %v2716, 7
    %v2718 = vsub.s32 %v1047, %v2717
    %v2719 = vrot.slane %v2583, %v2718
    %v2720 = vlaneseq
    %v2721 = vshrl.u32 %v2720, 7
    %v2722 = vsub.s32 %v1052, %v2721
    %v2723 = vrot.slane %v2586, %v2722
    %v2724 = vsel %vm1057, %v2723, %v2719
    %v2725 = vlaneseq
    %v2726 = vshrl.u32 %v2725, 7
    %v2727 = vsub.s32 %v1047, %v2726
    %v2728 = vrot.slane %v2589, %v2727
    %v2729 = vlaneseq
    %v2730 = vshrl.u32 %v2729, 7
    %v2731 = vsub.s32 %v1052, %v2730
    %v2732 = vrot.slane %v2592, %v2731
    %v2733 = vsel %vm1057, %v2732, %v2728
    %v2734 = vlaneseq
    %v2735 = vshrl.u32 %v2734, 7
    %v2736 = vsub.s32 %v1047, %v2735
    %v2737 = vrot.slane %v2595, %v2736
    %v2738 = vlaneseq
    %v2739 = vshrl.u32 %v2738, 7
    %v2740 = vsub.s32 %v1052, %v2739
    %v2741 = vrot.slane %v2598, %v2740
    %v2742 = vsel %vm1057, %v2741, %v2737
    %v2743 = vsel %vm1194, %v2616, %v2607
    %v2744 = vsel %vm1196, %v2625, %v2743
    %v2745 = vsel %vm1198, %v2634, %v2744
    %v2746 = vsel %vm1200, %v2643, %v2745
    %v2747 = vsel %vm1202, %v2652, %v2746
    %v2748 = vsel %vm1204, %v2661, %v2747
    %v2749 = vsel %vm1206, %v2670, %v2748
    %v2750 = vsel %vm1194, %v2688, %v2679
    %v2751 = vsel %vm1196, %v2697, %v2750
    %v2752 = vsel %vm1198, %v2706, %v2751
    %v2753 = vsel %vm1200, %v2715, %v2752
    %v2754 = vsel %vm1202, %v2724, %v2753
    %v2755 = vsel %vm1204, %v2733, %v2754
    %v2756 = vsel %vm1206, %v2742, %v2755
    %v2759 = vsel %vm579, %v2749, -inf
    %2760 = vmax.xlane.f32.xlu0 %v2759
    %v2761 = vpop.xlane.xlu0 %2760
    %v2762 = vsel %vm579, %v2756, -inf
    %2763 = vmax.xlane.f32.xlu0 %v2762
    %v2764 = vpop.xlane.xlu0 %2763
    %v2767 = vlaneseq
    %v2768 = vshrl.u32 %v2767, 7
    %v2769 = vsub.s32 0, %v2768
    %v2770 = vrot.slane %v2761, %v2769
    %v2771 = vlaneseq
    %v2772 = vshrl.u32 %v2771, 7
    %v2773 = vsub.s32 1, %v2772
    %v2774 = vrot.slane %v2761, %v2773
    %v2775 = vlaneseq
    %v2776 = vshrl.u32 %v2775, 7
    %v2777 = vsub.s32 2, %v2776
    %v2778 = vrot.slane %v2761, %v2777
    %v2779 = vlaneseq
    %v2780 = vshrl.u32 %v2779, 7
    %v2781 = vsub.s32 3, %v2780
    %v2782 = vrot.slane %v2761, %v2781
    %v2783 = vlaneseq
    %v2784 = vshrl.u32 %v2783, 7
    %v2785 = vsub.s32 4, %v2784
    %v2786 = vrot.slane %v2761, %v2785
    %v2787 = vlaneseq
    %v2788 = vshrl.u32 %v2787, 7
    %v2789 = vsub.s32 5, %v2788
    %v2790 = vrot.slane %v2761, %v2789
    %v2791 = vlaneseq
    %v2792 = vshrl.u32 %v2791, 7
    %v2793 = vsub.s32 6, %v2792
    %v2794 = vrot.slane %v2761, %v2793
    %v2795 = vlaneseq
    %v2796 = vshrl.u32 %v2795, 7
    %v2797 = vsub.s32 7, %v2796
    %v2798 = vrot.slane %v2761, %v2797
    %v2799 = vlaneseq
    %v2800 = vshrl.u32 %v2799, 7
    %v2801 = vsub.s32 0, %v2800
    %v2802 = vrot.slane %v2764, %v2801
    %v2803 = vlaneseq
    %v2804 = vshrl.u32 %v2803, 7
    %v2805 = vsub.s32 1, %v2804
    %v2806 = vrot.slane %v2764, %v2805
    %v2807 = vlaneseq
    %v2808 = vshrl.u32 %v2807, 7
    %v2809 = vsub.s32 2, %v2808
    %v2810 = vrot.slane %v2764, %v2809
    %v2811 = vlaneseq
    %v2812 = vshrl.u32 %v2811, 7
    %v2813 = vsub.s32 3, %v2812
    %v2814 = vrot.slane %v2764, %v2813
    %v2815 = vlaneseq
    %v2816 = vshrl.u32 %v2815, 7
    %v2817 = vsub.s32 4, %v2816
    %v2818 = vrot.slane %v2764, %v2817
    %v2819 = vlaneseq
    %v2820 = vshrl.u32 %v2819, 7
    %v2821 = vsub.s32 5, %v2820
    %v2822 = vrot.slane %v2764, %v2821
    %v2823 = vlaneseq
    %v2824 = vshrl.u32 %v2823, 7
    %v2825 = vsub.s32 6, %v2824
    %v2826 = vrot.slane %v2764, %v2825
    %v2827 = vlaneseq
    %v2828 = vshrl.u32 %v2827, 7
    %v2829 = vsub.s32 7, %v2828
    %v2830 = vrot.slane %v2764, %v2829
    %v2847 = vsub.f32 %v2439, %v2770
    %v2848 = vsub.f32 %v2440, %v2770
    %v2849 = vsub.f32 %v2441, %v2774
    %v2850 = vsub.f32 %v2442, %v2774
    %v2851 = vsub.f32 %v2443, %v2778
    %v2852 = vsub.f32 %v2444, %v2778
    %v2853 = vsub.f32 %v2445, %v2782
    %v2854 = vsub.f32 %v2446, %v2782
    %v2855 = vsub.f32 %v2447, %v2786
    %v2856 = vsub.f32 %v2448, %v2786
    %v2857 = vsub.f32 %v2449, %v2790
    %v2858 = vsub.f32 %v2450, %v2790
    %v2859 = vsub.f32 %v2451, %v2794
    %v2860 = vsub.f32 %v2452, %v2794
    %v2861 = vsub.f32 %v2453, %v2798
    %v2862 = vsub.f32 %v2454, %v2798
    %v2863 = vsub.f32 %v2455, %v2802
    %v2864 = vsub.f32 %v2456, %v2802
    %v2865 = vsub.f32 %v2457, %v2806
    %v2866 = vsub.f32 %v2458, %v2806
    %v2867 = vsub.f32 %v2459, %v2810
    %v2868 = vsub.f32 %v2460, %v2810
    %v2869 = vsub.f32 %v2461, %v2814
    %v2870 = vsub.f32 %v2462, %v2814
    %v2871 = vsub.f32 %v2463, %v2818
    %v2872 = vsub.f32 %v2464, %v2818
    %v2873 = vsub.f32 %v2465, %v2822
    %v2874 = vsub.f32 %v2466, %v2822
    %v2875 = vsub.f32 %v2467, %v2826
    %v2876 = vsub.f32 %v2468, %v2826
    %v2877 = vsub.f32 %v2469, %v2830
    %v2878 = vsub.f32 %v2470, %v2830
    %v2879 = vmul.f32 %v2847, 1.442695
    %v2880 = vpow.pop %v2879
    %v2881 = vmul.f32 %v2848, 1.442695
    %v2882 = vpow.pop %v2881
    %v2883 = vmul.f32 %v2849, 1.442695
    %v2884 = vpow.pop %v2883
    %v2885 = vmul.f32 %v2850, 1.442695
    %v2886 = vpow.pop %v2885
    %v2887 = vmul.f32 %v2851, 1.442695
    %v2888 = vpow.pop %v2887
    %v2889 = vmul.f32 %v2852, 1.442695
    %v2890 = vpow.pop %v2889
    %v2891 = vmul.f32 %v2853, 1.442695
    %v2892 = vpow.pop %v2891
    %v2893 = vmul.f32 %v2854, 1.442695
    %v2894 = vpow.pop %v2893
    %v2895 = vmul.f32 %v2855, 1.442695
    %v2896 = vpow.pop %v2895
    %v2897 = vmul.f32 %v2856, 1.442695
    %v2898 = vpow.pop %v2897
    %v2899 = vmul.f32 %v2857, 1.442695
    %v2900 = vpow.pop %v2899
    %v2901 = vmul.f32 %v2858, 1.442695
    %v2902 = vpow.pop %v2901
    %v2903 = vmul.f32 %v2859, 1.442695
    %v2904 = vpow.pop %v2903
    %v2905 = vmul.f32 %v2860, 1.442695
    %v2906 = vpow.pop %v2905
    %v2907 = vmul.f32 %v2861, 1.442695
    %v2908 = vpow.pop %v2907
    %v2909 = vmul.f32 %v2862, 1.442695
    %v2910 = vpow.pop %v2909
    %v2911 = vmul.f32 %v2863, 1.442695
    %v2912 = vpow.pop %v2911
    %v2913 = vmul.f32 %v2864, 1.442695
    %v2914 = vpow.pop %v2913
    %v2915 = vmul.f32 %v2865, 1.442695
    %v2916 = vpow.pop %v2915
    %v2917 = vmul.f32 %v2866, 1.442695
    %v2918 = vpow.pop %v2917
    %v2919 = vmul.f32 %v2867, 1.442695
    %v2920 = vpow.pop %v2919
    %v2921 = vmul.f32 %v2868, 1.442695
    %v2922 = vpow.pop %v2921
    %v2923 = vmul.f32 %v2869, 1.442695
    %v2924 = vpow.pop %v2923
    %v2925 = vmul.f32 %v2870, 1.442695
    %v2926 = vpow.pop %v2925
    %v2927 = vmul.f32 %v2871, 1.442695
    %v2928 = vpow.pop %v2927
    %v2929 = vmul.f32 %v2872, 1.442695
    %v2930 = vpow.pop %v2929
    %v2931 = vmul.f32 %v2873, 1.442695
    %v2932 = vpow.pop %v2931
    %v2933 = vmul.f32 %v2874, 1.442695
    %v2934 = vpow.pop %v2933
    %v2935 = vmul.f32 %v2875, 1.442695
    %v2936 = vpow.pop %v2935
    %v2937 = vmul.f32 %v2876, 1.442695
    %v2938 = vpow.pop %v2937
    %v2939 = vmul.f32 %v2877, 1.442695
    %v2940 = vpow.pop %v2939
    %v2941 = vmul.f32 %v2878, 1.442695
    %v2942 = vpow.pop %v2941
    %2975 = vset.pattern.permute.xlu0 0
    %2976 = vperm.xlu0 %2975, %v2880
    %v2977 = vpop.permute.xlu0 %2976
    %2978 = vset.pattern.permute.xlu0 0
    %2979 = vperm.xlu0 %2978, %v2882
    %v2980 = vpop.permute.xlu0 %2979
    %2981 = vset.pattern.permute.xlu0 0
    %2982 = vperm.xlu0 %2981, %v2884
    %v2983 = vpop.permute.xlu0 %2982
    %2984 = vset.pattern.permute.xlu0 0
    %2985 = vperm.xlu0 %2984, %v2886
    %v2986 = vpop.permute.xlu0 %2985
    %2987 = vset.pattern.permute.xlu0 0
    %2988 = vperm.xlu0 %2987, %v2888
    %v2989 = vpop.permute.xlu0 %2988
    %2990 = vset.pattern.permute.xlu0 0
    %2991 = vperm.xlu0 %2990, %v2890
    %v2992 = vpop.permute.xlu0 %2991
    %2993 = vset.pattern.permute.xlu0 0
    %2994 = vperm.xlu0 %2993, %v2892
    %v2995 = vpop.permute.xlu0 %2994
    %2996 = vset.pattern.permute.xlu0 0
    %2997 = vperm.xlu0 %2996, %v2894
    %v2998 = vpop.permute.xlu0 %2997
    %2999 = vset.pattern.permute.xlu0 0
    %3000 = vperm.xlu0 %2999, %v2896
    %v3001 = vpop.permute.xlu0 %3000
    %3002 = vset.pattern.permute.xlu0 0
    %3003 = vperm.xlu0 %3002, %v2898
    %v3004 = vpop.permute.xlu0 %3003
    %3005 = vset.pattern.permute.xlu0 0
    %3006 = vperm.xlu0 %3005, %v2900
    %v3007 = vpop.permute.xlu0 %3006
    %3008 = vset.pattern.permute.xlu0 0
    %3009 = vperm.xlu0 %3008, %v2902
    %v3010 = vpop.permute.xlu0 %3009
    %3011 = vset.pattern.permute.xlu0 0
    %3012 = vperm.xlu0 %3011, %v2904
    %v3013 = vpop.permute.xlu0 %3012
    %3014 = vset.pattern.permute.xlu0 0
    %3015 = vperm.xlu0 %3014, %v2906
    %v3016 = vpop.permute.xlu0 %3015
    %3017 = vset.pattern.permute.xlu0 0
    %3018 = vperm.xlu0 %3017, %v2908
    %v3019 = vpop.permute.xlu0 %3018
    %3020 = vset.pattern.permute.xlu0 0
    %3021 = vperm.xlu0 %3020, %v2910
    %v3022 = vpop.permute.xlu0 %3021
    %3023 = vset.pattern.permute.xlu0 0
    %3024 = vperm.xlu0 %3023, %v2912
    %v3025 = vpop.permute.xlu0 %3024
    %3026 = vset.pattern.permute.xlu0 0
    %3027 = vperm.xlu0 %3026, %v2914
    %v3028 = vpop.permute.xlu0 %3027
    %3029 = vset.pattern.permute.xlu0 0
    %3030 = vperm.xlu0 %3029, %v2916
    %v3031 = vpop.permute.xlu0 %3030
    %3032 = vset.pattern.permute.xlu0 0
    %3033 = vperm.xlu0 %3032, %v2918
    %v3034 = vpop.permute.xlu0 %3033
    %3035 = vset.pattern.permute.xlu0 0
    %3036 = vperm.xlu0 %3035, %v2920
    %v3037 = vpop.permute.xlu0 %3036
    %3038 = vset.pattern.permute.xlu0 0
    %3039 = vperm.xlu0 %3038, %v2922
    %v3040 = vpop.permute.xlu0 %3039
    %3041 = vset.pattern.permute.xlu0 0
    %3042 = vperm.xlu0 %3041, %v2924
    %v3043 = vpop.permute.xlu0 %3042
    %3044 = vset.pattern.permute.xlu0 0
    %3045 = vperm.xlu0 %3044, %v2926
    %v3046 = vpop.permute.xlu0 %3045
    %3047 = vset.pattern.permute.xlu0 0
    %3048 = vperm.xlu0 %3047, %v2928
    %v3049 = vpop.permute.xlu0 %3048
    %3050 = vset.pattern.permute.xlu0 0
    %3051 = vperm.xlu0 %3050, %v2930
    %v3052 = vpop.permute.xlu0 %3051
    %3053 = vset.pattern.permute.xlu0 0
    %3054 = vperm.xlu0 %3053, %v2932
    %v3055 = vpop.permute.xlu0 %3054
    %3056 = vset.pattern.permute.xlu0 0
    %3057 = vperm.xlu0 %3056, %v2934
    %v3058 = vpop.permute.xlu0 %3057
    %3059 = vset.pattern.permute.xlu0 0
    %3060 = vperm.xlu0 %3059, %v2936
    %v3061 = vpop.permute.xlu0 %3060
    %3062 = vset.pattern.permute.xlu0 0
    %3063 = vperm.xlu0 %3062, %v2938
    %v3064 = vpop.permute.xlu0 %3063
    %3065 = vset.pattern.permute.xlu0 0
    %3066 = vperm.xlu0 %3065, %v2940
    %v3067 = vpop.permute.xlu0 %3066
    %3068 = vset.pattern.permute.xlu0 0
    %3069 = vperm.xlu0 %3068, %v2942
    %v3070 = vpop.permute.xlu0 %3069
    %v3071 = vlaneseq
    %v3072 = vshrl.u32 %v3071, 7
    %v3073 = vsub.s32 %v1047, %v3072
    %v3074 = vrot.slane %v2977, %v3073
    %v3075 = vlaneseq
    %v3076 = vshrl.u32 %v3075, 7
    %v3077 = vsub.s32 %v1052, %v3076
    %v3078 = vrot.slane %v2980, %v3077
    %v3079 = vsel %vm1057, %v3078, %v3074
    %v3080 = vlaneseq
    %v3081 = vshrl.u32 %v3080, 7
    %v3082 = vsub.s32 %v1047, %v3081
    %v3083 = vrot.slane %v2983, %v3082
    %v3084 = vlaneseq
    %v3085 = vshrl.u32 %v3084, 7
    %v3086 = vsub.s32 %v1052, %v3085
    %v3087 = vrot.slane %v2986, %v3086
    %v3088 = vsel %vm1057, %v3087, %v3083
    %v3089 = vlaneseq
    %v3090 = vshrl.u32 %v3089, 7
    %v3091 = vsub.s32 %v1047, %v3090
    %v3092 = vrot.slane %v2989, %v3091
    %v3093 = vlaneseq
    %v3094 = vshrl.u32 %v3093, 7
    %v3095 = vsub.s32 %v1052, %v3094
    %v3096 = vrot.slane %v2992, %v3095
    %v3097 = vsel %vm1057, %v3096, %v3092
    %v3098 = vlaneseq
    %v3099 = vshrl.u32 %v3098, 7
    %v3100 = vsub.s32 %v1047, %v3099
    %v3101 = vrot.slane %v2995, %v3100
    %v3102 = vlaneseq
    %v3103 = vshrl.u32 %v3102, 7
    %v3104 = vsub.s32 %v1052, %v3103
    %v3105 = vrot.slane %v2998, %v3104
    %v3106 = vsel %vm1057, %v3105, %v3101
    %v3107 = vlaneseq
    %v3108 = vshrl.u32 %v3107, 7
    %v3109 = vsub.s32 %v1047, %v3108
    %v3110 = vrot.slane %v3001, %v3109
    %v3111 = vlaneseq
    %v3112 = vshrl.u32 %v3111, 7
    %v3113 = vsub.s32 %v1052, %v3112
    %v3114 = vrot.slane %v3004, %v3113
    %v3115 = vsel %vm1057, %v3114, %v3110
    %v3116 = vlaneseq
    %v3117 = vshrl.u32 %v3116, 7
    %v3118 = vsub.s32 %v1047, %v3117
    %v3119 = vrot.slane %v3007, %v3118
    %v3120 = vlaneseq
    %v3121 = vshrl.u32 %v3120, 7
    %v3122 = vsub.s32 %v1052, %v3121
    %v3123 = vrot.slane %v3010, %v3122
    %v3124 = vsel %vm1057, %v3123, %v3119
    %v3125 = vlaneseq
    %v3126 = vshrl.u32 %v3125, 7
    %v3127 = vsub.s32 %v1047, %v3126
    %v3128 = vrot.slane %v3013, %v3127
    %v3129 = vlaneseq
    %v3130 = vshrl.u32 %v3129, 7
    %v3131 = vsub.s32 %v1052, %v3130
    %v3132 = vrot.slane %v3016, %v3131
    %v3133 = vsel %vm1057, %v3132, %v3128
    %v3134 = vlaneseq
    %v3135 = vshrl.u32 %v3134, 7
    %v3136 = vsub.s32 %v1047, %v3135
    %v3137 = vrot.slane %v3019, %v3136
    %v3138 = vlaneseq
    %v3139 = vshrl.u32 %v3138, 7
    %v3140 = vsub.s32 %v1052, %v3139
    %v3141 = vrot.slane %v3022, %v3140
    %v3142 = vsel %vm1057, %v3141, %v3137
    %v3143 = vlaneseq
    %v3144 = vshrl.u32 %v3143, 7
    %v3145 = vsub.s32 %v1047, %v3144
    %v3146 = vrot.slane %v3025, %v3145
    %v3147 = vlaneseq
    %v3148 = vshrl.u32 %v3147, 7
    %v3149 = vsub.s32 %v1052, %v3148
    %v3150 = vrot.slane %v3028, %v3149
    %v3151 = vsel %vm1057, %v3150, %v3146
    %v3152 = vlaneseq
    %v3153 = vshrl.u32 %v3152, 7
    %v3154 = vsub.s32 %v1047, %v3153
    %v3155 = vrot.slane %v3031, %v3154
    %v3156 = vlaneseq
    %v3157 = vshrl.u32 %v3156, 7
    %v3158 = vsub.s32 %v1052, %v3157
    %v3159 = vrot.slane %v3034, %v3158
    %v3160 = vsel %vm1057, %v3159, %v3155
    %v3161 = vlaneseq
    %v3162 = vshrl.u32 %v3161, 7
    %v3163 = vsub.s32 %v1047, %v3162
    %v3164 = vrot.slane %v3037, %v3163
    %v3165 = vlaneseq
    %v3166 = vshrl.u32 %v3165, 7
    %v3167 = vsub.s32 %v1052, %v3166
    %v3168 = vrot.slane %v3040, %v3167
    %v3169 = vsel %vm1057, %v3168, %v3164
    %v3170 = vlaneseq
    %v3171 = vshrl.u32 %v3170, 7
    %v3172 = vsub.s32 %v1047, %v3171
    %v3173 = vrot.slane %v3043, %v3172
    %v3174 = vlaneseq
    %v3175 = vshrl.u32 %v3174, 7
    %v3176 = vsub.s32 %v1052, %v3175
    %v3177 = vrot.slane %v3046, %v3176
    %v3178 = vsel %vm1057, %v3177, %v3173
    %v3179 = vlaneseq
    %v3180 = vshrl.u32 %v3179, 7
    %v3181 = vsub.s32 %v1047, %v3180
    %v3182 = vrot.slane %v3049, %v3181
    %v3183 = vlaneseq
    %v3184 = vshrl.u32 %v3183, 7
    %v3185 = vsub.s32 %v1052, %v3184
    %v3186 = vrot.slane %v3052, %v3185
    %v3187 = vsel %vm1057, %v3186, %v3182
    %v3188 = vlaneseq
    %v3189 = vshrl.u32 %v3188, 7
    %v3190 = vsub.s32 %v1047, %v3189
    %v3191 = vrot.slane %v3055, %v3190
    %v3192 = vlaneseq
    %v3193 = vshrl.u32 %v3192, 7
    %v3194 = vsub.s32 %v1052, %v3193
    %v3195 = vrot.slane %v3058, %v3194
    %v3196 = vsel %vm1057, %v3195, %v3191
    %v3197 = vlaneseq
    %v3198 = vshrl.u32 %v3197, 7
    %v3199 = vsub.s32 %v1047, %v3198
    %v3200 = vrot.slane %v3061, %v3199
    %v3201 = vlaneseq
    %v3202 = vshrl.u32 %v3201, 7
    %v3203 = vsub.s32 %v1052, %v3202
    %v3204 = vrot.slane %v3064, %v3203
    %v3205 = vsel %vm1057, %v3204, %v3200
    %v3206 = vlaneseq
    %v3207 = vshrl.u32 %v3206, 7
    %v3208 = vsub.s32 %v1047, %v3207
    %v3209 = vrot.slane %v3067, %v3208
    %v3210 = vlaneseq
    %v3211 = vshrl.u32 %v3210, 7
    %v3212 = vsub.s32 %v1052, %v3211
    %v3213 = vrot.slane %v3070, %v3212
    %v3214 = vsel %vm1057, %v3213, %v3209
    %v3215 = vsel %vm1194, %v3088, %v3079
    %v3216 = vsel %vm1196, %v3097, %v3215
    %v3217 = vsel %vm1198, %v3106, %v3216
    %v3218 = vsel %vm1200, %v3115, %v3217
    %v3219 = vsel %vm1202, %v3124, %v3218
    %v3220 = vsel %vm1204, %v3133, %v3219
    %v3221 = vsel %vm1206, %v3142, %v3220
    %v3222 = vsel %vm1194, %v3160, %v3151
    %v3223 = vsel %vm1196, %v3169, %v3222
    %v3224 = vsel %vm1198, %v3178, %v3223
    %v3225 = vsel %vm1200, %v3187, %v3224
    %v3226 = vsel %vm1202, %v3196, %v3225
    %v3227 = vsel %vm1204, %v3205, %v3226
    %v3228 = vsel %vm1206, %v3214, %v3227
    %v3231 = vsel %vm579, %v3221, 0.0
    %3232 = vadd.xlane.f32.xlu0 %v3231
    %v3233 = vpop.xlane.xlu0 %3232
    %v3234 = vsel %vm579, %v3228, 0.0
    %3235 = vadd.xlane.f32.xlu0 %v3234
    %v3236 = vpop.xlane.xlu0 %3235
    %v3237 = vrcp.pop %v3233
    %v3238 = vrcp.pop %v3236
    %v3241 = vlaneseq
    %v3242 = vshrl.u32 %v3241, 7
    %v3243 = vsub.s32 0, %v3242
    %v3244 = vrot.slane %v3237, %v3243
    %v3245 = vlaneseq
    %v3246 = vshrl.u32 %v3245, 7
    %v3247 = vsub.s32 1, %v3246
    %v3248 = vrot.slane %v3237, %v3247
    %v3249 = vlaneseq
    %v3250 = vshrl.u32 %v3249, 7
    %v3251 = vsub.s32 2, %v3250
    %v3252 = vrot.slane %v3237, %v3251
    %v3253 = vlaneseq
    %v3254 = vshrl.u32 %v3253, 7
    %v3255 = vsub.s32 3, %v3254
    %v3256 = vrot.slane %v3237, %v3255
    %v3257 = vlaneseq
    %v3258 = vshrl.u32 %v3257, 7
    %v3259 = vsub.s32 4, %v3258
    %v3260 = vrot.slane %v3237, %v3259
    %v3261 = vlaneseq
    %v3262 = vshrl.u32 %v3261, 7
    %v3263 = vsub.s32 5, %v3262
    %v3264 = vrot.slane %v3237, %v3263
    %v3265 = vlaneseq
    %v3266 = vshrl.u32 %v3265, 7
    %v3267 = vsub.s32 6, %v3266
    %v3268 = vrot.slane %v3237, %v3267
    %v3269 = vlaneseq
    %v3270 = vshrl.u32 %v3269, 7
    %v3271 = vsub.s32 7, %v3270
    %v3272 = vrot.slane %v3237, %v3271
    %v3273 = vlaneseq
    %v3274 = vshrl.u32 %v3273, 7
    %v3275 = vsub.s32 0, %v3274
    %v3276 = vrot.slane %v3238, %v3275
    %v3277 = vlaneseq
    %v3278 = vshrl.u32 %v3277, 7
    %v3279 = vsub.s32 1, %v3278
    %v3280 = vrot.slane %v3238, %v3279
    %v3281 = vlaneseq
    %v3282 = vshrl.u32 %v3281, 7
    %v3283 = vsub.s32 2, %v3282
    %v3284 = vrot.slane %v3238, %v3283
    %v3285 = vlaneseq
    %v3286 = vshrl.u32 %v3285, 7
    %v3287 = vsub.s32 3, %v3286
    %v3288 = vrot.slane %v3238, %v3287
    %v3289 = vlaneseq
    %v3290 = vshrl.u32 %v3289, 7
    %v3291 = vsub.s32 4, %v3290
    %v3292 = vrot.slane %v3238, %v3291
    %v3293 = vlaneseq
    %v3294 = vshrl.u32 %v3293, 7
    %v3295 = vsub.s32 5, %v3294
    %v3296 = vrot.slane %v3238, %v3295
    %v3297 = vlaneseq
    %v3298 = vshrl.u32 %v3297, 7
    %v3299 = vsub.s32 6, %v3298
    %v3300 = vrot.slane %v3238, %v3299
    %v3301 = vlaneseq
    %v3302 = vshrl.u32 %v3301, 7
    %v3303 = vsub.s32 7, %v3302
    %v3304 = vrot.slane %v3238, %v3303
    %v3321 = vmul.f32 %v2880, %v3244
    %v3322 = vmul.f32 %v2882, %v3244
    %v3323 = vmul.f32 %v2884, %v3248
    %v3324 = vmul.f32 %v2886, %v3248
    %v3325 = vmul.f32 %v2888, %v3252
    %v3326 = vmul.f32 %v2890, %v3252
    %v3327 = vmul.f32 %v2892, %v3256
    %v3328 = vmul.f32 %v2894, %v3256
    %v3329 = vmul.f32 %v2896, %v3260
    %v3330 = vmul.f32 %v2898, %v3260
    %v3331 = vmul.f32 %v2900, %v3264
    %v3332 = vmul.f32 %v2902, %v3264
    %v3333 = vmul.f32 %v2904, %v3268
    %v3334 = vmul.f32 %v2906, %v3268
    %v3335 = vmul.f32 %v2908, %v3272
    %v3336 = vmul.f32 %v2910, %v3272
    %v3337 = vmul.f32 %v2912, %v3276
    %v3338 = vmul.f32 %v2914, %v3276
    %v3339 = vmul.f32 %v2916, %v3280
    %v3340 = vmul.f32 %v2918, %v3280
    %v3341 = vmul.f32 %v2920, %v3284
    %v3342 = vmul.f32 %v2922, %v3284
    %v3343 = vmul.f32 %v2924, %v3288
    %v3344 = vmul.f32 %v2926, %v3288
    %v3345 = vmul.f32 %v2928, %v3292
    %v3346 = vmul.f32 %v2930, %v3292
    %v3347 = vmul.f32 %v2932, %v3296
    %v3348 = vmul.f32 %v2934, %v3296
    %v3349 = vmul.f32 %v2936, %v3300
    %v3350 = vmul.f32 %v2938, %v3300
    %v3351 = vmul.f32 %v2940, %v3304
    %v3352 = vmul.f32 %v2942, %v3304
    %v3353 = vpack.c.bf16 %v3322, %v3321
    %v3354 = vpack.c.bf16 %v3324, %v3323
    %v3355 = vpack.c.bf16 %v3326, %v3325
    %v3356 = vpack.c.bf16 %v3328, %v3327
    %v3357 = vpack.c.bf16 %v3330, %v3329
    %v3358 = vpack.c.bf16 %v3332, %v3331
    %v3359 = vpack.c.bf16 %v3334, %v3333
    %v3360 = vpack.c.bf16 %v3336, %v3335
    %v3361 = vpack.c.bf16 %v3338, %v3337
    %v3362 = vpack.c.bf16 %v3340, %v3339
    %v3363 = vpack.c.bf16 %v3342, %v3341
    %v3364 = vpack.c.bf16 %v3344, %v3343
    %v3365 = vpack.c.bf16 %v3346, %v3345
    %v3366 = vpack.c.bf16 %v3348, %v3347
    %v3367 = vpack.c.bf16 %v3350, %v3349
    %v3368 = vpack.c.bf16 %v3352, %v3351
    %v3385 = vunpack.c.l.b16 %v3353
    %v3386 = vunpack.c.h.b16 %v3353
    %v3387 = vunpack.c.l.b16 %v3354
    %v3388 = vunpack.c.h.b16 %v3354
    %v3389 = vunpack.c.l.b16 %v3355
    %v3390 = vunpack.c.h.b16 %v3355
    %v3391 = vunpack.c.l.b16 %v3356
    %v3392 = vunpack.c.h.b16 %v3356
    %v3393 = vunpack.c.l.b16 %v3357
    %v3394 = vunpack.c.h.b16 %v3357
    %v3395 = vunpack.c.l.b16 %v3358
    %v3396 = vunpack.c.h.b16 %v3358
    %v3397 = vunpack.c.l.b16 %v3359
    %v3398 = vunpack.c.h.b16 %v3359
    %v3399 = vunpack.c.l.b16 %v3360
    %v3400 = vunpack.c.h.b16 %v3360
    %v3401 = vunpack.c.l.b16 %v3361
    %v3402 = vunpack.c.h.b16 %v3361
    %v3403 = vunpack.c.l.b16 %v3362
    %v3404 = vunpack.c.h.b16 %v3362
    %v3405 = vunpack.c.l.b16 %v3363
    %v3406 = vunpack.c.h.b16 %v3363
    %v3407 = vunpack.c.l.b16 %v3364
    %v3408 = vunpack.c.h.b16 %v3364
    %v3409 = vunpack.c.l.b16 %v3365
    %v3410 = vunpack.c.h.b16 %v3365
    %v3411 = vunpack.c.l.b16 %v3366
    %v3412 = vunpack.c.h.b16 %v3366
    %v3413 = vunpack.c.l.b16 %v3367
    %v3414 = vunpack.c.h.b16 %v3367
    %v3415 = vunpack.c.l.b16 %v3368
    %v3416 = vunpack.c.h.b16 %v3368
    %3417 = vset.pattern.permute.xlu0 0
    %3418 = vperm.xlu0 %3417, %v3385
    %v3419 = vpop.permute.xlu0 %3418
    %3420 = vset.pattern.permute.xlu0 0
    %3421 = vperm.xlu0 %3420, %v3386
    %v3422 = vpop.permute.xlu0 %3421
    %3423 = vset.pattern.permute.xlu0 0
    %3424 = vperm.xlu0 %3423, %v3387
    %v3425 = vpop.permute.xlu0 %3424
    %3426 = vset.pattern.permute.xlu0 0
    %3427 = vperm.xlu0 %3426, %v3388
    %v3428 = vpop.permute.xlu0 %3427
    %3429 = vset.pattern.permute.xlu0 0
    %3430 = vperm.xlu0 %3429, %v3389
    %v3431 = vpop.permute.xlu0 %3430
    %3432 = vset.pattern.permute.xlu0 0
    %3433 = vperm.xlu0 %3432, %v3390
    %v3434 = vpop.permute.xlu0 %3433
    %3435 = vset.pattern.permute.xlu0 0
    %3436 = vperm.xlu0 %3435, %v3391
    %v3437 = vpop.permute.xlu0 %3436
    %3438 = vset.pattern.permute.xlu0 0
    %3439 = vperm.xlu0 %3438, %v3392
    %v3440 = vpop.permute.xlu0 %3439
    %3441 = vset.pattern.permute.xlu0 0
    %3442 = vperm.xlu0 %3441, %v3393
    %v3443 = vpop.permute.xlu0 %3442
    %3444 = vset.pattern.permute.xlu0 0
    %3445 = vperm.xlu0 %3444, %v3394
    %v3446 = vpop.permute.xlu0 %3445
    %3447 = vset.pattern.permute.xlu0 0
    %3448 = vperm.xlu0 %3447, %v3395
    %v3449 = vpop.permute.xlu0 %3448
    %3450 = vset.pattern.permute.xlu0 0
    %3451 = vperm.xlu0 %3450, %v3396
    %v3452 = vpop.permute.xlu0 %3451
    %3453 = vset.pattern.permute.xlu0 0
    %3454 = vperm.xlu0 %3453, %v3397
    %v3455 = vpop.permute.xlu0 %3454
    %3456 = vset.pattern.permute.xlu0 0
    %3457 = vperm.xlu0 %3456, %v3398
    %v3458 = vpop.permute.xlu0 %3457
    %3459 = vset.pattern.permute.xlu0 0
    %3460 = vperm.xlu0 %3459, %v3399
    %v3461 = vpop.permute.xlu0 %3460
    %3462 = vset.pattern.permute.xlu0 0
    %3463 = vperm.xlu0 %3462, %v3400
    %v3464 = vpop.permute.xlu0 %3463
    %3465 = vset.pattern.permute.xlu0 0
    %3466 = vperm.xlu0 %3465, %v3401
    %v3467 = vpop.permute.xlu0 %3466
    %3468 = vset.pattern.permute.xlu0 0
    %3469 = vperm.xlu0 %3468, %v3402
    %v3470 = vpop.permute.xlu0 %3469
    %3471 = vset.pattern.permute.xlu0 0
    %3472 = vperm.xlu0 %3471, %v3403
    %v3473 = vpop.permute.xlu0 %3472
    %3474 = vset.pattern.permute.xlu0 0
    %3475 = vperm.xlu0 %3474, %v3404
    %v3476 = vpop.permute.xlu0 %3475
    %3477 = vset.pattern.permute.xlu0 0
    %3478 = vperm.xlu0 %3477, %v3405
    %v3479 = vpop.permute.xlu0 %3478
    %3480 = vset.pattern.permute.xlu0 0
    %3481 = vperm.xlu0 %3480, %v3406
    %v3482 = vpop.permute.xlu0 %3481
    %3483 = vset.pattern.permute.xlu0 0
    %3484 = vperm.xlu0 %3483, %v3407
    %v3485 = vpop.permute.xlu0 %3484
    %3486 = vset.pattern.permute.xlu0 0
    %3487 = vperm.xlu0 %3486, %v3408
    %v3488 = vpop.permute.xlu0 %3487
    %3489 = vset.pattern.permute.xlu0 0
    %3490 = vperm.xlu0 %3489, %v3409
    %v3491 = vpop.permute.xlu0 %3490
    %3492 = vset.pattern.permute.xlu0 0
    %3493 = vperm.xlu0 %3492, %v3410
    %v3494 = vpop.permute.xlu0 %3493
    %3495 = vset.pattern.permute.xlu0 0
    %3496 = vperm.xlu0 %3495, %v3411
    %v3497 = vpop.permute.xlu0 %3496
    %3498 = vset.pattern.permute.xlu0 0
    %3499 = vperm.xlu0 %3498, %v3412
    %v3500 = vpop.permute.xlu0 %3499
    %3501 = vset.pattern.permute.xlu0 0
    %3502 = vperm.xlu0 %3501, %v3413
    %v3503 = vpop.permute.xlu0 %3502
    %3504 = vset.pattern.permute.xlu0 0
    %3505 = vperm.xlu0 %3504, %v3414
    %v3506 = vpop.permute.xlu0 %3505
    %3507 = vset.pattern.permute.xlu0 0
    %3508 = vperm.xlu0 %3507, %v3415
    %v3509 = vpop.permute.xlu0 %3508
    %3510 = vset.pattern.permute.xlu0 0
    %3511 = vperm.xlu0 %3510, %v3416
    %v3512 = vpop.permute.xlu0 %3511
    %v3513 = vlaneseq
    %v3514 = vshrl.u32 %v3513, 7
    %v3515 = vsub.s32 %v1047, %v3514
    %v3516 = vrot.slane %v3419, %v3515
    %v3517 = vlaneseq
    %v3518 = vshrl.u32 %v3517, 7
    %v3519 = vsub.s32 %v1052, %v3518
    %v3520 = vrot.slane %v3422, %v3519
    %v3521 = vsel %vm1057, %v3520, %v3516
    %v3522 = vlaneseq
    %v3523 = vshrl.u32 %v3522, 7
    %v3524 = vsub.s32 %v1047, %v3523
    %v3525 = vrot.slane %v3425, %v3524
    %v3526 = vlaneseq
    %v3527 = vshrl.u32 %v3526, 7
    %v3528 = vsub.s32 %v1052, %v3527
    %v3529 = vrot.slane %v3428, %v3528
    %v3530 = vsel %vm1057, %v3529, %v3525
    %v3531 = vlaneseq
    %v3532 = vshrl.u32 %v3531, 7
    %v3533 = vsub.s32 %v1047, %v3532
    %v3534 = vrot.slane %v3431, %v3533
    %v3535 = vlaneseq
    %v3536 = vshrl.u32 %v3535, 7
    %v3537 = vsub.s32 %v1052, %v3536
    %v3538 = vrot.slane %v3434, %v3537
    %v3539 = vsel %vm1057, %v3538, %v3534
    %v3540 = vlaneseq
    %v3541 = vshrl.u32 %v3540, 7
    %v3542 = vsub.s32 %v1047, %v3541
    %v3543 = vrot.slane %v3437, %v3542
    %v3544 = vlaneseq
    %v3545 = vshrl.u32 %v3544, 7
    %v3546 = vsub.s32 %v1052, %v3545
    %v3547 = vrot.slane %v3440, %v3546
    %v3548 = vsel %vm1057, %v3547, %v3543
    %v3549 = vlaneseq
    %v3550 = vshrl.u32 %v3549, 7
    %v3551 = vsub.s32 %v1047, %v3550
    %v3552 = vrot.slane %v3443, %v3551
    %v3553 = vlaneseq
    %v3554 = vshrl.u32 %v3553, 7
    %v3555 = vsub.s32 %v1052, %v3554
    %v3556 = vrot.slane %v3446, %v3555
    %v3557 = vsel %vm1057, %v3556, %v3552
    %v3558 = vlaneseq
    %v3559 = vshrl.u32 %v3558, 7
    %v3560 = vsub.s32 %v1047, %v3559
    %v3561 = vrot.slane %v3449, %v3560
    %v3562 = vlaneseq
    %v3563 = vshrl.u32 %v3562, 7
    %v3564 = vsub.s32 %v1052, %v3563
    %v3565 = vrot.slane %v3452, %v3564
    %v3566 = vsel %vm1057, %v3565, %v3561
    %v3567 = vlaneseq
    %v3568 = vshrl.u32 %v3567, 7
    %v3569 = vsub.s32 %v1047, %v3568
    %v3570 = vrot.slane %v3455, %v3569
    %v3571 = vlaneseq
    %v3572 = vshrl.u32 %v3571, 7
    %v3573 = vsub.s32 %v1052, %v3572
    %v3574 = vrot.slane %v3458, %v3573
    %v3575 = vsel %vm1057, %v3574, %v3570
    %v3576 = vlaneseq
    %v3577 = vshrl.u32 %v3576, 7
    %v3578 = vsub.s32 %v1047, %v3577
    %v3579 = vrot.slane %v3461, %v3578
    %v3580 = vlaneseq
    %v3581 = vshrl.u32 %v3580, 7
    %v3582 = vsub.s32 %v1052, %v3581
    %v3583 = vrot.slane %v3464, %v3582
    %v3584 = vsel %vm1057, %v3583, %v3579
    %v3585 = vlaneseq
    %v3586 = vshrl.u32 %v3585, 7
    %v3587 = vsub.s32 %v1047, %v3586
    %v3588 = vrot.slane %v3467, %v3587
    %v3589 = vlaneseq
    %v3590 = vshrl.u32 %v3589, 7
    %v3591 = vsub.s32 %v1052, %v3590
    %v3592 = vrot.slane %v3470, %v3591
    %v3593 = vsel %vm1057, %v3592, %v3588
    %v3594 = vlaneseq
    %v3595 = vshrl.u32 %v3594, 7
    %v3596 = vsub.s32 %v1047, %v3595
    %v3597 = vrot.slane %v3473, %v3596
    %v3598 = vlaneseq
    %v3599 = vshrl.u32 %v3598, 7
    %v3600 = vsub.s32 %v1052, %v3599
    %v3601 = vrot.slane %v3476, %v3600
    %v3602 = vsel %vm1057, %v3601, %v3597
    %v3603 = vlaneseq
    %v3604 = vshrl.u32 %v3603, 7
    %v3605 = vsub.s32 %v1047, %v3604
    %v3606 = vrot.slane %v3479, %v3605
    %v3607 = vlaneseq
    %v3608 = vshrl.u32 %v3607, 7
    %v3609 = vsub.s32 %v1052, %v3608
    %v3610 = vrot.slane %v3482, %v3609
    %v3611 = vsel %vm1057, %v3610, %v3606
    %v3612 = vlaneseq
    %v3613 = vshrl.u32 %v3612, 7
    %v3614 = vsub.s32 %v1047, %v3613
    %v3615 = vrot.slane %v3485, %v3614
    %v3616 = vlaneseq
    %v3617 = vshrl.u32 %v3616, 7
    %v3618 = vsub.s32 %v1052, %v3617
    %v3619 = vrot.slane %v3488, %v3618
    %v3620 = vsel %vm1057, %v3619, %v3615
    %v3621 = vlaneseq
    %v3622 = vshrl.u32 %v3621, 7
    %v3623 = vsub.s32 %v1047, %v3622
    %v3624 = vrot.slane %v3491, %v3623
    %v3625 = vlaneseq
    %v3626 = vshrl.u32 %v3625, 7
    %v3627 = vsub.s32 %v1052, %v3626
    %v3628 = vrot.slane %v3494, %v3627
    %v3629 = vsel %vm1057, %v3628, %v3624
    %v3630 = vlaneseq
    %v3631 = vshrl.u32 %v3630, 7
    %v3632 = vsub.s32 %v1047, %v3631
    %v3633 = vrot.slane %v3497, %v3632
    %v3634 = vlaneseq
    %v3635 = vshrl.u32 %v3634, 7
    %v3636 = vsub.s32 %v1052, %v3635
    %v3637 = vrot.slane %v3500, %v3636
    %v3638 = vsel %vm1057, %v3637, %v3633
    %v3639 = vlaneseq
    %v3640 = vshrl.u32 %v3639, 7
    %v3641 = vsub.s32 %v1047, %v3640
    %v3642 = vrot.slane %v3503, %v3641
    %v3643 = vlaneseq
    %v3644 = vshrl.u32 %v3643, 7
    %v3645 = vsub.s32 %v1052, %v3644
    %v3646 = vrot.slane %v3506, %v3645
    %v3647 = vsel %vm1057, %v3646, %v3642
    %v3648 = vlaneseq
    %v3649 = vshrl.u32 %v3648, 7
    %v3650 = vsub.s32 %v1047, %v3649
    %v3651 = vrot.slane %v3509, %v3650
    %v3652 = vlaneseq
    %v3653 = vshrl.u32 %v3652, 7
    %v3654 = vsub.s32 %v1052, %v3653
    %v3655 = vrot.slane %v3512, %v3654
    %v3656 = vsel %vm1057, %v3655, %v3651
    %v3657 = vsel %vm1194, %v3530, %v3521
    %v3658 = vsel %vm1196, %v3539, %v3657
    %v3659 = vsel %vm1198, %v3548, %v3658
    %v3660 = vsel %vm1200, %v3557, %v3659
    %v3661 = vsel %vm1202, %v3566, %v3660
    %v3662 = vsel %vm1204, %v3575, %v3661
    %v3663 = vsel %vm1206, %v3584, %v3662
    %v3664 = vsel %vm1194, %v3602, %v3593
    %v3665 = vsel %vm1196, %v3611, %v3664
    %v3666 = vsel %vm1198, %v3620, %v3665
    %v3667 = vsel %vm1200, %v3629, %v3666
    %v3668 = vsel %vm1202, %v3638, %v3667
    %v3669 = vsel %vm1204, %v3647, %v3668
    %v3670 = vsel %vm1206, %v3656, %v3669
    %v3671 = vpack.c.b16 %v3670, %v3663
    %3673 = vrot.lane.b32.xlu0 %v1827, 112
    %v3674 = vpop.permute.xlu0 %3673
    %v3677 = vsel %vm579, %v3671, 0
    %3679 = vmatprep.subr.bf16.mxu0 0
    %3680 = vmatpush1.bf16.msra.mxu0 0
    %3681 = vmatprep.subr.bf16.mxu0 0
    %3682 = vmatpush1.bf16.msra.mxu0 0
    %3683 = vmatprep.subr.bf16.mxu0 0
    %3684 = vmatpush1.bf16.msra.mxu0 0
    %3685 = vmatprep.subr.bf16.mxu0 0
    %3686 = vmatpush1.bf16.msra.mxu0 0
    %3687 = vmatprep.subr.bf16.mxu0 0
    %3688 = vmatpush1.bf16.msra.mxu0 0
    %3689 = vmatprep.subr.bf16.mxu0 0
    %3690 = vmatpush1.bf16.msra.mxu0 0
    %3691 = vmatprep.subr.bf16.mxu0 0
    %3692 = vmatpush1.bf16.msra.mxu0 0
    %3693 = vmatprep.subr.bf16.mxu0 0
    %3694 = vmatpush1.bf16.msra.mxu0 %v3674
    %3695 = vmatprep.subr.bf16.mxu0 0
    %3696 = vmatpush2.bf16.msra.mxu0 0
    %3697 = vmatprep.subr.bf16.mxu0 0
    %3698 = vmatpush2.bf16.msra.mxu0 0
    %3699 = vmatprep.subr.bf16.mxu0 0
    %3700 = vmatpush2.bf16.msra.mxu0 0
    %3701 = vmatprep.subr.bf16.mxu0 0
    %3702 = vmatpush2.bf16.msra.mxu0 0
    %3703 = vmatprep.subr.bf16.mxu0 0
    %3704 = vmatpush2.bf16.msra.mxu0 0
    %3705 = vmatprep.subr.bf16.mxu0 0
    %3706 = vmatpush2.bf16.msra.mxu0 0
    %3707 = vmatprep.subr.bf16.mxu0 0
    %3708 = vmatpush2.bf16.msra.mxu0 0
    %3709 = vmatprep.subr.bf16.mxu0 0
    %3710 = vmatpush2.bf16.msra.mxu0 0
    %3711 = vmatprep.mubr.bf16.mxu0 0
    %3712 = vmatmul.mubr.bf16.gmra.mxu0 %v3677
    %v3713 = vpop.f32.mrf.mxu0
    %v3714 = vadd.f32 0.0, %v3713
    %v3715 = vpop.f32.mrf.mxu0
    %v3716 = vpop.f32.mrf.mxu0
    %v3717 = vadd.f32 0.0, %v3716
    %v3718 = vpop.f32.mrf.mxu0
    %3719 = vdwg.mxu0
    %3722 = vrot.lane.b32.xlu0 %v3714, 16
    %v3723 = vpop.permute.xlu0 %3722
    %3724 = vrot.lane.b32.xlu0 %v3717, 16
    %v3725 = vpop.permute.xlu0 %3724
    %v3728 = vsel %vm579, %v2169, %v3723
    %v3729 = vsel %vm579, %v2172, %v3725
    %v3731 = vlaneseq
    %v3732 = vshrl.u32 %v3731, 7
    %v3733 = vsub.s32 0, %v3732
    %v3734 = vrot.slane %v128, %v3733
    %v3736 = vadd.f32 %v3728, %v3734
    %v3737 = vadd.f32 %v3729, %v3734
    %v3738 = vmax.f32 %v3736, 0.0
    %v3739 = vmax.f32 %v3737, 0.0
    %v3740 = vld [vmem:[%s8] sm:$0xf]
    %v3741 = vld [vmem:[%s8 + $0x4] sm:$0xf]
    %v3742 = vld [vmem:[%s8 + $0x8] sm:$0xf]
    %v3743 = vld [vmem:[%s8 + $0xc] sm:$0xf]
    %v3744 = vld [vmem:[%s9] sm:$0x1]
    %v3745 = vld [vmem:[%s10] sm:$0xf]
    %v3746 = vld [vmem:[%s10 + $0x4] sm:$0xf]
    %v3747 = vld [vmem:[%s10 + $0x8] sm:$0xf]
    %v3748 = vld [vmem:[%s10 + $0xc] sm:$0xf]
    %v3749 = vld [vmem:[%s11] sm:$0x1]
    %v3750 = vld [vmem:[%s12] sm:$0x3]
    %v3751 = vld [vmem:[%s13] sm:$0x1]
    %v3752 = vpack.c.bf16 %v3739, %v3738
    %v3754 = vlaneseq
    %v3755 = vshrl.u32 %v3754, 7
    %v3756 = vsub.s32 0, %v3755
    %v3757 = vrot.slane %v3744, %v3756
    %v3763 = vunpack.c.l.b16 %v3740
    %v3764 = vunpack.c.l.b16 %v3741
    %v3765 = vunpack.c.l.b16 %v3742
    %v3766 = vunpack.c.l.b16 %v3743
    %v3767 = vpack.c.b16 %v3764, %v3763
    %v3768 = vpack.c.b16 %v3766, %v3765
    %vm3771 = vcmask 261120
    %v3773 = vsel %vm3771, %v3752, 0
    %3775 = vmatprep.subr.bf16.mxu0 0
    %3776 = vmatpush1.bf16.msra.mxu0 0
    %3777 = vmatprep.subr.bf16.mxu0 0
    %3778 = vmatpush1.bf16.msra.mxu0 0
    %3779 = vmatprep.subr.bf16.mxu0 0
    %3780 = vmatpush1.bf16.msra.mxu0 0
    %3781 = vmatprep.subr.bf16.mxu0 0
    %3782 = vmatpush1.bf16.msra.mxu0 0
    %3783 = vmatprep.subr.bf16.mxu0 0
    %3784 = vmatpush1.bf16.msra.mxu0 0
    %3785 = vmatprep.subr.bf16.mxu0 0
    %3786 = vmatpush1.bf16.msra.mxu0 0
    %3787 = vmatprep.subr.bf16.mxu0 0
    %3788 = vmatpush1.bf16.msra.mxu0 %v3768
    %3789 = vmatprep.subr.bf16.mxu0 0
    %3790 = vmatpush1.bf16.msra.mxu0 %v3767
    %3791 = vmatprep.subr.bf16.mxu0 0
    %3792 = vmatpush2.bf16.msra.mxu0 0
    %3793 = vmatprep.subr.bf16.mxu0 0
    %3794 = vmatpush2.bf16.msra.mxu0 0
    %3795 = vmatprep.subr.bf16.mxu0 0
    %3796 = vmatpush2.bf16.msra.mxu0 0
    %3797 = vmatprep.subr.bf16.mxu0 0
    %3798 = vmatpush2.bf16.msra.mxu0 0
    %3799 = vmatprep.subr.bf16.mxu0 0
    %3800 = vmatpush2.bf16.msra.mxu0 0
    %3801 = vmatprep.subr.bf16.mxu0 0
    %3802 = vmatpush2.bf16.msra.mxu0 0
    %3803 = vmatprep.subr.bf16.mxu0 0
    %3804 = vmatpush2.bf16.msra.mxu0 0
    %3805 = vmatprep.subr.bf16.mxu0 0
    %3806 = vmatpush2.bf16.msra.mxu0 0
    %3807 = vmatprep.mubr.bf16.mxu0 0
    %3808 = vmatmul.mubr.bf16.gmra.mxu0 %v3773
    %v3809 = vpop.f32.mrf.mxu0
    %v3810 = vadd.f32 %v3757, %v3809
    %v3811 = vpop.f32.mrf.mxu0
    %v3812 = vpop.f32.mrf.mxu0
    %v3813 = vadd.f32 %v3757, %v3812
    %v3814 = vpop.f32.mrf.mxu0
    %3815 = vdwg.mxu0
    %v3817 = vlaneseq
    %v3818 = vshrl.u32 %v3817, 7
    %v3819 = vsub.s32 0, %v3818
    %v3820 = vrot.slane %v3749, %v3819
    %v3826 = vunpack.c.l.b16 %v3745
    %v3827 = vunpack.c.l.b16 %v3746
    %v3828 = vunpack.c.l.b16 %v3747
    %v3829 = vunpack.c.l.b16 %v3748
    %v3830 = vpack.c.b16 %v3827, %v3826
    %v3831 = vpack.c.b16 %v3829, %v3828
    %3834 = vmatprep.subr.bf16.mxu0 0
    %3835 = vmatpush1.bf16.msra.mxu0 0
    %3836 = vmatprep.subr.bf16.mxu0 0
    %3837 = vmatpush1.bf16.msra.mxu0 0
    %3838 = vmatprep.subr.bf16.mxu0 0
    %3839 = vmatpush1.bf16.msra.mxu0 0
    %3840 = vmatprep.subr.bf16.mxu0 0
    %3841 = vmatpush1.bf16.msra.mxu0 0
    %3842 = vmatprep.subr.bf16.mxu0 0
    %3843 = vmatpush1.bf16.msra.mxu0 0
    %3844 = vmatprep.subr.bf16.mxu0 0
    %3845 = vmatpush1.bf16.msra.mxu0 0
    %3846 = vmatprep.subr.bf16.mxu0 0
    %3847 = vmatpush1.bf16.msra.mxu0 %v3831
    %3848 = vmatprep.subr.bf16.mxu0 0
    %3849 = vmatpush1.bf16.msra.mxu0 %v3830
    %3850 = vmatprep.subr.bf16.mxu0 0
    %3851 = vmatpush2.bf16.msra.mxu0 0
    %3852 = vmatprep.subr.bf16.mxu0 0
    %3853 = vmatpush2.bf16.msra.mxu0 0
    %3854 = vmatprep.subr.bf16.mxu0 0
    %3855 = vmatpush2.bf16.msra.mxu0 0
    %3856 = vmatprep.subr.bf16.mxu0 0
    %3857 = vmatpush2.bf16.msra.mxu0 0
    %3858 = vmatprep.subr.bf16.mxu0 0
    %3859 = vmatpush2.bf16.msra.mxu0 0
    %3860 = vmatprep.subr.bf16.mxu0 0
    %3861 = vmatpush2.bf16.msra.mxu0 0
    %3862 = vmatprep.subr.bf16.mxu0 0
    %3863 = vmatpush2.bf16.msra.mxu0 0
    %3864 = vmatprep.subr.bf16.mxu0 0
    %3865 = vmatpush2.bf16.msra.mxu0 0
    %3866 = vmatprep.mubr.bf16.mxu0 0
    %3867 = vmatmul.mubr.bf16.gmra.mxu0 %v3773
    %v3868 = vpop.f32.mrf.mxu0
    %v3869 = vadd.f32 %v3820, %v3868
    %v3870 = vpop.f32.mrf.mxu0
    %v3871 = vpop.f32.mrf.mxu0
    %v3872 = vadd.f32 %v3820, %v3871
    %v3873 = vpop.f32.mrf.mxu0
    %3874 = vdwg.mxu0
    %v3877 = vcombine.high %v3869, %v3869
    %v3879 = vunpack.c.l.s4 1966171168
    %v3880 = vunpack.c.0.s8 %v3879
    %v3881 = vlaneseq
    %v3882 = vshrl.u32 %v3881, 7
    %v3883 = vsub.s32 %v3880, %v3882
    %v3884 = vrot.slane %v3869, %v3883
    %v3886 = vunpack.c.l.s4 1966171168
    %v3887 = vunpack.c.0.s8 %v3886
    %v3888 = vlaneseq
    %v3889 = vshrl.u32 %v3888, 7
    %v3890 = vsub.s32 %v3887, %v3889
    %v3891 = vrot.slane %v3877, %v3890
    %v3892 = vcombine.high %v3884, %v3884
    %v3893 = vcombine.high %v3891, %v3891
    %v3895 = vunpack.c.l.s4 1966171168
    %v3896 = vunpack.c.0.s8 %v3895
    %v3897 = vlaneseq
    %v3898 = vshrl.u32 %v3897, 7
    %v3899 = vsub.s32 %v3896, %v3898
    %v3900 = vrot.slane %v3884, %v3899
    %v3902 = vunpack.c.l.s4 1966171168
    %v3903 = vunpack.c.0.s8 %v3902
    %v3904 = vlaneseq
    %v3905 = vshrl.u32 %v3904, 7
    %v3906 = vsub.s32 %v3903, %v3905
    %v3907 = vrot.slane %v3891, %v3906
    %v3909 = vunpack.c.l.s4 1966171168
    %v3910 = vunpack.c.0.s8 %v3909
    %v3911 = vlaneseq
    %v3912 = vshrl.u32 %v3911, 7
    %v3913 = vsub.s32 %v3910, %v3912
    %v3914 = vrot.slane %v3892, %v3913
    %v3916 = vunpack.c.l.s4 1966171168
    %v3917 = vunpack.c.0.s8 %v3916
    %v3918 = vlaneseq
    %v3919 = vshrl.u32 %v3918, 7
    %v3920 = vsub.s32 %v3917, %v3919
    %v3921 = vrot.slane %v3893, %v3920
    %v3922 = vcombine.high %v3900, %v3900
    %v3923 = vcombine.high %v3907, %v3907
    %v3924 = vcombine.high %v3914, %v3914
    %v3925 = vcombine.high %v3921, %v3921
    %v3926 = vcombine.high %v3872, %v3872
    %v3928 = vunpack.c.l.s4 1966171168
    %v3929 = vunpack.c.0.s8 %v3928
    %v3930 = vlaneseq
    %v3931 = vshrl.u32 %v3930, 7
    %v3932 = vsub.s32 %v3929, %v3931
    %v3933 = vrot.slane %v3872, %v3932
    %v3935 = vunpack.c.l.s4 1966171168
    %v3936 = vunpack.c.0.s8 %v3935
    %v3937 = vlaneseq
    %v3938 = vshrl.u32 %v3937, 7
    %v3939 = vsub.s32 %v3936, %v3938
    %v3940 = vrot.slane %v3926, %v3939
    %v3941 = vcombine.high %v3933, %v3933
    %v3942 = vcombine.high %v3940, %v3940
    %v3944 = vunpack.c.l.s4 1966171168
    %v3945 = vunpack.c.0.s8 %v3944
    %v3946 = vlaneseq
    %v3947 = vshrl.u32 %v3946, 7
    %v3948 = vsub.s32 %v3945, %v3947
    %v3949 = vrot.slane %v3933, %v3948
    %v3951 = vunpack.c.l.s4 1966171168
    %v3952 = vunpack.c.0.s8 %v3951
    %v3953 = vlaneseq
    %v3954 = vshrl.u32 %v3953, 7
    %v3955 = vsub.s32 %v3952, %v3954
    %v3956 = vrot.slane %v3940, %v3955
    %v3958 = vunpack.c.l.s4 1966171168
    %v3959 = vunpack.c.0.s8 %v3958
    %v3960 = vlaneseq
    %v3961 = vshrl.u32 %v3960, 7
    %v3962 = vsub.s32 %v3959, %v3961
    %v3963 = vrot.slane %v3941, %v3962
    %v3965 = vunpack.c.l.s4 1966171168
    %v3966 = vunpack.c.0.s8 %v3965
    %v3967 = vlaneseq
    %v3968 = vshrl.u32 %v3967, 7
    %v3969 = vsub.s32 %v3966, %v3968
    %v3970 = vrot.slane %v3942, %v3969
    %v3971 = vcombine.high %v3949, %v3949
    %v3972 = vcombine.high %v3956, %v3956
    %v3973 = vcombine.high %v3963, %v3963
    %v3974 = vcombine.high %v3970, %v3970
    %v3975 = vlaneseq
    %v3976 = vshrl.u32 %v3975, 7
    %v3977 = vsub.s32 0, %v3976
    %v3978 = vrot.slane %v3900, %v3977
    %v3979 = vlaneseq
    %v3980 = vshrl.u32 %v3979, 7
    %v3981 = vsub.s32 0, %v3980
    %v3982 = vrot.slane %v3914, %v3981
    %v3983 = vlaneseq
    %v3984 = vshrl.u32 %v3983, 7
    %v3985 = vsub.s32 0, %v3984
    %v3986 = vrot.slane %v3922, %v3985
    %v3987 = vlaneseq
    %v3988 = vshrl.u32 %v3987, 7
    %v3989 = vsub.s32 0, %v3988
    %v3990 = vrot.slane %v3924, %v3989
    %v3991 = vlaneseq
    %v3992 = vshrl.u32 %v3991, 7
    %v3993 = vsub.s32 0, %v3992
    %v3994 = vrot.slane %v3907, %v3993
    %v3995 = vlaneseq
    %v3996 = vshrl.u32 %v3995, 7
    %v3997 = vsub.s32 0, %v3996
    %v3998 = vrot.slane %v3921, %v3997
    %v3999 = vlaneseq
    %v4000 = vshrl.u32 %v3999, 7
    %v4001 = vsub.s32 0, %v4000
    %v4002 = vrot.slane %v3923, %v4001
    %v4003 = vlaneseq
    %v4004 = vshrl.u32 %v4003, 7
    %v4005 = vsub.s32 0, %v4004
    %v4006 = vrot.slane %v3925, %v4005
    %v4007 = vlaneseq
    %v4008 = vshrl.u32 %v4007, 7
    %v4009 = vsub.s32 0, %v4008
    %v4010 = vrot.slane %v3949, %v4009
    %v4011 = vlaneseq
    %v4012 = vshrl.u32 %v4011, 7
    %v4013 = vsub.s32 0, %v4012
    %v4014 = vrot.slane %v3963, %v4013
    %v4015 = vlaneseq
    %v4016 = vshrl.u32 %v4015, 7
    %v4017 = vsub.s32 0, %v4016
    %v4018 = vrot.slane %v3971, %v4017
    %v4019 = vlaneseq
    %v4020 = vshrl.u32 %v4019, 7
    %v4021 = vsub.s32 0, %v4020
    %v4022 = vrot.slane %v3973, %v4021
    %v4023 = vlaneseq
    %v4024 = vshrl.u32 %v4023, 7
    %v4025 = vsub.s32 0, %v4024
    %v4026 = vrot.slane %v3956, %v4025
    %v4027 = vlaneseq
    %v4028 = vshrl.u32 %v4027, 7
    %v4029 = vsub.s32 0, %v4028
    %v4030 = vrot.slane %v3970, %v4029
    %v4031 = vlaneseq
    %v4032 = vshrl.u32 %v4031, 7
    %v4033 = vsub.s32 0, %v4032
    %v4034 = vrot.slane %v3972, %v4033
    %v4035 = vlaneseq
    %v4036 = vshrl.u32 %v4035, 7
    %v4037 = vsub.s32 0, %v4036
    %v4038 = vrot.slane %v3974, %v4037
    %v4055 = vadd.f32 %v3978, %v3810
    %v4056 = vadd.f32 %v3978, %v3813
    %v4057 = vadd.f32 %v3982, %v3810
    %v4058 = vadd.f32 %v3982, %v3813
    %v4059 = vadd.f32 %v3986, %v3810
    %v4060 = vadd.f32 %v3986, %v3813
    %v4061 = vadd.f32 %v3990, %v3810
    %v4062 = vadd.f32 %v3990, %v3813
    %v4063 = vadd.f32 %v3994, %v3810
    %v4064 = vadd.f32 %v3994, %v3813
    %v4065 = vadd.f32 %v3998, %v3810
    %v4066 = vadd.f32 %v3998, %v3813
    %v4067 = vadd.f32 %v4002, %v3810
    %v4068 = vadd.f32 %v4002, %v3813
    %v4069 = vadd.f32 %v4006, %v3810
    %v4070 = vadd.f32 %v4006, %v3813
    %v4071 = vadd.f32 %v4010, %v3810
    %v4072 = vadd.f32 %v4010, %v3813
    %v4073 = vadd.f32 %v4014, %v3810
    %v4074 = vadd.f32 %v4014, %v3813
    %v4075 = vadd.f32 %v4018, %v3810
    %v4076 = vadd.f32 %v4018, %v3813
    %v4077 = vadd.f32 %v4022, %v3810
    %v4078 = vadd.f32 %v4022, %v3813
    %v4079 = vadd.f32 %v4026, %v3810
    %v4080 = vadd.f32 %v4026, %v3813
    %v4081 = vadd.f32 %v4030, %v3810
    %v4082 = vadd.f32 %v4030, %v3813
    %v4083 = vadd.f32 %v4034, %v3810
    %v4084 = vadd.f32 %v4034, %v3813
    %v4085 = vadd.f32 %v4038, %v3810
    %v4086 = vadd.f32 %v4038, %v3813
    %vm4087 = vcmp.gt.f32.partialorder %v4055, 0.0
    %vm4088 = vcmp.gt.f32.partialorder %v4056, 0.0
    %vm4089 = vcmp.gt.f32.partialorder %v4057, 0.0
    %vm4090 = vcmp.gt.f32.partialorder %v4058, 0.0
    %vm4091 = vcmp.gt.f32.partialorder %v4059, 0.0
    %vm4092 = vcmp.gt.f32.partialorder %v4060, 0.0
    %vm4093 = vcmp.gt.f32.partialorder %v4061, 0.0
    %vm4094 = vcmp.gt.f32.partialorder %v4062, 0.0
    %vm4095 = vcmp.gt.f32.partialorder %v4063, 0.0
    %vm4096 = vcmp.gt.f32.partialorder %v4064, 0.0
    %vm4097 = vcmp.gt.f32.partialorder %v4065, 0.0
    %vm4098 = vcmp.gt.f32.partialorder %v4066, 0.0
    %vm4099 = vcmp.gt.f32.partialorder %v4067, 0.0
    %vm4100 = vcmp.gt.f32.partialorder %v4068, 0.0
    %vm4101 = vcmp.gt.f32.partialorder %v4069, 0.0
    %vm4102 = vcmp.gt.f32.partialorder %v4070, 0.0
    %vm4103 = vcmp.gt.f32.partialorder %v4071, 0.0
    %vm4104 = vcmp.gt.f32.partialorder %v4072, 0.0
    %vm4105 = vcmp.gt.f32.partialorder %v4073, 0.0
    %vm4106 = vcmp.gt.f32.partialorder %v4074, 0.0
    %vm4107 = vcmp.gt.f32.partialorder %v4075, 0.0
    %vm4108 = vcmp.gt.f32.partialorder %v4076, 0.0
    %vm4109 = vcmp.gt.f32.partialorder %v4077, 0.0
    %vm4110 = vcmp.gt.f32.partialorder %v4078, 0.0
    %vm4111 = vcmp.gt.f32.partialorder %v4079, 0.0
    %vm4112 = vcmp.gt.f32.partialorder %v4080, 0.0
    %vm4113 = vcmp.gt.f32.partialorder %v4081, 0.0
    %vm4114 = vcmp.gt.f32.partialorder %v4082, 0.0
    %vm4115 = vcmp.gt.f32.partialorder %v4083, 0.0
    %vm4116 = vcmp.gt.f32.partialorder %v4084, 0.0
    %vm4117 = vcmp.gt.f32.partialorder %v4085, 0.0
    %vm4118 = vcmp.gt.f32.partialorder %v4086, 0.0
    %v4119 = vmul.f32 %v4055, 0.2
    %v4120 = vmul.f32 %v4056, 0.2
    %v4121 = vmul.f32 %v4057, 0.2
    %v4122 = vmul.f32 %v4058, 0.2
    %v4123 = vmul.f32 %v4059, 0.2
    %v4124 = vmul.f32 %v4060, 0.2
    %v4125 = vmul.f32 %v4061, 0.2
    %v4126 = vmul.f32 %v4062, 0.2
    %v4127 = vmul.f32 %v4063, 0.2
    %v4128 = vmul.f32 %v4064, 0.2
    %v4129 = vmul.f32 %v4065, 0.2
    %v4130 = vmul.f32 %v4066, 0.2
    %v4131 = vmul.f32 %v4067, 0.2
    %v4132 = vmul.f32 %v4068, 0.2
    %v4133 = vmul.f32 %v4069, 0.2
    %v4134 = vmul.f32 %v4070, 0.2
    %v4135 = vmul.f32 %v4071, 0.2
    %v4136 = vmul.f32 %v4072, 0.2
    %v4137 = vmul.f32 %v4073, 0.2
    %v4138 = vmul.f32 %v4074, 0.2
    %v4139 = vmul.f32 %v4075, 0.2
    %v4140 = vmul.f32 %v4076, 0.2
    %v4141 = vmul.f32 %v4077, 0.2
    %v4142 = vmul.f32 %v4078, 0.2
    %v4143 = vmul.f32 %v4079, 0.2
    %v4144 = vmul.f32 %v4080, 0.2
    %v4145 = vmul.f32 %v4081, 0.2
    %v4146 = vmul.f32 %v4082, 0.2
    %v4147 = vmul.f32 %v4083, 0.2
    %v4148 = vmul.f32 %v4084, 0.2
    %v4149 = vmul.f32 %v4085, 0.2
    %v4150 = vmul.f32 %v4086, 0.2
    %v4151 = vsel %vm4087, %v4055, %v4119
    %v4152 = vsel %vm4088, %v4056, %v4120
    %v4153 = vsel %vm4089, %v4057, %v4121
    %v4154 = vsel %vm4090, %v4058, %v4122
    %v4155 = vsel %vm4091, %v4059, %v4123
    %v4156 = vsel %vm4092, %v4060, %v4124
    %v4157 = vsel %vm4093, %v4061, %v4125
    %v4158 = vsel %vm4094, %v4062, %v4126
    %v4159 = vsel %vm4095, %v4063, %v4127
    %v4160 = vsel %vm4096, %v4064, %v4128
    %v4161 = vsel %vm4097, %v4065, %v4129
    %v4162 = vsel %vm4098, %v4066, %v4130
    %v4163 = vsel %vm4099, %v4067, %v4131
    %v4164 = vsel %vm4100, %v4068, %v4132
    %v4165 = vsel %vm4101, %v4069, %v4133
    %v4166 = vsel %vm4102, %v4070, %v4134
    %v4167 = vsel %vm4103, %v4071, %v4135
    %v4168 = vsel %vm4104, %v4072, %v4136
    %v4169 = vsel %vm4105, %v4073, %v4137
    %v4170 = vsel %vm4106, %v4074, %v4138
    %v4171 = vsel %vm4107, %v4075, %v4139
    %v4172 = vsel %vm4108, %v4076, %v4140
    %v4173 = vsel %vm4109, %v4077, %v4141
    %v4174 = vsel %vm4110, %v4078, %v4142
    %v4175 = vsel %vm4111, %v4079, %v4143
    %v4176 = vsel %vm4112, %v4080, %v4144
    %v4177 = vsel %vm4113, %v4081, %v4145
    %v4178 = vsel %vm4114, %v4082, %v4146
    %v4179 = vsel %vm4115, %v4083, %v4147
    %v4180 = vsel %vm4116, %v4084, %v4148
    %v4181 = vsel %vm4117, %v4085, %v4149
    %v4182 = vsel %vm4118, %v4086, %v4150
    %v4183 = vlaneseq
    %v4184 = vshrl.u32 %v4183, 7
    %v4185 = vsub.s32 0, %v4184
    %v4186 = vrot.slane %v3750, %v4185
    %v4187 = vmul.f32 %v4151, %v4186
    %v4188 = vmul.f32 %v4152, %v4186
    %v4189 = vmul.f32 %v4153, %v4186
    %v4190 = vmul.f32 %v4154, %v4186
    %v4191 = vmul.f32 %v4155, %v4186
    %v4192 = vmul.f32 %v4156, %v4186
    %v4193 = vmul.f32 %v4157, %v4186
    %v4194 = vmul.f32 %v4158, %v4186
    %v4195 = vmul.f32 %v4159, %v4186
    %v4196 = vmul.f32 %v4160, %v4186
    %v4197 = vmul.f32 %v4161, %v4186
    %v4198 = vmul.f32 %v4162, %v4186
    %v4199 = vmul.f32 %v4163, %v4186
    %v4200 = vmul.f32 %v4164, %v4186
    %v4201 = vmul.f32 %v4165, %v4186
    %v4202 = vmul.f32 %v4166, %v4186
    %v4203 = vmul.f32 %v4167, %v4186
    %v4204 = vmul.f32 %v4168, %v4186
    %v4205 = vmul.f32 %v4169, %v4186
    %v4206 = vmul.f32 %v4170, %v4186
    %v4207 = vmul.f32 %v4171, %v4186
    %v4208 = vmul.f32 %v4172, %v4186
    %v4209 = vmul.f32 %v4173, %v4186
    %v4210 = vmul.f32 %v4174, %v4186
    %v4211 = vmul.f32 %v4175, %v4186
    %v4212 = vmul.f32 %v4176, %v4186
    %v4213 = vmul.f32 %v4177, %v4186
    %v4214 = vmul.f32 %v4178, %v4186
    %v4215 = vmul.f32 %v4179, %v4186
    %v4216 = vmul.f32 %v4180, %v4186
    %v4217 = vmul.f32 %v4181, %v4186
    %v4218 = vmul.f32 %v4182, %v4186
    %v4219 = vsel %vm579, %v4187, 0.0
    %4220 = vadd.xlane.f32.xlu0 %v4219
    %v4221 = vpop.xlane.xlu0 %4220
    %v4222 = vsel %vm579, %v4188, 0.0
    %4223 = vadd.xlane.f32.xlu0 %v4222
    %v4224 = vpop.xlane.xlu0 %4223
    %v4225 = vsel %vm579, %v4189, 0.0
    %4226 = vadd.xlane.f32.xlu0 %v4225
    %v4227 = vpop.xlane.xlu0 %4226
    %v4228 = vsel %vm579, %v4190, 0.0
    %4229 = vadd.xlane.f32.xlu0 %v4228
    %v4230 = vpop.xlane.xlu0 %4229
    %v4231 = vsel %vm579, %v4191, 0.0
    %4232 = vadd.xlane.f32.xlu0 %v4231
    %v4233 = vpop.xlane.xlu0 %4232
    %v4234 = vsel %vm579, %v4192, 0.0
    %4235 = vadd.xlane.f32.xlu0 %v4234
    %v4236 = vpop.xlane.xlu0 %4235
    %v4237 = vsel %vm579, %v4193, 0.0
    %4238 = vadd.xlane.f32.xlu0 %v4237
    %v4239 = vpop.xlane.xlu0 %4238
    %v4240 = vsel %vm579, %v4194, 0.0
    %4241 = vadd.xlane.f32.xlu0 %v4240
    %v4242 = vpop.xlane.xlu0 %4241
    %v4243 = vsel %vm579, %v4195, 0.0
    %4244 = vadd.xlane.f32.xlu0 %v4243
    %v4245 = vpop.xlane.xlu0 %4244
    %v4246 = vsel %vm579, %v4196, 0.0
    %4247 = vadd.xlane.f32.xlu0 %v4246
    %v4248 = vpop.xlane.xlu0 %4247
    %v4249 = vsel %vm579, %v4197, 0.0
    %4250 = vadd.xlane.f32.xlu0 %v4249
    %v4251 = vpop.xlane.xlu0 %4250
    %v4252 = vsel %vm579, %v4198, 0.0
    %4253 = vadd.xlane.f32.xlu0 %v4252
    %v4254 = vpop.xlane.xlu0 %4253
    %v4255 = vsel %vm579, %v4199, 0.0
    %4256 = vadd.xlane.f32.xlu0 %v4255
    %v4257 = vpop.xlane.xlu0 %4256
    %v4258 = vsel %vm579, %v4200, 0.0
    %4259 = vadd.xlane.f32.xlu0 %v4258
    %v4260 = vpop.xlane.xlu0 %4259
    %v4261 = vsel %vm579, %v4201, 0.0
    %4262 = vadd.xlane.f32.xlu0 %v4261
    %v4263 = vpop.xlane.xlu0 %4262
    %v4264 = vsel %vm579, %v4202, 0.0
    %4265 = vadd.xlane.f32.xlu0 %v4264
    %v4266 = vpop.xlane.xlu0 %4265
    %v4267 = vsel %vm579, %v4203, 0.0
    %4268 = vadd.xlane.f32.xlu0 %v4267
    %v4269 = vpop.xlane.xlu0 %4268
    %v4270 = vsel %vm579, %v4204, 0.0
    %4271 = vadd.xlane.f32.xlu0 %v4270
    %v4272 = vpop.xlane.xlu0 %4271
    %v4273 = vsel %vm579, %v4205, 0.0
    %4274 = vadd.xlane.f32.xlu0 %v4273
    %v4275 = vpop.xlane.xlu0 %4274
    %v4276 = vsel %vm579, %v4206, 0.0
    %4277 = vadd.xlane.f32.xlu0 %v4276
    %v4278 = vpop.xlane.xlu0 %4277
    %v4279 = vsel %vm579, %v4207, 0.0
    %4280 = vadd.xlane.f32.xlu0 %v4279
    %v4281 = vpop.xlane.xlu0 %4280
    %v4282 = vsel %vm579, %v4208, 0.0
    %4283 = vadd.xlane.f32.xlu0 %v4282
    %v4284 = vpop.xlane.xlu0 %4283
    %v4285 = vsel %vm579, %v4209, 0.0
    %4286 = vadd.xlane.f32.xlu0 %v4285
    %v4287 = vpop.xlane.xlu0 %4286
    %v4288 = vsel %vm579, %v4210, 0.0
    %4289 = vadd.xlane.f32.xlu0 %v4288
    %v4290 = vpop.xlane.xlu0 %4289
    %v4291 = vsel %vm579, %v4211, 0.0
    %4292 = vadd.xlane.f32.xlu0 %v4291
    %v4293 = vpop.xlane.xlu0 %4292
    %v4294 = vsel %vm579, %v4212, 0.0
    %4295 = vadd.xlane.f32.xlu0 %v4294
    %v4296 = vpop.xlane.xlu0 %4295
    %v4297 = vsel %vm579, %v4213, 0.0
    %4298 = vadd.xlane.f32.xlu0 %v4297
    %v4299 = vpop.xlane.xlu0 %4298
    %v4300 = vsel %vm579, %v4214, 0.0
    %4301 = vadd.xlane.f32.xlu0 %v4300
    %v4302 = vpop.xlane.xlu0 %4301
    %v4303 = vsel %vm579, %v4215, 0.0
    %4304 = vadd.xlane.f32.xlu0 %v4303
    %v4305 = vpop.xlane.xlu0 %4304
    %v4306 = vsel %vm579, %v4216, 0.0
    %4307 = vadd.xlane.f32.xlu0 %v4306
    %v4308 = vpop.xlane.xlu0 %4307
    %v4309 = vsel %vm579, %v4217, 0.0
    %4310 = vadd.xlane.f32.xlu0 %v4309
    %v4311 = vpop.xlane.xlu0 %4310
    %v4312 = vsel %vm579, %v4218, 0.0
    %4313 = vadd.xlane.f32.xlu0 %v4312
    %v4314 = vpop.xlane.xlu0 %4313
    %v4315 = vadd.f32 %v4221, %v684
    %v4316 = vadd.f32 %v4224, %v688
    %v4317 = vadd.f32 %v4227, %v695
    %v4318 = vadd.f32 %v4230, %v699
    %v4319 = vadd.f32 %v4233, %v706
    %v4320 = vadd.f32 %v4236, %v710
    %v4321 = vadd.f32 %v4239, %v717
    %v4322 = vadd.f32 %v4242, %v721
    %v4323 = vadd.f32 %v4245, %v728
    %v4324 = vadd.f32 %v4248, %v732
    %v4325 = vadd.f32 %v4251, %v739
    %v4326 = vadd.f32 %v4254, %v743
    %v4327 = vadd.f32 %v4257, %v750
    %v4328 = vadd.f32 %v4260, %v754
    %v4329 = vadd.f32 %v4263, %v761
    %v4330 = vadd.f32 %v4266, %v765
    %v4331 = vadd.f32 %v4269, %v772
    %v4332 = vadd.f32 %v4272, %v776
    %v4333 = vadd.f32 %v4275, %v783
    %v4334 = vadd.f32 %v4278, %v787
    %v4335 = vadd.f32 %v4281, %v794
    %v4336 = vadd.f32 %v4284, %v798
    %v4337 = vadd.f32 %v4287, %v805
    %v4338 = vadd.f32 %v4290, %v809
    %v4339 = vadd.f32 %v4293, %v816
    %v4340 = vadd.f32 %v4296, %v820
    %v4341 = vadd.f32 %v4299, %v827
    %v4342 = vadd.f32 %v4302, %v831
    %v4343 = vadd.f32 %v4305, %v838
    %v4344 = vadd.f32 %v4308, %v842
    %v4345 = vadd.f32 %v4311, %v849
    %v4346 = vadd.f32 %v4314, %v853
    %4379 = vset.pattern.permute.xlu0 0
    %4380 = vperm.xlu0 %4379, %v4315
    %v4381 = vpop.permute.xlu0 %4380
    %4382 = vset.pattern.permute.xlu0 0
    %4383 = vperm.xlu0 %4382, %v4316
    %v4384 = vpop.permute.xlu0 %4383
    %4385 = vset.pattern.permute.xlu0 0
    %4386 = vperm.xlu0 %4385, %v4317
    %v4387 = vpop.permute.xlu0 %4386
    %4388 = vset.pattern.permute.xlu0 0
    %4389 = vperm.xlu0 %4388, %v4318
    %v4390 = vpop.permute.xlu0 %4389
    %4391 = vset.pattern.permute.xlu0 0
    %4392 = vperm.xlu0 %4391, %v4319
    %v4393 = vpop.permute.xlu0 %4392
    %4394 = vset.pattern.permute.xlu0 0
    %4395 = vperm.xlu0 %4394, %v4320
    %v4396 = vpop.permute.xlu0 %4395
    %4397 = vset.pattern.permute.xlu0 0
    %4398 = vperm.xlu0 %4397, %v4321
    %v4399 = vpop.permute.xlu0 %4398
    %4400 = vset.pattern.permute.xlu0 0
    %4401 = vperm.xlu0 %4400, %v4322
    %v4402 = vpop.permute.xlu0 %4401
    %4403 = vset.pattern.permute.xlu0 0
    %4404 = vperm.xlu0 %4403, %v4323
    %v4405 = vpop.permute.xlu0 %4404
    %4406 = vset.pattern.permute.xlu0 0
    %4407 = vperm.xlu0 %4406, %v4324
    %v4408 = vpop.permute.xlu0 %4407
    %4409 = vset.pattern.permute.xlu0 0
    %4410 = vperm.xlu0 %4409, %v4325
    %v4411 = vpop.permute.xlu0 %4410
    %4412 = vset.pattern.permute.xlu0 0
    %4413 = vperm.xlu0 %4412, %v4326
    %v4414 = vpop.permute.xlu0 %4413
    %4415 = vset.pattern.permute.xlu0 0
    %4416 = vperm.xlu0 %4415, %v4327
    %v4417 = vpop.permute.xlu0 %4416
    %4418 = vset.pattern.permute.xlu0 0
    %4419 = vperm.xlu0 %4418, %v4328
    %v4420 = vpop.permute.xlu0 %4419
    %4421 = vset.pattern.permute.xlu0 0
    %4422 = vperm.xlu0 %4421, %v4329
    %v4423 = vpop.permute.xlu0 %4422
    %4424 = vset.pattern.permute.xlu0 0
    %4425 = vperm.xlu0 %4424, %v4330
    %v4426 = vpop.permute.xlu0 %4425
    %4427 = vset.pattern.permute.xlu0 0
    %4428 = vperm.xlu0 %4427, %v4331
    %v4429 = vpop.permute.xlu0 %4428
    %4430 = vset.pattern.permute.xlu0 0
    %4431 = vperm.xlu0 %4430, %v4332
    %v4432 = vpop.permute.xlu0 %4431
    %4433 = vset.pattern.permute.xlu0 0
    %4434 = vperm.xlu0 %4433, %v4333
    %v4435 = vpop.permute.xlu0 %4434
    %4436 = vset.pattern.permute.xlu0 0
    %4437 = vperm.xlu0 %4436, %v4334
    %v4438 = vpop.permute.xlu0 %4437
    %4439 = vset.pattern.permute.xlu0 0
    %4440 = vperm.xlu0 %4439, %v4335
    %v4441 = vpop.permute.xlu0 %4440
    %4442 = vset.pattern.permute.xlu0 0
    %4443 = vperm.xlu0 %4442, %v4336
    %v4444 = vpop.permute.xlu0 %4443
    %4445 = vset.pattern.permute.xlu0 0
    %4446 = vperm.xlu0 %4445, %v4337
    %v4447 = vpop.permute.xlu0 %4446
    %4448 = vset.pattern.permute.xlu0 0
    %4449 = vperm.xlu0 %4448, %v4338
    %v4450 = vpop.permute.xlu0 %4449
    %4451 = vset.pattern.permute.xlu0 0
    %4452 = vperm.xlu0 %4451, %v4339
    %v4453 = vpop.permute.xlu0 %4452
    %4454 = vset.pattern.permute.xlu0 0
    %4455 = vperm.xlu0 %4454, %v4340
    %v4456 = vpop.permute.xlu0 %4455
    %4457 = vset.pattern.permute.xlu0 0
    %4458 = vperm.xlu0 %4457, %v4341
    %v4459 = vpop.permute.xlu0 %4458
    %4460 = vset.pattern.permute.xlu0 0
    %4461 = vperm.xlu0 %4460, %v4342
    %v4462 = vpop.permute.xlu0 %4461
    %4463 = vset.pattern.permute.xlu0 0
    %4464 = vperm.xlu0 %4463, %v4343
    %v4465 = vpop.permute.xlu0 %4464
    %4466 = vset.pattern.permute.xlu0 0
    %4467 = vperm.xlu0 %4466, %v4344
    %v4468 = vpop.permute.xlu0 %4467
    %4469 = vset.pattern.permute.xlu0 0
    %4470 = vperm.xlu0 %4469, %v4345
    %v4471 = vpop.permute.xlu0 %4470
    %4472 = vset.pattern.permute.xlu0 0
    %4473 = vperm.xlu0 %4472, %v4346
    %v4474 = vpop.permute.xlu0 %4473
    %v4475 = vlaneseq
    %v4476 = vshrl.u32 %v4475, 7
    %v4477 = vsub.s32 %v1047, %v4476
    %v4478 = vrot.slane %v4381, %v4477
    %v4479 = vlaneseq
    %v4480 = vshrl.u32 %v4479, 7
    %v4481 = vsub.s32 %v1052, %v4480
    %v4482 = vrot.slane %v4384, %v4481
    %v4483 = vsel %vm1057, %v4482, %v4478
    %v4484 = vlaneseq
    %v4485 = vshrl.u32 %v4484, 7
    %v4486 = vsub.s32 %v1047, %v4485
    %v4487 = vrot.slane %v4387, %v4486
    %v4488 = vlaneseq
    %v4489 = vshrl.u32 %v4488, 7
    %v4490 = vsub.s32 %v1052, %v4489
    %v4491 = vrot.slane %v4390, %v4490
    %v4492 = vsel %vm1057, %v4491, %v4487
    %v4493 = vlaneseq
    %v4494 = vshrl.u32 %v4493, 7
    %v4495 = vsub.s32 %v1047, %v4494
    %v4496 = vrot.slane %v4393, %v4495
    %v4497 = vlaneseq
    %v4498 = vshrl.u32 %v4497, 7
    %v4499 = vsub.s32 %v1052, %v4498
    %v4500 = vrot.slane %v4396, %v4499
    %v4501 = vsel %vm1057, %v4500, %v4496
    %v4502 = vlaneseq
    %v4503 = vshrl.u32 %v4502, 7
    %v4504 = vsub.s32 %v1047, %v4503
    %v4505 = vrot.slane %v4399, %v4504
    %v4506 = vlaneseq
    %v4507 = vshrl.u32 %v4506, 7
    %v4508 = vsub.s32 %v1052, %v4507
    %v4509 = vrot.slane %v4402, %v4508
    %v4510 = vsel %vm1057, %v4509, %v4505
    %v4511 = vlaneseq
    %v4512 = vshrl.u32 %v4511, 7
    %v4513 = vsub.s32 %v1047, %v4512
    %v4514 = vrot.slane %v4405, %v4513
    %v4515 = vlaneseq
    %v4516 = vshrl.u32 %v4515, 7
    %v4517 = vsub.s32 %v1052, %v4516
    %v4518 = vrot.slane %v4408, %v4517
    %v4519 = vsel %vm1057, %v4518, %v4514
    %v4520 = vlaneseq
    %v4521 = vshrl.u32 %v4520, 7
    %v4522 = vsub.s32 %v1047, %v4521
    %v4523 = vrot.slane %v4411, %v4522
    %v4524 = vlaneseq
    %v4525 = vshrl.u32 %v4524, 7
    %v4526 = vsub.s32 %v1052, %v4525
    %v4527 = vrot.slane %v4414, %v4526
    %v4528 = vsel %vm1057, %v4527, %v4523
    %v4529 = vlaneseq
    %v4530 = vshrl.u32 %v4529, 7
    %v4531 = vsub.s32 %v1047, %v4530
    %v4532 = vrot.slane %v4417, %v4531
    %v4533 = vlaneseq
    %v4534 = vshrl.u32 %v4533, 7
    %v4535 = vsub.s32 %v1052, %v4534
    %v4536 = vrot.slane %v4420, %v4535
    %v4537 = vsel %vm1057, %v4536, %v4532
    %v4538 = vlaneseq
    %v4539 = vshrl.u32 %v4538, 7
    %v4540 = vsub.s32 %v1047, %v4539
    %v4541 = vrot.slane %v4423, %v4540
    %v4542 = vlaneseq
    %v4543 = vshrl.u32 %v4542, 7
    %v4544 = vsub.s32 %v1052, %v4543
    %v4545 = vrot.slane %v4426, %v4544
    %v4546 = vsel %vm1057, %v4545, %v4541
    %v4547 = vlaneseq
    %v4548 = vshrl.u32 %v4547, 7
    %v4549 = vsub.s32 %v1047, %v4548
    %v4550 = vrot.slane %v4429, %v4549
    %v4551 = vlaneseq
    %v4552 = vshrl.u32 %v4551, 7
    %v4553 = vsub.s32 %v1052, %v4552
    %v4554 = vrot.slane %v4432, %v4553
    %v4555 = vsel %vm1057, %v4554, %v4550
    %v4556 = vlaneseq
    %v4557 = vshrl.u32 %v4556, 7
    %v4558 = vsub.s32 %v1047, %v4557
    %v4559 = vrot.slane %v4435, %v4558
    %v4560 = vlaneseq
    %v4561 = vshrl.u32 %v4560, 7
    %v4562 = vsub.s32 %v1052, %v4561
    %v4563 = vrot.slane %v4438, %v4562
    %v4564 = vsel %vm1057, %v4563, %v4559
    %v4565 = vlaneseq
    %v4566 = vshrl.u32 %v4565, 7
    %v4567 = vsub.s32 %v1047, %v4566
    %v4568 = vrot.slane %v4441, %v4567
    %v4569 = vlaneseq
    %v4570 = vshrl.u32 %v4569, 7
    %v4571 = vsub.s32 %v1052, %v4570
    %v4572 = vrot.slane %v4444, %v4571
    %v4573 = vsel %vm1057, %v4572, %v4568
    %v4574 = vlaneseq
    %v4575 = vshrl.u32 %v4574, 7
    %v4576 = vsub.s32 %v1047, %v4575
    %v4577 = vrot.slane %v4447, %v4576
    %v4578 = vlaneseq
    %v4579 = vshrl.u32 %v4578, 7
    %v4580 = vsub.s32 %v1052, %v4579
    %v4581 = vrot.slane %v4450, %v4580
    %v4582 = vsel %vm1057, %v4581, %v4577
    %v4583 = vlaneseq
    %v4584 = vshrl.u32 %v4583, 7
    %v4585 = vsub.s32 %v1047, %v4584
    %v4586 = vrot.slane %v4453, %v4585
    %v4587 = vlaneseq
    %v4588 = vshrl.u32 %v4587, 7
    %v4589 = vsub.s32 %v1052, %v4588
    %v4590 = vrot.slane %v4456, %v4589
    %v4591 = vsel %vm1057, %v4590, %v4586
    %v4592 = vlaneseq
    %v4593 = vshrl.u32 %v4592, 7
    %v4594 = vsub.s32 %v1047, %v4593
    %v4595 = vrot.slane %v4459, %v4594
    %v4596 = vlaneseq
    %v4597 = vshrl.u32 %v4596, 7
    %v4598 = vsub.s32 %v1052, %v4597
    %v4599 = vrot.slane %v4462, %v4598
    %v4600 = vsel %vm1057, %v4599, %v4595
    %v4601 = vlaneseq
    %v4602 = vshrl.u32 %v4601, 7
    %v4603 = vsub.s32 %v1047, %v4602
    %v4604 = vrot.slane %v4465, %v4603
    %v4605 = vlaneseq
    %v4606 = vshrl.u32 %v4605, 7
    %v4607 = vsub.s32 %v1052, %v4606
    %v4608 = vrot.slane %v4468, %v4607
    %v4609 = vsel %vm1057, %v4608, %v4604
    %v4610 = vlaneseq
    %v4611 = vshrl.u32 %v4610, 7
    %v4612 = vsub.s32 %v1047, %v4611
    %v4613 = vrot.slane %v4471, %v4612
    %v4614 = vlaneseq
    %v4615 = vshrl.u32 %v4614, 7
    %v4616 = vsub.s32 %v1052, %v4615
    %v4617 = vrot.slane %v4474, %v4616
    %v4618 = vsel %vm1057, %v4617, %v4613
    %v4619 = vsel %vm1194, %v4492, %v4483
    %v4620 = vsel %vm1196, %v4501, %v4619
    %v4621 = vsel %vm1198, %v4510, %v4620
    %v4622 = vsel %vm1200, %v4519, %v4621
    %v4623 = vsel %vm1202, %v4528, %v4622
    %v4624 = vsel %vm1204, %v4537, %v4623
    %v4625 = vsel %vm1206, %v4546, %v4624
    %v4626 = vsel %vm1194, %v4564, %v4555
    %v4627 = vsel %vm1196, %v4573, %v4626
    %v4628 = vsel %vm1198, %v4582, %v4627
    %v4629 = vsel %vm1200, %v4591, %v4628
    %v4630 = vsel %vm1202, %v4600, %v4629
    %v4631 = vsel %vm1204, %v4609, %v4630
    %v4632 = vsel %vm1206, %v4618, %v4631
    %v4635 = vsel %vm579, %v4625, -inf
    %4636 = vmax.xlane.f32.xlu0 %v4635
    %v4637 = vpop.xlane.xlu0 %4636
    %v4638 = vsel %vm579, %v4632, -inf
    %4639 = vmax.xlane.f32.xlu0 %v4638
    %v4640 = vpop.xlane.xlu0 %4639
    %v4643 = vlaneseq
    %v4644 = vshrl.u32 %v4643, 7
    %v4645 = vsub.s32 0, %v4644
    %v4646 = vrot.slane %v4637, %v4645
    %v4647 = vlaneseq
    %v4648 = vshrl.u32 %v4647, 7
    %v4649 = vsub.s32 1, %v4648
    %v4650 = vrot.slane %v4637, %v4649
    %v4651 = vlaneseq
    %v4652 = vshrl.u32 %v4651, 7
    %v4653 = vsub.s32 2, %v4652
    %v4654 = vrot.slane %v4637, %v4653
    %v4655 = vlaneseq
    %v4656 = vshrl.u32 %v4655, 7
    %v4657 = vsub.s32 3, %v4656
    %v4658 = vrot.slane %v4637, %v4657
    %v4659 = vlaneseq
    %v4660 = vshrl.u32 %v4659, 7
    %v4661 = vsub.s32 4, %v4660
    %v4662 = vrot.slane %v4637, %v4661
    %v4663 = vlaneseq
    %v4664 = vshrl.u32 %v4663, 7
    %v4665 = vsub.s32 5, %v4664
    %v4666 = vrot.slane %v4637, %v4665
    %v4667 = vlaneseq
    %v4668 = vshrl.u32 %v4667, 7
    %v4669 = vsub.s32 6, %v4668
    %v4670 = vrot.slane %v4637, %v4669
    %v4671 = vlaneseq
    %v4672 = vshrl.u32 %v4671, 7
    %v4673 = vsub.s32 7, %v4672
    %v4674 = vrot.slane %v4637, %v4673
    %v4675 = vlaneseq
    %v4676 = vshrl.u32 %v4675, 7
    %v4677 = vsub.s32 0, %v4676
    %v4678 = vrot.slane %v4640, %v4677
    %v4679 = vlaneseq
    %v4680 = vshrl.u32 %v4679, 7
    %v4681 = vsub.s32 1, %v4680
    %v4682 = vrot.slane %v4640, %v4681
    %v4683 = vlaneseq
    %v4684 = vshrl.u32 %v4683, 7
    %v4685 = vsub.s32 2, %v4684
    %v4686 = vrot.slane %v4640, %v4685
    %v4687 = vlaneseq
    %v4688 = vshrl.u32 %v4687, 7
    %v4689 = vsub.s32 3, %v4688
    %v4690 = vrot.slane %v4640, %v4689
    %v4691 = vlaneseq
    %v4692 = vshrl.u32 %v4691, 7
    %v4693 = vsub.s32 4, %v4692
    %v4694 = vrot.slane %v4640, %v4693
    %v4695 = vlaneseq
    %v4696 = vshrl.u32 %v4695, 7
    %v4697 = vsub.s32 5, %v4696
    %v4698 = vrot.slane %v4640, %v4697
    %v4699 = vlaneseq
    %v4700 = vshrl.u32 %v4699, 7
    %v4701 = vsub.s32 6, %v4700
    %v4702 = vrot.slane %v4640, %v4701
    %v4703 = vlaneseq
    %v4704 = vshrl.u32 %v4703, 7
    %v4705 = vsub.s32 7, %v4704
    %v4706 = vrot.slane %v4640, %v4705
    %v4723 = vsub.f32 %v4315, %v4646
    %v4724 = vsub.f32 %v4316, %v4646
    %v4725 = vsub.f32 %v4317, %v4650
    %v4726 = vsub.f32 %v4318, %v4650
    %v4727 = vsub.f32 %v4319, %v4654
    %v4728 = vsub.f32 %v4320, %v4654
    %v4729 = vsub.f32 %v4321, %v4658
    %v4730 = vsub.f32 %v4322, %v4658
    %v4731 = vsub.f32 %v4323, %v4662
    %v4732 = vsub.f32 %v4324, %v4662
    %v4733 = vsub.f32 %v4325, %v4666
    %v4734 = vsub.f32 %v4326, %v4666
    %v4735 = vsub.f32 %v4327, %v4670
    %v4736 = vsub.f32 %v4328, %v4670
    %v4737 = vsub.f32 %v4329, %v4674
    %v4738 = vsub.f32 %v4330, %v4674
    %v4739 = vsub.f32 %v4331, %v4678
    %v4740 = vsub.f32 %v4332, %v4678
    %v4741 = vsub.f32 %v4333, %v4682
    %v4742 = vsub.f32 %v4334, %v4682
    %v4743 = vsub.f32 %v4335, %v4686
    %v4744 = vsub.f32 %v4336, %v4686
    %v4745 = vsub.f32 %v4337, %v4690
    %v4746 = vsub.f32 %v4338, %v4690
    %v4747 = vsub.f32 %v4339, %v4694
    %v4748 = vsub.f32 %v4340, %v4694
    %v4749 = vsub.f32 %v4341, %v4698
    %v4750 = vsub.f32 %v4342, %v4698
    %v4751 = vsub.f32 %v4343, %v4702
    %v4752 = vsub.f32 %v4344, %v4702
    %v4753 = vsub.f32 %v4345, %v4706
    %v4754 = vsub.f32 %v4346, %v4706
    %v4755 = vmul.f32 %v4723, 1.442695
    %v4756 = vpow.pop %v4755
    %v4757 = vmul.f32 %v4724, 1.442695
    %v4758 = vpow.pop %v4757
    %v4759 = vmul.f32 %v4725, 1.442695
    %v4760 = vpow.pop %v4759
    %v4761 = vmul.f32 %v4726, 1.442695
    %v4762 = vpow.pop %v4761
    %v4763 = vmul.f32 %v4727, 1.442695
    %v4764 = vpow.pop %v4763
    %v4765 = vmul.f32 %v4728, 1.442695
    %v4766 = vpow.pop %v4765
    %v4767 = vmul.f32 %v4729, 1.442695
    %v4768 = vpow.pop %v4767
    %v4769 = vmul.f32 %v4730, 1.442695
    %v4770 = vpow.pop %v4769
    %v4771 = vmul.f32 %v4731, 1.442695
    %v4772 = vpow.pop %v4771
    %v4773 = vmul.f32 %v4732, 1.442695
    %v4774 = vpow.pop %v4773
    %v4775 = vmul.f32 %v4733, 1.442695
    %v4776 = vpow.pop %v4775
    %v4777 = vmul.f32 %v4734, 1.442695
    %v4778 = vpow.pop %v4777
    %v4779 = vmul.f32 %v4735, 1.442695
    %v4780 = vpow.pop %v4779
    %v4781 = vmul.f32 %v4736, 1.442695
    %v4782 = vpow.pop %v4781
    %v4783 = vmul.f32 %v4737, 1.442695
    %v4784 = vpow.pop %v4783
    %v4785 = vmul.f32 %v4738, 1.442695
    %v4786 = vpow.pop %v4785
    %v4787 = vmul.f32 %v4739, 1.442695
    %v4788 = vpow.pop %v4787
    %v4789 = vmul.f32 %v4740, 1.442695
    %v4790 = vpow.pop %v4789
    %v4791 = vmul.f32 %v4741, 1.442695
    %v4792 = vpow.pop %v4791
    %v4793 = vmul.f32 %v4742, 1.442695
    %v4794 = vpow.pop %v4793
    %v4795 = vmul.f32 %v4743, 1.442695
    %v4796 = vpow.pop %v4795
    %v4797 = vmul.f32 %v4744, 1.442695
    %v4798 = vpow.pop %v4797
    %v4799 = vmul.f32 %v4745, 1.442695
    %v4800 = vpow.pop %v4799
    %v4801 = vmul.f32 %v4746, 1.442695
    %v4802 = vpow.pop %v4801
    %v4803 = vmul.f32 %v4747, 1.442695
    %v4804 = vpow.pop %v4803
    %v4805 = vmul.f32 %v4748, 1.442695
    %v4806 = vpow.pop %v4805
    %v4807 = vmul.f32 %v4749, 1.442695
    %v4808 = vpow.pop %v4807
    %v4809 = vmul.f32 %v4750, 1.442695
    %v4810 = vpow.pop %v4809
    %v4811 = vmul.f32 %v4751, 1.442695
    %v4812 = vpow.pop %v4811
    %v4813 = vmul.f32 %v4752, 1.442695
    %v4814 = vpow.pop %v4813
    %v4815 = vmul.f32 %v4753, 1.442695
    %v4816 = vpow.pop %v4815
    %v4817 = vmul.f32 %v4754, 1.442695
    %v4818 = vpow.pop %v4817
    %4851 = vset.pattern.permute.xlu0 0
    %4852 = vperm.xlu0 %4851, %v4756
    %v4853 = vpop.permute.xlu0 %4852
    %4854 = vset.pattern.permute.xlu0 0
    %4855 = vperm.xlu0 %4854, %v4758
    %v4856 = vpop.permute.xlu0 %4855
    %4857 = vset.pattern.permute.xlu0 0
    %4858 = vperm.xlu0 %4857, %v4760
    %v4859 = vpop.permute.xlu0 %4858
    %4860 = vset.pattern.permute.xlu0 0
    %4861 = vperm.xlu0 %4860, %v4762
    %v4862 = vpop.permute.xlu0 %4861
    %4863 = vset.pattern.permute.xlu0 0
    %4864 = vperm.xlu0 %4863, %v4764
    %v4865 = vpop.permute.xlu0 %4864
    %4866 = vset.pattern.permute.xlu0 0
    %4867 = vperm.xlu0 %4866, %v4766
    %v4868 = vpop.permute.xlu0 %4867
    %4869 = vset.pattern.permute.xlu0 0
    %4870 = vperm.xlu0 %4869, %v4768
    %v4871 = vpop.permute.xlu0 %4870
    %4872 = vset.pattern.permute.xlu0 0
    %4873 = vperm.xlu0 %4872, %v4770
    %v4874 = vpop.permute.xlu0 %4873
    %4875 = vset.pattern.permute.xlu0 0
    %4876 = vperm.xlu0 %4875, %v4772
    %v4877 = vpop.permute.xlu0 %4876
    %4878 = vset.pattern.permute.xlu0 0
    %4879 = vperm.xlu0 %4878, %v4774
    %v4880 = vpop.permute.xlu0 %4879
    %4881 = vset.pattern.permute.xlu0 0
    %4882 = vperm.xlu0 %4881, %v4776
    %v4883 = vpop.permute.xlu0 %4882
    %4884 = vset.pattern.permute.xlu0 0
    %4885 = vperm.xlu0 %4884, %v4778
    %v4886 = vpop.permute.xlu0 %4885
    %4887 = vset.pattern.permute.xlu0 0
    %4888 = vperm.xlu0 %4887, %v4780
    %v4889 = vpop.permute.xlu0 %4888
    %4890 = vset.pattern.permute.xlu0 0
    %4891 = vperm.xlu0 %4890, %v4782
    %v4892 = vpop.permute.xlu0 %4891
    %4893 = vset.pattern.permute.xlu0 0
    %4894 = vperm.xlu0 %4893, %v4784
    %v4895 = vpop.permute.xlu0 %4894
    %4896 = vset.pattern.permute.xlu0 0
    %4897 = vperm.xlu0 %4896, %v4786
    %v4898 = vpop.permute.xlu0 %4897
    %4899 = vset.pattern.permute.xlu0 0
    %4900 = vperm.xlu0 %4899, %v4788
    %v4901 = vpop.permute.xlu0 %4900
    %4902 = vset.pattern.permute.xlu0 0
    %4903 = vperm.xlu0 %4902, %v4790
    %v4904 = vpop.permute.xlu0 %4903
    %4905 = vset.pattern.permute.xlu0 0
    %4906 = vperm.xlu0 %4905, %v4792
    %v4907 = vpop.permute.xlu0 %4906
    %4908 = vset.pattern.permute.xlu0 0
    %4909 = vperm.xlu0 %4908, %v4794
    %v4910 = vpop.permute.xlu0 %4909
    %4911 = vset.pattern.permute.xlu0 0
    %4912 = vperm.xlu0 %4911, %v4796
    %v4913 = vpop.permute.xlu0 %4912
    %4914 = vset.pattern.permute.xlu0 0
    %4915 = vperm.xlu0 %4914, %v4798
    %v4916 = vpop.permute.xlu0 %4915
    %4917 = vset.pattern.permute.xlu0 0
    %4918 = vperm.xlu0 %4917, %v4800
    %v4919 = vpop.permute.xlu0 %4918
    %4920 = vset.pattern.permute.xlu0 0
    %4921 = vperm.xlu0 %4920, %v4802
    %v4922 = vpop.permute.xlu0 %4921
    %4923 = vset.pattern.permute.xlu0 0
    %4924 = vperm.xlu0 %4923, %v4804
    %v4925 = vpop.permute.xlu0 %4924
    %4926 = vset.pattern.permute.xlu0 0
    %4927 = vperm.xlu0 %4926, %v4806
    %v4928 = vpop.permute.xlu0 %4927
    %4929 = vset.pattern.permute.xlu0 0
    %4930 = vperm.xlu0 %4929, %v4808
    %v4931 = vpop.permute.xlu0 %4930
    %4932 = vset.pattern.permute.xlu0 0
    %4933 = vperm.xlu0 %4932, %v4810
    %v4934 = vpop.permute.xlu0 %4933
    %4935 = vset.pattern.permute.xlu0 0
    %4936 = vperm.xlu0 %4935, %v4812
    %v4937 = vpop.permute.xlu0 %4936
    %4938 = vset.pattern.permute.xlu0 0
    %4939 = vperm.xlu0 %4938, %v4814
    %v4940 = vpop.permute.xlu0 %4939
    %4941 = vset.pattern.permute.xlu0 0
    %4942 = vperm.xlu0 %4941, %v4816
    %v4943 = vpop.permute.xlu0 %4942
    %4944 = vset.pattern.permute.xlu0 0
    %4945 = vperm.xlu0 %4944, %v4818
    %v4946 = vpop.permute.xlu0 %4945
    %v4947 = vlaneseq
    %v4948 = vshrl.u32 %v4947, 7
    %v4949 = vsub.s32 %v1047, %v4948
    %v4950 = vrot.slane %v4853, %v4949
    %v4951 = vlaneseq
    %v4952 = vshrl.u32 %v4951, 7
    %v4953 = vsub.s32 %v1052, %v4952
    %v4954 = vrot.slane %v4856, %v4953
    %v4955 = vsel %vm1057, %v4954, %v4950
    %v4956 = vlaneseq
    %v4957 = vshrl.u32 %v4956, 7
    %v4958 = vsub.s32 %v1047, %v4957
    %v4959 = vrot.slane %v4859, %v4958
    %v4960 = vlaneseq
    %v4961 = vshrl.u32 %v4960, 7
    %v4962 = vsub.s32 %v1052, %v4961
    %v4963 = vrot.slane %v4862, %v4962
    %v4964 = vsel %vm1057, %v4963, %v4959
    %v4965 = vlaneseq
    %v4966 = vshrl.u32 %v4965, 7
    %v4967 = vsub.s32 %v1047, %v4966
    %v4968 = vrot.slane %v4865, %v4967
    %v4969 = vlaneseq
    %v4970 = vshrl.u32 %v4969, 7
    %v4971 = vsub.s32 %v1052, %v4970
    %v4972 = vrot.slane %v4868, %v4971
    %v4973 = vsel %vm1057, %v4972, %v4968
    %v4974 = vlaneseq
    %v4975 = vshrl.u32 %v4974, 7
    %v4976 = vsub.s32 %v1047, %v4975
    %v4977 = vrot.slane %v4871, %v4976
    %v4978 = vlaneseq
    %v4979 = vshrl.u32 %v4978, 7
    %v4980 = vsub.s32 %v1052, %v4979
    %v4981 = vrot.slane %v4874, %v4980
    %v4982 = vsel %vm1057, %v4981, %v4977
    %v4983 = vlaneseq
    %v4984 = vshrl.u32 %v4983, 7
    %v4985 = vsub.s32 %v1047, %v4984
    %v4986 = vrot.slane %v4877, %v4985
    %v4987 = vlaneseq
    %v4988 = vshrl.u32 %v4987, 7
    %v4989 = vsub.s32 %v1052, %v4988
    %v4990 = vrot.slane %v4880, %v4989
    %v4991 = vsel %vm1057, %v4990, %v4986
    %v4992 = vlaneseq
    %v4993 = vshrl.u32 %v4992, 7
    %v4994 = vsub.s32 %v1047, %v4993
    %v4995 = vrot.slane %v4883, %v4994
    %v4996 = vlaneseq
    %v4997 = vshrl.u32 %v4996, 7
    %v4998 = vsub.s32 %v1052, %v4997
    %v4999 = vrot.slane %v4886, %v4998
    %v5000 = vsel %vm1057, %v4999, %v4995
    %v5001 = vlaneseq
    %v5002 = vshrl.u32 %v5001, 7
    %v5003 = vsub.s32 %v1047, %v5002
    %v5004 = vrot.slane %v4889, %v5003
    %v5005 = vlaneseq
    %v5006 = vshrl.u32 %v5005, 7
    %v5007 = vsub.s32 %v1052, %v5006
    %v5008 = vrot.slane %v4892, %v5007
    %v5009 = vsel %vm1057, %v5008, %v5004
    %v5010 = vlaneseq
    %v5011 = vshrl.u32 %v5010, 7
    %v5012 = vsub.s32 %v1047, %v5011
    %v5013 = vrot.slane %v4895, %v5012
    %v5014 = vlaneseq
    %v5015 = vshrl.u32 %v5014, 7
    %v5016 = vsub.s32 %v1052, %v5015
    %v5017 = vrot.slane %v4898, %v5016
    %v5018 = vsel %vm1057, %v5017, %v5013
    %v5019 = vlaneseq
    %v5020 = vshrl.u32 %v5019, 7
    %v5021 = vsub.s32 %v1047, %v5020
    %v5022 = vrot.slane %v4901, %v5021
    %v5023 = vlaneseq
    %v5024 = vshrl.u32 %v5023, 7
    %v5025 = vsub.s32 %v1052, %v5024
    %v5026 = vrot.slane %v4904, %v5025
    %v5027 = vsel %vm1057, %v5026, %v5022
    %v5028 = vlaneseq
    %v5029 = vshrl.u32 %v5028, 7
    %v5030 = vsub.s32 %v1047, %v5029
    %v5031 = vrot.slane %v4907, %v5030
    %v5032 = vlaneseq
    %v5033 = vshrl.u32 %v5032, 7
    %v5034 = vsub.s32 %v1052, %v5033
    %v5035 = vrot.slane %v4910, %v5034
    %v5036 = vsel %vm1057, %v5035, %v5031
    %v5037 = vlaneseq
    %v5038 = vshrl.u32 %v5037, 7
    %v5039 = vsub.s32 %v1047, %v5038
    %v5040 = vrot.slane %v4913, %v5039
    %v5041 = vlaneseq
    %v5042 = vshrl.u32 %v5041, 7
    %v5043 = vsub.s32 %v1052, %v5042
    %v5044 = vrot.slane %v4916, %v5043
    %v5045 = vsel %vm1057, %v5044, %v5040
    %v5046 = vlaneseq
    %v5047 = vshrl.u32 %v5046, 7
    %v5048 = vsub.s32 %v1047, %v5047
    %v5049 = vrot.slane %v4919, %v5048
    %v5050 = vlaneseq
    %v5051 = vshrl.u32 %v5050, 7
    %v5052 = vsub.s32 %v1052, %v5051
    %v5053 = vrot.slane %v4922, %v5052
    %v5054 = vsel %vm1057, %v5053, %v5049
    %v5055 = vlaneseq
    %v5056 = vshrl.u32 %v5055, 7
    %v5057 = vsub.s32 %v1047, %v5056
    %v5058 = vrot.slane %v4925, %v5057
    %v5059 = vlaneseq
    %v5060 = vshrl.u32 %v5059, 7
    %v5061 = vsub.s32 %v1052, %v5060
    %v5062 = vrot.slane %v4928, %v5061
    %v5063 = vsel %vm1057, %v5062, %v5058
    %v5064 = vlaneseq
    %v5065 = vshrl.u32 %v5064, 7
    %v5066 = vsub.s32 %v1047, %v5065
    %v5067 = vrot.slane %v4931, %v5066
    %v5068 = vlaneseq
    %v5069 = vshrl.u32 %v5068, 7
    %v5070 = vsub.s32 %v1052, %v5069
    %v5071 = vrot.slane %v4934, %v5070
    %v5072 = vsel %vm1057, %v5071, %v5067
    %v5073 = vlaneseq
    %v5074 = vshrl.u32 %v5073, 7
    %v5075 = vsub.s32 %v1047, %v5074
    %v5076 = vrot.slane %v4937, %v5075
    %v5077 = vlaneseq
    %v5078 = vshrl.u32 %v5077, 7
    %v5079 = vsub.s32 %v1052, %v5078
    %v5080 = vrot.slane %v4940, %v5079
    %v5081 = vsel %vm1057, %v5080, %v5076
    %v5082 = vlaneseq
    %v5083 = vshrl.u32 %v5082, 7
    %v5084 = vsub.s32 %v1047, %v5083
    %v5085 = vrot.slane %v4943, %v5084
    %v5086 = vlaneseq
    %v5087 = vshrl.u32 %v5086, 7
    %v5088 = vsub.s32 %v1052, %v5087
    %v5089 = vrot.slane %v4946, %v5088
    %v5090 = vsel %vm1057, %v5089, %v5085
    %v5091 = vsel %vm1194, %v4964, %v4955
    %v5092 = vsel %vm1196, %v4973, %v5091
    %v5093 = vsel %vm1198, %v4982, %v5092
    %v5094 = vsel %vm1200, %v4991, %v5093
    %v5095 = vsel %vm1202, %v5000, %v5094
    %v5096 = vsel %vm1204, %v5009, %v5095
    %v5097 = vsel %vm1206, %v5018, %v5096
    %v5098 = vsel %vm1194, %v5036, %v5027
    %v5099 = vsel %vm1196, %v5045, %v5098
    %v5100 = vsel %vm1198, %v5054, %v5099
    %v5101 = vsel %vm1200, %v5063, %v5100
    %v5102 = vsel %vm1202, %v5072, %v5101
    %v5103 = vsel %vm1204, %v5081, %v5102
    %v5104 = vsel %vm1206, %v5090, %v5103
    %v5107 = vsel %vm579, %v5097, 0.0
    %5108 = vadd.xlane.f32.xlu0 %v5107
    %v5109 = vpop.xlane.xlu0 %5108
    %v5110 = vsel %vm579, %v5104, 0.0
    %5111 = vadd.xlane.f32.xlu0 %v5110
    %v5112 = vpop.xlane.xlu0 %5111
    %v5113 = vrcp.pop %v5109
    %v5114 = vrcp.pop %v5112
    %v5117 = vlaneseq
    %v5118 = vshrl.u32 %v5117, 7
    %v5119 = vsub.s32 0, %v5118
    %v5120 = vrot.slane %v5113, %v5119
    %v5121 = vlaneseq
    %v5122 = vshrl.u32 %v5121, 7
    %v5123 = vsub.s32 1, %v5122
    %v5124 = vrot.slane %v5113, %v5123
    %v5125 = vlaneseq
    %v5126 = vshrl.u32 %v5125, 7
    %v5127 = vsub.s32 2, %v5126
    %v5128 = vrot.slane %v5113, %v5127
    %v5129 = vlaneseq
    %v5130 = vshrl.u32 %v5129, 7
    %v5131 = vsub.s32 3, %v5130
    %v5132 = vrot.slane %v5113, %v5131
    %v5133 = vlaneseq
    %v5134 = vshrl.u32 %v5133, 7
    %v5135 = vsub.s32 4, %v5134
    %v5136 = vrot.slane %v5113, %v5135
    %v5137 = vlaneseq
    %v5138 = vshrl.u32 %v5137, 7
    %v5139 = vsub.s32 5, %v5138
    %v5140 = vrot.slane %v5113, %v5139
    %v5141 = vlaneseq
    %v5142 = vshrl.u32 %v5141, 7
    %v5143 = vsub.s32 6, %v5142
    %v5144 = vrot.slane %v5113, %v5143
    %v5145 = vlaneseq
    %v5146 = vshrl.u32 %v5145, 7
    %v5147 = vsub.s32 7, %v5146
    %v5148 = vrot.slane %v5113, %v5147
    %v5149 = vlaneseq
    %v5150 = vshrl.u32 %v5149, 7
    %v5151 = vsub.s32 0, %v5150
    %v5152 = vrot.slane %v5114, %v5151
    %v5153 = vlaneseq
    %v5154 = vshrl.u32 %v5153, 7
    %v5155 = vsub.s32 1, %v5154
    %v5156 = vrot.slane %v5114, %v5155
    %v5157 = vlaneseq
    %v5158 = vshrl.u32 %v5157, 7
    %v5159 = vsub.s32 2, %v5158
    %v5160 = vrot.slane %v5114, %v5159
    %v5161 = vlaneseq
    %v5162 = vshrl.u32 %v5161, 7
    %v5163 = vsub.s32 3, %v5162
    %v5164 = vrot.slane %v5114, %v5163
    %v5165 = vlaneseq
    %v5166 = vshrl.u32 %v5165, 7
    %v5167 = vsub.s32 4, %v5166
    %v5168 = vrot.slane %v5114, %v5167
    %v5169 = vlaneseq
    %v5170 = vshrl.u32 %v5169, 7
    %v5171 = vsub.s32 5, %v5170
    %v5172 = vrot.slane %v5114, %v5171
    %v5173 = vlaneseq
    %v5174 = vshrl.u32 %v5173, 7
    %v5175 = vsub.s32 6, %v5174
    %v5176 = vrot.slane %v5114, %v5175
    %v5177 = vlaneseq
    %v5178 = vshrl.u32 %v5177, 7
    %v5179 = vsub.s32 7, %v5178
    %v5180 = vrot.slane %v5114, %v5179
    %v5197 = vmul.f32 %v4756, %v5120
    %v5198 = vmul.f32 %v4758, %v5120
    %v5199 = vmul.f32 %v4760, %v5124
    %v5200 = vmul.f32 %v4762, %v5124
    %v5201 = vmul.f32 %v4764, %v5128
    %v5202 = vmul.f32 %v4766, %v5128
    %v5203 = vmul.f32 %v4768, %v5132
    %v5204 = vmul.f32 %v4770, %v5132
    %v5205 = vmul.f32 %v4772, %v5136
    %v5206 = vmul.f32 %v4774, %v5136
    %v5207 = vmul.f32 %v4776, %v5140
    %v5208 = vmul.f32 %v4778, %v5140
    %v5209 = vmul.f32 %v4780, %v5144
    %v5210 = vmul.f32 %v4782, %v5144
    %v5211 = vmul.f32 %v4784, %v5148
    %v5212 = vmul.f32 %v4786, %v5148
    %v5213 = vmul.f32 %v4788, %v5152
    %v5214 = vmul.f32 %v4790, %v5152
    %v5215 = vmul.f32 %v4792, %v5156
    %v5216 = vmul.f32 %v4794, %v5156
    %v5217 = vmul.f32 %v4796, %v5160
    %v5218 = vmul.f32 %v4798, %v5160
    %v5219 = vmul.f32 %v4800, %v5164
    %v5220 = vmul.f32 %v4802, %v5164
    %v5221 = vmul.f32 %v4804, %v5168
    %v5222 = vmul.f32 %v4806, %v5168
    %v5223 = vmul.f32 %v4808, %v5172
    %v5224 = vmul.f32 %v4810, %v5172
    %v5225 = vmul.f32 %v4812, %v5176
    %v5226 = vmul.f32 %v4814, %v5176
    %v5227 = vmul.f32 %v4816, %v5180
    %v5228 = vmul.f32 %v4818, %v5180
    %v5229 = vpack.c.bf16 %v5198, %v5197
    %v5230 = vpack.c.bf16 %v5200, %v5199
    %v5231 = vpack.c.bf16 %v5202, %v5201
    %v5232 = vpack.c.bf16 %v5204, %v5203
    %v5233 = vpack.c.bf16 %v5206, %v5205
    %v5234 = vpack.c.bf16 %v5208, %v5207
    %v5235 = vpack.c.bf16 %v5210, %v5209
    %v5236 = vpack.c.bf16 %v5212, %v5211
    %v5237 = vpack.c.bf16 %v5214, %v5213
    %v5238 = vpack.c.bf16 %v5216, %v5215
    %v5239 = vpack.c.bf16 %v5218, %v5217
    %v5240 = vpack.c.bf16 %v5220, %v5219
    %v5241 = vpack.c.bf16 %v5222, %v5221
    %v5242 = vpack.c.bf16 %v5224, %v5223
    %v5243 = vpack.c.bf16 %v5226, %v5225
    %v5244 = vpack.c.bf16 %v5228, %v5227
    %v5245 = vpack.c.bf16 %v3813, %v3810
    %v5262 = vunpack.c.l.b16 %v5229
    %v5263 = vunpack.c.h.b16 %v5229
    %v5264 = vunpack.c.l.b16 %v5230
    %v5265 = vunpack.c.h.b16 %v5230
    %v5266 = vunpack.c.l.b16 %v5231
    %v5267 = vunpack.c.h.b16 %v5231
    %v5268 = vunpack.c.l.b16 %v5232
    %v5269 = vunpack.c.h.b16 %v5232
    %v5270 = vunpack.c.l.b16 %v5233
    %v5271 = vunpack.c.h.b16 %v5233
    %v5272 = vunpack.c.l.b16 %v5234
    %v5273 = vunpack.c.h.b16 %v5234
    %v5274 = vunpack.c.l.b16 %v5235
    %v5275 = vunpack.c.h.b16 %v5235
    %v5276 = vunpack.c.l.b16 %v5236
    %v5277 = vunpack.c.h.b16 %v5236
    %v5278 = vunpack.c.l.b16 %v5237
    %v5279 = vunpack.c.h.b16 %v5237
    %v5280 = vunpack.c.l.b16 %v5238
    %v5281 = vunpack.c.h.b16 %v5238
    %v5282 = vunpack.c.l.b16 %v5239
    %v5283 = vunpack.c.h.b16 %v5239
    %v5284 = vunpack.c.l.b16 %v5240
    %v5285 = vunpack.c.h.b16 %v5240
    %v5286 = vunpack.c.l.b16 %v5241
    %v5287 = vunpack.c.h.b16 %v5241
    %v5288 = vunpack.c.l.b16 %v5242
    %v5289 = vunpack.c.h.b16 %v5242
    %v5290 = vunpack.c.l.b16 %v5243
    %v5291 = vunpack.c.h.b16 %v5243
    %v5292 = vunpack.c.l.b16 %v5244
    %v5293 = vunpack.c.h.b16 %v5244
    %5294 = vset.pattern.permute.xlu0 0
    %5295 = vperm.xlu0 %5294, %v5262
    %v5296 = vpop.permute.xlu0 %5295
    %5297 = vset.pattern.permute.xlu0 0
    %5298 = vperm.xlu0 %5297, %v5263
    %v5299 = vpop.permute.xlu0 %5298
    %5300 = vset.pattern.permute.xlu0 0
    %5301 = vperm.xlu0 %5300, %v5264
    %v5302 = vpop.permute.xlu0 %5301
    %5303 = vset.pattern.permute.xlu0 0
    %5304 = vperm.xlu0 %5303, %v5265
    %v5305 = vpop.permute.xlu0 %5304
    %5306 = vset.pattern.permute.xlu0 0
    %5307 = vperm.xlu0 %5306, %v5266
    %v5308 = vpop.permute.xlu0 %5307
    %5309 = vset.pattern.permute.xlu0 0
    %5310 = vperm.xlu0 %5309, %v5267
    %v5311 = vpop.permute.xlu0 %5310
    %5312 = vset.pattern.permute.xlu0 0
    %5313 = vperm.xlu0 %5312, %v5268
    %v5314 = vpop.permute.xlu0 %5313
    %5315 = vset.pattern.permute.xlu0 0
    %5316 = vperm.xlu0 %5315, %v5269
    %v5317 = vpop.permute.xlu0 %5316
    %5318 = vset.pattern.permute.xlu0 0
    %5319 = vperm.xlu0 %5318, %v5270
    %v5320 = vpop.permute.xlu0 %5319
    %5321 = vset.pattern.permute.xlu0 0
    %5322 = vperm.xlu0 %5321, %v5271
    %v5323 = vpop.permute.xlu0 %5322
    %5324 = vset.pattern.permute.xlu0 0
    %5325 = vperm.xlu0 %5324, %v5272
    %v5326 = vpop.permute.xlu0 %5325
    %5327 = vset.pattern.permute.xlu0 0
    %5328 = vperm.xlu0 %5327, %v5273
    %v5329 = vpop.permute.xlu0 %5328
    %5330 = vset.pattern.permute.xlu0 0
    %5331 = vperm.xlu0 %5330, %v5274
    %v5332 = vpop.permute.xlu0 %5331
    %5333 = vset.pattern.permute.xlu0 0
    %5334 = vperm.xlu0 %5333, %v5275
    %v5335 = vpop.permute.xlu0 %5334
    %5336 = vset.pattern.permute.xlu0 0
    %5337 = vperm.xlu0 %5336, %v5276
    %v5338 = vpop.permute.xlu0 %5337
    %5339 = vset.pattern.permute.xlu0 0
    %5340 = vperm.xlu0 %5339, %v5277
    %v5341 = vpop.permute.xlu0 %5340
    %5342 = vset.pattern.permute.xlu0 0
    %5343 = vperm.xlu0 %5342, %v5278
    %v5344 = vpop.permute.xlu0 %5343
    %5345 = vset.pattern.permute.xlu0 0
    %5346 = vperm.xlu0 %5345, %v5279
    %v5347 = vpop.permute.xlu0 %5346
    %5348 = vset.pattern.permute.xlu0 0
    %5349 = vperm.xlu0 %5348, %v5280
    %v5350 = vpop.permute.xlu0 %5349
    %5351 = vset.pattern.permute.xlu0 0
    %5352 = vperm.xlu0 %5351, %v5281
    %v5353 = vpop.permute.xlu0 %5352
    %5354 = vset.pattern.permute.xlu0 0
    %5355 = vperm.xlu0 %5354, %v5282
    %v5356 = vpop.permute.xlu0 %5355
    %5357 = vset.pattern.permute.xlu0 0
    %5358 = vperm.xlu0 %5357, %v5283
    %v5359 = vpop.permute.xlu0 %5358
    %5360 = vset.pattern.permute.xlu0 0
    %5361 = vperm.xlu0 %5360, %v5284
    %v5362 = vpop.permute.xlu0 %5361
    %5363 = vset.pattern.permute.xlu0 0
    %5364 = vperm.xlu0 %5363, %v5285
    %v5365 = vpop.permute.xlu0 %5364
    %5366 = vset.pattern.permute.xlu0 0
    %5367 = vperm.xlu0 %5366, %v5286
    %v5368 = vpop.permute.xlu0 %5367
    %5369 = vset.pattern.permute.xlu0 0
    %5370 = vperm.xlu0 %5369, %v5287
    %v5371 = vpop.permute.xlu0 %5370
    %5372 = vset.pattern.permute.xlu0 0
    %5373 = vperm.xlu0 %5372, %v5288
    %v5374 = vpop.permute.xlu0 %5373
    %5375 = vset.pattern.permute.xlu0 0
    %5376 = vperm.xlu0 %5375, %v5289
    %v5377 = vpop.permute.xlu0 %5376
    %5378 = vset.pattern.permute.xlu0 0
    %5379 = vperm.xlu0 %5378, %v5290
    %v5380 = vpop.permute.xlu0 %5379
    %5381 = vset.pattern.permute.xlu0 0
    %5382 = vperm.xlu0 %5381, %v5291
    %v5383 = vpop.permute.xlu0 %5382
    %5384 = vset.pattern.permute.xlu0 0
    %5385 = vperm.xlu0 %5384, %v5292
    %v5386 = vpop.permute.xlu0 %5385
    %5387 = vset.pattern.permute.xlu0 0
    %5388 = vperm.xlu0 %5387, %v5293
    %v5389 = vpop.permute.xlu0 %5388
    %v5390 = vlaneseq
    %v5391 = vshrl.u32 %v5390, 7
    %v5392 = vsub.s32 %v1047, %v5391
    %v5393 = vrot.slane %v5296, %v5392
    %v5394 = vlaneseq
    %v5395 = vshrl.u32 %v5394, 7
    %v5396 = vsub.s32 %v1052, %v5395
    %v5397 = vrot.slane %v5299, %v5396
    %v5398 = vsel %vm1057, %v5397, %v5393
    %v5399 = vlaneseq
    %v5400 = vshrl.u32 %v5399, 7
    %v5401 = vsub.s32 %v1047, %v5400
    %v5402 = vrot.slane %v5302, %v5401
    %v5403 = vlaneseq
    %v5404 = vshrl.u32 %v5403, 7
    %v5405 = vsub.s32 %v1052, %v5404
    %v5406 = vrot.slane %v5305, %v5405
    %v5407 = vsel %vm1057, %v5406, %v5402
    %v5408 = vlaneseq
    %v5409 = vshrl.u32 %v5408, 7
    %v5410 = vsub.s32 %v1047, %v5409
    %v5411 = vrot.slane %v5308, %v5410
    %v5412 = vlaneseq
    %v5413 = vshrl.u32 %v5412, 7
    %v5414 = vsub.s32 %v1052, %v5413
    %v5415 = vrot.slane %v5311, %v5414
    %v5416 = vsel %vm1057, %v5415, %v5411
    %v5417 = vlaneseq
    %v5418 = vshrl.u32 %v5417, 7
    %v5419 = vsub.s32 %v1047, %v5418
    %v5420 = vrot.slane %v5314, %v5419
    %v5421 = vlaneseq
    %v5422 = vshrl.u32 %v5421, 7
    %v5423 = vsub.s32 %v1052, %v5422
    %v5424 = vrot.slane %v5317, %v5423
    %v5425 = vsel %vm1057, %v5424, %v5420
    %v5426 = vlaneseq
    %v5427 = vshrl.u32 %v5426, 7
    %v5428 = vsub.s32 %v1047, %v5427
    %v5429 = vrot.slane %v5320, %v5428
    %v5430 = vlaneseq
    %v5431 = vshrl.u32 %v5430, 7
    %v5432 = vsub.s32 %v1052, %v5431
    %v5433 = vrot.slane %v5323, %v5432
    %v5434 = vsel %vm1057, %v5433, %v5429
    %v5435 = vlaneseq
    %v5436 = vshrl.u32 %v5435, 7
    %v5437 = vsub.s32 %v1047, %v5436
    %v5438 = vrot.slane %v5326, %v5437
    %v5439 = vlaneseq
    %v5440 = vshrl.u32 %v5439, 7
    %v5441 = vsub.s32 %v1052, %v5440
    %v5442 = vrot.slane %v5329, %v5441
    %v5443 = vsel %vm1057, %v5442, %v5438
    %v5444 = vlaneseq
    %v5445 = vshrl.u32 %v5444, 7
    %v5446 = vsub.s32 %v1047, %v5445
    %v5447 = vrot.slane %v5332, %v5446
    %v5448 = vlaneseq
    %v5449 = vshrl.u32 %v5448, 7
    %v5450 = vsub.s32 %v1052, %v5449
    %v5451 = vrot.slane %v5335, %v5450
    %v5452 = vsel %vm1057, %v5451, %v5447
    %v5453 = vlaneseq
    %v5454 = vshrl.u32 %v5453, 7
    %v5455 = vsub.s32 %v1047, %v5454
    %v5456 = vrot.slane %v5338, %v5455
    %v5457 = vlaneseq
    %v5458 = vshrl.u32 %v5457, 7
    %v5459 = vsub.s32 %v1052, %v5458
    %v5460 = vrot.slane %v5341, %v5459
    %v5461 = vsel %vm1057, %v5460, %v5456
    %v5462 = vlaneseq
    %v5463 = vshrl.u32 %v5462, 7
    %v5464 = vsub.s32 %v1047, %v5463
    %v5465 = vrot.slane %v5344, %v5464
    %v5466 = vlaneseq
    %v5467 = vshrl.u32 %v5466, 7
    %v5468 = vsub.s32 %v1052, %v5467
    %v5469 = vrot.slane %v5347, %v5468
    %v5470 = vsel %vm1057, %v5469, %v5465
    %v5471 = vlaneseq
    %v5472 = vshrl.u32 %v5471, 7
    %v5473 = vsub.s32 %v1047, %v5472
    %v5474 = vrot.slane %v5350, %v5473
    %v5475 = vlaneseq
    %v5476 = vshrl.u32 %v5475, 7
    %v5477 = vsub.s32 %v1052, %v5476
    %v5478 = vrot.slane %v5353, %v5477
    %v5479 = vsel %vm1057, %v5478, %v5474
    %v5480 = vlaneseq
    %v5481 = vshrl.u32 %v5480, 7
    %v5482 = vsub.s32 %v1047, %v5481
    %v5483 = vrot.slane %v5356, %v5482
    %v5484 = vlaneseq
    %v5485 = vshrl.u32 %v5484, 7
    %v5486 = vsub.s32 %v1052, %v5485
    %v5487 = vrot.slane %v5359, %v5486
    %v5488 = vsel %vm1057, %v5487, %v5483
    %v5489 = vlaneseq
    %v5490 = vshrl.u32 %v5489, 7
    %v5491 = vsub.s32 %v1047, %v5490
    %v5492 = vrot.slane %v5362, %v5491
    %v5493 = vlaneseq
    %v5494 = vshrl.u32 %v5493, 7
    %v5495 = vsub.s32 %v1052, %v5494
    %v5496 = vrot.slane %v5365, %v5495
    %v5497 = vsel %vm1057, %v5496, %v5492
    %v5498 = vlaneseq
    %v5499 = vshrl.u32 %v5498, 7
    %v5500 = vsub.s32 %v1047, %v5499
    %v5501 = vrot.slane %v5368, %v5500
    %v5502 = vlaneseq
    %v5503 = vshrl.u32 %v5502, 7
    %v5504 = vsub.s32 %v1052, %v5503
    %v5505 = vrot.slane %v5371, %v5504
    %v5506 = vsel %vm1057, %v5505, %v5501
    %v5507 = vlaneseq
    %v5508 = vshrl.u32 %v5507, 7
    %v5509 = vsub.s32 %v1047, %v5508
    %v5510 = vrot.slane %v5374, %v5509
    %v5511 = vlaneseq
    %v5512 = vshrl.u32 %v5511, 7
    %v5513 = vsub.s32 %v1052, %v5512
    %v5514 = vrot.slane %v5377, %v5513
    %v5515 = vsel %vm1057, %v5514, %v5510
    %v5516 = vlaneseq
    %v5517 = vshrl.u32 %v5516, 7
    %v5518 = vsub.s32 %v1047, %v5517
    %v5519 = vrot.slane %v5380, %v5518
    %v5520 = vlaneseq
    %v5521 = vshrl.u32 %v5520, 7
    %v5522 = vsub.s32 %v1052, %v5521
    %v5523 = vrot.slane %v5383, %v5522
    %v5524 = vsel %vm1057, %v5523, %v5519
    %v5525 = vlaneseq
    %v5526 = vshrl.u32 %v5525, 7
    %v5527 = vsub.s32 %v1047, %v5526
    %v5528 = vrot.slane %v5386, %v5527
    %v5529 = vlaneseq
    %v5530 = vshrl.u32 %v5529, 7
    %v5531 = vsub.s32 %v1052, %v5530
    %v5532 = vrot.slane %v5389, %v5531
    %v5533 = vsel %vm1057, %v5532, %v5528
    %v5534 = vsel %vm1194, %v5407, %v5398
    %v5535 = vsel %vm1196, %v5416, %v5534
    %v5536 = vsel %vm1198, %v5425, %v5535
    %v5537 = vsel %vm1200, %v5434, %v5536
    %v5538 = vsel %vm1202, %v5443, %v5537
    %v5539 = vsel %vm1204, %v5452, %v5538
    %v5540 = vsel %vm1206, %v5461, %v5539
    %v5541 = vsel %vm1194, %v5479, %v5470
    %v5542 = vsel %vm1196, %v5488, %v5541
    %v5543 = vsel %vm1198, %v5497, %v5542
    %v5544 = vsel %vm1200, %v5506, %v5543
    %v5545 = vsel %vm1202, %v5515, %v5544
    %v5546 = vsel %vm1204, %v5524, %v5545
    %v5547 = vsel %vm1206, %v5533, %v5546
    %v5548 = vpack.c.b16 %v5547, %v5540
    %v5550 = vsel %vm579, %v5548, 0
    %5552 = vmatprep.subr.bf16.mxu0 0
    %5553 = vmatpush1.bf16.msra.mxu0 0
    %5554 = vmatprep.subr.bf16.mxu0 0
    %5555 = vmatpush1.bf16.msra.mxu0 0
    %5556 = vmatprep.subr.bf16.mxu0 0
    %5557 = vmatpush1.bf16.msra.mxu0 0
    %5558 = vmatprep.subr.bf16.mxu0 0
    %5559 = vmatpush1.bf16.msra.mxu0 0
    %5560 = vmatprep.subr.bf16.mxu0 0
    %5561 = vmatpush1.bf16.msra.mxu0 0
    %5562 = vmatprep.subr.bf16.mxu0 0
    %5563 = vmatpush1.bf16.msra.mxu0 0
    %5564 = vmatprep.subr.bf16.mxu0 0
    %5565 = vmatpush1.bf16.msra.mxu0 0
    %5566 = vmatprep.subr.bf16.mxu0 0
    %5567 = vmatpush1.bf16.msra.mxu0 %v5245
    %5568 = vmatprep.subr.bf16.mxu0 0
    %5569 = vmatpush2.bf16.msra.mxu0 0
    %5570 = vmatprep.subr.bf16.mxu0 0
    %5571 = vmatpush2.bf16.msra.mxu0 0
    %5572 = vmatprep.subr.bf16.mxu0 0
    %5573 = vmatpush2.bf16.msra.mxu0 0
    %5574 = vmatprep.subr.bf16.mxu0 0
    %5575 = vmatpush2.bf16.msra.mxu0 0
    %5576 = vmatprep.subr.bf16.mxu0 0
    %5577 = vmatpush2.bf16.msra.mxu0 0
    %5578 = vmatprep.subr.bf16.mxu0 0
    %5579 = vmatpush2.bf16.msra.mxu0 0
    %5580 = vmatprep.subr.bf16.mxu0 0
    %5581 = vmatpush2.bf16.msra.mxu0 0
    %5582 = vmatprep.subr.bf16.mxu0 0
    %5583 = vmatpush2.bf16.msra.mxu0 0
    %5584 = vmatprep.mubr.bf16.mxu0 0
    %5585 = vmatmul.mubr.bf16.gmra.mxu0 %v5550
    %v5586 = vpop.f32.mrf.mxu0
    %v5587 = vadd.f32 0.0, %v5586
    %v5588 = vpop.f32.mrf.mxu0
    %v5589 = vpop.f32.mrf.mxu0
    %v5590 = vadd.f32 0.0, %v5589
    %v5591 = vpop.f32.mrf.mxu0
    %5592 = vdwg.mxu0
    %v5593 = vlaneseq
    %v5594 = vshrl.u32 %v5593, 7
    %v5595 = vsub.s32 1, %v5594
    %v5596 = vrot.slane %v3750, %v5595
    %5598 = vrot.lane.b32.xlu0 %v5596, 16
    %v5599 = vpop.permute.xlu0 %5598
    %v5601 = vmul.f32 %v4151, %v5599
    %v5602 = vmul.f32 %v4152, %v5599
    %v5603 = vmul.f32 %v4153, %v5599
    %v5604 = vmul.f32 %v4154, %v5599
    %v5605 = vmul.f32 %v4155, %v5599
    %v5606 = vmul.f32 %v4156, %v5599
    %v5607 = vmul.f32 %v4157, %v5599
    %v5608 = vmul.f32 %v4158, %v5599
    %v5609 = vmul.f32 %v4159, %v5599
    %v5610 = vmul.f32 %v4160, %v5599
    %v5611 = vmul.f32 %v4161, %v5599
    %v5612 = vmul.f32 %v4162, %v5599
    %v5613 = vmul.f32 %v4163, %v5599
    %v5614 = vmul.f32 %v4164, %v5599
    %v5615 = vmul.f32 %v4165, %v5599
    %v5616 = vmul.f32 %v4166, %v5599
    %v5617 = vmul.f32 %v4167, %v5599
    %v5618 = vmul.f32 %v4168, %v5599
    %v5619 = vmul.f32 %v4169, %v5599
    %v5620 = vmul.f32 %v4170, %v5599
    %v5621 = vmul.f32 %v4171, %v5599
    %v5622 = vmul.f32 %v4172, %v5599
    %v5623 = vmul.f32 %v4173, %v5599
    %v5624 = vmul.f32 %v4174, %v5599
    %v5625 = vmul.f32 %v4175, %v5599
    %v5626 = vmul.f32 %v4176, %v5599
    %v5627 = vmul.f32 %v4177, %v5599
    %v5628 = vmul.f32 %v4178, %v5599
    %v5629 = vmul.f32 %v4179, %v5599
    %v5630 = vmul.f32 %v4180, %v5599
    %v5631 = vmul.f32 %v4181, %v5599
    %v5632 = vmul.f32 %v4182, %v5599
    %5665 = vrot.lane.b32.xlu0 %v5601, 112
    %v5666 = vpop.permute.xlu0 %5665
    %5667 = vrot.lane.b32.xlu0 %v5602, 112
    %v5668 = vpop.permute.xlu0 %5667
    %5669 = vrot.lane.b32.xlu0 %v5603, 112
    %v5670 = vpop.permute.xlu0 %5669
    %5671 = vrot.lane.b32.xlu0 %v5604, 112
    %v5672 = vpop.permute.xlu0 %5671
    %5673 = vrot.lane.b32.xlu0 %v5605, 112
    %v5674 = vpop.permute.xlu0 %5673
    %5675 = vrot.lane.b32.xlu0 %v5606, 112
    %v5676 = vpop.permute.xlu0 %5675
    %5677 = vrot.lane.b32.xlu0 %v5607, 112
    %v5678 = vpop.permute.xlu0 %5677
    %5679 = vrot.lane.b32.xlu0 %v5608, 112
    %v5680 = vpop.permute.xlu0 %5679
    %5681 = vrot.lane.b32.xlu0 %v5609, 112
    %v5682 = vpop.permute.xlu0 %5681
    %5683 = vrot.lane.b32.xlu0 %v5610, 112
    %v5684 = vpop.permute.xlu0 %5683
    %5685 = vrot.lane.b32.xlu0 %v5611, 112
    %v5686 = vpop.permute.xlu0 %5685
    %5687 = vrot.lane.b32.xlu0 %v5612, 112
    %v5688 = vpop.permute.xlu0 %5687
    %5689 = vrot.lane.b32.xlu0 %v5613, 112
    %v5690 = vpop.permute.xlu0 %5689
    %5691 = vrot.lane.b32.xlu0 %v5614, 112
    %v5692 = vpop.permute.xlu0 %5691
    %5693 = vrot.lane.b32.xlu0 %v5615, 112
    %v5694 = vpop.permute.xlu0 %5693
    %5695 = vrot.lane.b32.xlu0 %v5616, 112
    %v5696 = vpop.permute.xlu0 %5695
    %5697 = vrot.lane.b32.xlu0 %v5617, 112
    %v5698 = vpop.permute.xlu0 %5697
    %5699 = vrot.lane.b32.xlu0 %v5618, 112
    %v5700 = vpop.permute.xlu0 %5699
    %5701 = vrot.lane.b32.xlu0 %v5619, 112
    %v5702 = vpop.permute.xlu0 %5701
    %5703 = vrot.lane.b32.xlu0 %v5620, 112
    %v5704 = vpop.permute.xlu0 %5703
    %5705 = vrot.lane.b32.xlu0 %v5621, 112
    %v5706 = vpop.permute.xlu0 %5705
    %5707 = vrot.lane.b32.xlu0 %v5622, 112
    %v5708 = vpop.permute.xlu0 %5707
    %5709 = vrot.lane.b32.xlu0 %v5623, 112
    %v5710 = vpop.permute.xlu0 %5709
    %5711 = vrot.lane.b32.xlu0 %v5624, 112
    %v5712 = vpop.permute.xlu0 %5711
    %5713 = vrot.lane.b32.xlu0 %v5625, 112
    %v5714 = vpop.permute.xlu0 %5713
    %5715 = vrot.lane.b32.xlu0 %v5626, 112
    %v5716 = vpop.permute.xlu0 %5715
    %5717 = vrot.lane.b32.xlu0 %v5627, 112
    %v5718 = vpop.permute.xlu0 %5717
    %5719 = vrot.lane.b32.xlu0 %v5628, 112
    %v5720 = vpop.permute.xlu0 %5719
    %5721 = vrot.lane.b32.xlu0 %v5629, 112
    %v5722 = vpop.permute.xlu0 %5721
    %5723 = vrot.lane.b32.xlu0 %v5630, 112
    %v5724 = vpop.permute.xlu0 %5723
    %5725 = vrot.lane.b32.xlu0 %v5631, 112
    %v5726 = vpop.permute.xlu0 %5725
    %5727 = vrot.lane.b32.xlu0 %v5632, 112
    %v5728 = vpop.permute.xlu0 %5727
    %v5761 = vsel %vm579, %v5666, 0.0
    %5762 = vadd.xlane.f32.xlu0 %v5761
    %v5763 = vpop.xlane.xlu0 %5762
    %v5764 = vsel %vm579, %v5668, 0.0
    %5765 = vadd.xlane.f32.xlu0 %v5764
    %v5766 = vpop.xlane.xlu0 %5765
    %v5767 = vsel %vm579, %v5670, 0.0
    %5768 = vadd.xlane.f32.xlu0 %v5767
    %v5769 = vpop.xlane.xlu0 %5768
    %v5770 = vsel %vm579, %v5672, 0.0
    %5771 = vadd.xlane.f32.xlu0 %v5770
    %v5772 = vpop.xlane.xlu0 %5771
    %v5773 = vsel %vm579, %v5674, 0.0
    %5774 = vadd.xlane.f32.xlu0 %v5773
    %v5775 = vpop.xlane.xlu0 %5774
    %v5776 = vsel %vm579, %v5676, 0.0
    %5777 = vadd.xlane.f32.xlu0 %v5776
    %v5778 = vpop.xlane.xlu0 %5777
    %v5779 = vsel %vm579, %v5678, 0.0
    %5780 = vadd.xlane.f32.xlu0 %v5779
    %v5781 = vpop.xlane.xlu0 %5780
    %v5782 = vsel %vm579, %v5680, 0.0
    %5783 = vadd.xlane.f32.xlu0 %v5782
    %v5784 = vpop.xlane.xlu0 %5783
    %v5785 = vsel %vm579, %v5682, 0.0
    %5786 = vadd.xlane.f32.xlu0 %v5785
    %v5787 = vpop.xlane.xlu0 %5786
    %v5788 = vsel %vm579, %v5684, 0.0
    %5789 = vadd.xlane.f32.xlu0 %v5788
    %v5790 = vpop.xlane.xlu0 %5789
    %v5791 = vsel %vm579, %v5686, 0.0
    %5792 = vadd.xlane.f32.xlu0 %v5791
    %v5793 = vpop.xlane.xlu0 %5792
    %v5794 = vsel %vm579, %v5688, 0.0
    %5795 = vadd.xlane.f32.xlu0 %v5794
    %v5796 = vpop.xlane.xlu0 %5795
    %v5797 = vsel %vm579, %v5690, 0.0
    %5798 = vadd.xlane.f32.xlu0 %v5797
    %v5799 = vpop.xlane.xlu0 %5798
    %v5800 = vsel %vm579, %v5692, 0.0
    %5801 = vadd.xlane.f32.xlu0 %v5800
    %v5802 = vpop.xlane.xlu0 %5801
    %v5803 = vsel %vm579, %v5694, 0.0
    %5804 = vadd.xlane.f32.xlu0 %v5803
    %v5805 = vpop.xlane.xlu0 %5804
    %v5806 = vsel %vm579, %v5696, 0.0
    %5807 = vadd.xlane.f32.xlu0 %v5806
    %v5808 = vpop.xlane.xlu0 %5807
    %v5809 = vsel %vm579, %v5698, 0.0
    %5810 = vadd.xlane.f32.xlu0 %v5809
    %v5811 = vpop.xlane.xlu0 %5810
    %v5812 = vsel %vm579, %v5700, 0.0
    %5813 = vadd.xlane.f32.xlu0 %v5812
    %v5814 = vpop.xlane.xlu0 %5813
    %v5815 = vsel %vm579, %v5702, 0.0
    %5816 = vadd.xlane.f32.xlu0 %v5815
    %v5817 = vpop.xlane.xlu0 %5816
    %v5818 = vsel %vm579, %v5704, 0.0
    %5819 = vadd.xlane.f32.xlu0 %v5818
    %v5820 = vpop.xlane.xlu0 %5819
    %v5821 = vsel %vm579, %v5706, 0.0
    %5822 = vadd.xlane.f32.xlu0 %v5821
    %v5823 = vpop.xlane.xlu0 %5822
    %v5824 = vsel %vm579, %v5708, 0.0
    %5825 = vadd.xlane.f32.xlu0 %v5824
    %v5826 = vpop.xlane.xlu0 %5825
    %v5827 = vsel %vm579, %v5710, 0.0
    %5828 = vadd.xlane.f32.xlu0 %v5827
    %v5829 = vpop.xlane.xlu0 %5828
    %v5830 = vsel %vm579, %v5712, 0.0
    %5831 = vadd.xlane.f32.xlu0 %v5830
    %v5832 = vpop.xlane.xlu0 %5831
    %v5833 = vsel %vm579, %v5714, 0.0
    %5834 = vadd.xlane.f32.xlu0 %v5833
    %v5835 = vpop.xlane.xlu0 %5834
    %v5836 = vsel %vm579, %v5716, 0.0
    %5837 = vadd.xlane.f32.xlu0 %v5836
    %v5838 = vpop.xlane.xlu0 %5837
    %v5839 = vsel %vm579, %v5718, 0.0
    %5840 = vadd.xlane.f32.xlu0 %v5839
    %v5841 = vpop.xlane.xlu0 %5840
    %v5842 = vsel %vm579, %v5720, 0.0
    %5843 = vadd.xlane.f32.xlu0 %v5842
    %v5844 = vpop.xlane.xlu0 %5843
    %v5845 = vsel %vm579, %v5722, 0.0
    %5846 = vadd.xlane.f32.xlu0 %v5845
    %v5847 = vpop.xlane.xlu0 %5846
    %v5848 = vsel %vm579, %v5724, 0.0
    %5849 = vadd.xlane.f32.xlu0 %v5848
    %v5850 = vpop.xlane.xlu0 %5849
    %v5851 = vsel %vm579, %v5726, 0.0
    %5852 = vadd.xlane.f32.xlu0 %v5851
    %v5853 = vpop.xlane.xlu0 %5852
    %v5854 = vsel %vm579, %v5728, 0.0
    %5855 = vadd.xlane.f32.xlu0 %v5854
    %v5856 = vpop.xlane.xlu0 %5855
    %v5857 = vadd.f32 %v5763, %v684
    %v5858 = vadd.f32 %v5766, %v688
    %v5859 = vadd.f32 %v5769, %v695
    %v5860 = vadd.f32 %v5772, %v699
    %v5861 = vadd.f32 %v5775, %v706
    %v5862 = vadd.f32 %v5778, %v710
    %v5863 = vadd.f32 %v5781, %v717
    %v5864 = vadd.f32 %v5784, %v721
    %v5865 = vadd.f32 %v5787, %v728
    %v5866 = vadd.f32 %v5790, %v732
    %v5867 = vadd.f32 %v5793, %v739
    %v5868 = vadd.f32 %v5796, %v743
    %v5869 = vadd.f32 %v5799, %v750
    %v5870 = vadd.f32 %v5802, %v754
    %v5871 = vadd.f32 %v5805, %v761
    %v5872 = vadd.f32 %v5808, %v765
    %v5873 = vadd.f32 %v5811, %v772
    %v5874 = vadd.f32 %v5814, %v776
    %v5875 = vadd.f32 %v5817, %v783
    %v5876 = vadd.f32 %v5820, %v787
    %v5877 = vadd.f32 %v5823, %v794
    %v5878 = vadd.f32 %v5826, %v798
    %v5879 = vadd.f32 %v5829, %v805
    %v5880 = vadd.f32 %v5832, %v809
    %v5881 = vadd.f32 %v5835, %v816
    %v5882 = vadd.f32 %v5838, %v820
    %v5883 = vadd.f32 %v5841, %v827
    %v5884 = vadd.f32 %v5844, %v831
    %v5885 = vadd.f32 %v5847, %v838
    %v5886 = vadd.f32 %v5850, %v842
    %v5887 = vadd.f32 %v5853, %v849
    %v5888 = vadd.f32 %v5856, %v853
    %5921 = vset.pattern.permute.xlu0 0
    %5922 = vperm.xlu0 %5921, %v5857
    %v5923 = vpop.permute.xlu0 %5922
    %5924 = vset.pattern.permute.xlu0 0
    %5925 = vperm.xlu0 %5924, %v5858
    %v5926 = vpop.permute.xlu0 %5925
    %5927 = vset.pattern.permute.xlu0 0
    %5928 = vperm.xlu0 %5927, %v5859
    %v5929 = vpop.permute.xlu0 %5928
    %5930 = vset.pattern.permute.xlu0 0
    %5931 = vperm.xlu0 %5930, %v5860
    %v5932 = vpop.permute.xlu0 %5931
    %5933 = vset.pattern.permute.xlu0 0
    %5934 = vperm.xlu0 %5933, %v5861
    %v5935 = vpop.permute.xlu0 %5934
    %5936 = vset.pattern.permute.xlu0 0
    %5937 = vperm.xlu0 %5936, %v5862
    %v5938 = vpop.permute.xlu0 %5937
    %5939 = vset.pattern.permute.xlu0 0
    %5940 = vperm.xlu0 %5939, %v5863
    %v5941 = vpop.permute.xlu0 %5940
    %5942 = vset.pattern.permute.xlu0 0
    %5943 = vperm.xlu0 %5942, %v5864
    %v5944 = vpop.permute.xlu0 %5943
    %5945 = vset.pattern.permute.xlu0 0
    %5946 = vperm.xlu0 %5945, %v5865
    %v5947 = vpop.permute.xlu0 %5946
    %5948 = vset.pattern.permute.xlu0 0
    %5949 = vperm.xlu0 %5948, %v5866
    %v5950 = vpop.permute.xlu0 %5949
    %5951 = vset.pattern.permute.xlu0 0
    %5952 = vperm.xlu0 %5951, %v5867
    %v5953 = vpop.permute.xlu0 %5952
    %5954 = vset.pattern.permute.xlu0 0
    %5955 = vperm.xlu0 %5954, %v5868
    %v5956 = vpop.permute.xlu0 %5955
    %5957 = vset.pattern.permute.xlu0 0
    %5958 = vperm.xlu0 %5957, %v5869
    %v5959 = vpop.permute.xlu0 %5958
    %5960 = vset.pattern.permute.xlu0 0
    %5961 = vperm.xlu0 %5960, %v5870
    %v5962 = vpop.permute.xlu0 %5961
    %5963 = vset.pattern.permute.xlu0 0
    %5964 = vperm.xlu0 %5963, %v5871
    %v5965 = vpop.permute.xlu0 %5964
    %5966 = vset.pattern.permute.xlu0 0
    %5967 = vperm.xlu0 %5966, %v5872
    %v5968 = vpop.permute.xlu0 %5967
    %5969 = vset.pattern.permute.xlu0 0
    %5970 = vperm.xlu0 %5969, %v5873
    %v5971 = vpop.permute.xlu0 %5970
    %5972 = vset.pattern.permute.xlu0 0
    %5973 = vperm.xlu0 %5972, %v5874
    %v5974 = vpop.permute.xlu0 %5973
    %5975 = vset.pattern.permute.xlu0 0
    %5976 = vperm.xlu0 %5975, %v5875
    %v5977 = vpop.permute.xlu0 %5976
    %5978 = vset.pattern.permute.xlu0 0
    %5979 = vperm.xlu0 %5978, %v5876
    %v5980 = vpop.permute.xlu0 %5979
    %5981 = vset.pattern.permute.xlu0 0
    %5982 = vperm.xlu0 %5981, %v5877
    %v5983 = vpop.permute.xlu0 %5982
    %5984 = vset.pattern.permute.xlu0 0
    %5985 = vperm.xlu0 %5984, %v5878
    %v5986 = vpop.permute.xlu0 %5985
    %5987 = vset.pattern.permute.xlu0 0
    %5988 = vperm.xlu0 %5987, %v5879
    %v5989 = vpop.permute.xlu0 %5988
    %5990 = vset.pattern.permute.xlu0 0
    %5991 = vperm.xlu0 %5990, %v5880
    %v5992 = vpop.permute.xlu0 %5991
    %5993 = vset.pattern.permute.xlu0 0
    %5994 = vperm.xlu0 %5993, %v5881
    %v5995 = vpop.permute.xlu0 %5994
    %5996 = vset.pattern.permute.xlu0 0
    %5997 = vperm.xlu0 %5996, %v5882
    %v5998 = vpop.permute.xlu0 %5997
    %5999 = vset.pattern.permute.xlu0 0
    %6000 = vperm.xlu0 %5999, %v5883
    %v6001 = vpop.permute.xlu0 %6000
    %6002 = vset.pattern.permute.xlu0 0
    %6003 = vperm.xlu0 %6002, %v5884
    %v6004 = vpop.permute.xlu0 %6003
    %6005 = vset.pattern.permute.xlu0 0
    %6006 = vperm.xlu0 %6005, %v5885
    %v6007 = vpop.permute.xlu0 %6006
    %6008 = vset.pattern.permute.xlu0 0
    %6009 = vperm.xlu0 %6008, %v5886
    %v6010 = vpop.permute.xlu0 %6009
    %6011 = vset.pattern.permute.xlu0 0
    %6012 = vperm.xlu0 %6011, %v5887
    %v6013 = vpop.permute.xlu0 %6012
    %6014 = vset.pattern.permute.xlu0 0
    %6015 = vperm.xlu0 %6014, %v5888
    %v6016 = vpop.permute.xlu0 %6015
    %v6017 = vlaneseq
    %v6018 = vshrl.u32 %v6017, 7
    %v6019 = vsub.s32 %v1047, %v6018
    %v6020 = vrot.slane %v5923, %v6019
    %v6021 = vlaneseq
    %v6022 = vshrl.u32 %v6021, 7
    %v6023 = vsub.s32 %v1052, %v6022
    %v6024 = vrot.slane %v5926, %v6023
    %v6025 = vsel %vm1057, %v6024, %v6020
    %v6026 = vlaneseq
    %v6027 = vshrl.u32 %v6026, 7
    %v6028 = vsub.s32 %v1047, %v6027
    %v6029 = vrot.slane %v5929, %v6028
    %v6030 = vlaneseq
    %v6031 = vshrl.u32 %v6030, 7
    %v6032 = vsub.s32 %v1052, %v6031
    %v6033 = vrot.slane %v5932, %v6032
    %v6034 = vsel %vm1057, %v6033, %v6029
    %v6035 = vlaneseq
    %v6036 = vshrl.u32 %v6035, 7
    %v6037 = vsub.s32 %v1047, %v6036
    %v6038 = vrot.slane %v5935, %v6037
    %v6039 = vlaneseq
    %v6040 = vshrl.u32 %v6039, 7
    %v6041 = vsub.s32 %v1052, %v6040
    %v6042 = vrot.slane %v5938, %v6041
    %v6043 = vsel %vm1057, %v6042, %v6038
    %v6044 = vlaneseq
    %v6045 = vshrl.u32 %v6044, 7
    %v6046 = vsub.s32 %v1047, %v6045
    %v6047 = vrot.slane %v5941, %v6046
    %v6048 = vlaneseq
    %v6049 = vshrl.u32 %v6048, 7
    %v6050 = vsub.s32 %v1052, %v6049
    %v6051 = vrot.slane %v5944, %v6050
    %v6052 = vsel %vm1057, %v6051, %v6047
    %v6053 = vlaneseq
    %v6054 = vshrl.u32 %v6053, 7
    %v6055 = vsub.s32 %v1047, %v6054
    %v6056 = vrot.slane %v5947, %v6055
    %v6057 = vlaneseq
    %v6058 = vshrl.u32 %v6057, 7
    %v6059 = vsub.s32 %v1052, %v6058
    %v6060 = vrot.slane %v5950, %v6059
    %v6061 = vsel %vm1057, %v6060, %v6056
    %v6062 = vlaneseq
    %v6063 = vshrl.u32 %v6062, 7
    %v6064 = vsub.s32 %v1047, %v6063
    %v6065 = vrot.slane %v5953, %v6064
    %v6066 = vlaneseq
    %v6067 = vshrl.u32 %v6066, 7
    %v6068 = vsub.s32 %v1052, %v6067
    %v6069 = vrot.slane %v5956, %v6068
    %v6070 = vsel %vm1057, %v6069, %v6065
    %v6071 = vlaneseq
    %v6072 = vshrl.u32 %v6071, 7
    %v6073 = vsub.s32 %v1047, %v6072
    %v6074 = vrot.slane %v5959, %v6073
    %v6075 = vlaneseq
    %v6076 = vshrl.u32 %v6075, 7
    %v6077 = vsub.s32 %v1052, %v6076
    %v6078 = vrot.slane %v5962, %v6077
    %v6079 = vsel %vm1057, %v6078, %v6074
    %v6080 = vlaneseq
    %v6081 = vshrl.u32 %v6080, 7
    %v6082 = vsub.s32 %v1047, %v6081
    %v6083 = vrot.slane %v5965, %v6082
    %v6084 = vlaneseq
    %v6085 = vshrl.u32 %v6084, 7
    %v6086 = vsub.s32 %v1052, %v6085
    %v6087 = vrot.slane %v5968, %v6086
    %v6088 = vsel %vm1057, %v6087, %v6083
    %v6089 = vlaneseq
    %v6090 = vshrl.u32 %v6089, 7
    %v6091 = vsub.s32 %v1047, %v6090
    %v6092 = vrot.slane %v5971, %v6091
    %v6093 = vlaneseq
    %v6094 = vshrl.u32 %v6093, 7
    %v6095 = vsub.s32 %v1052, %v6094
    %v6096 = vrot.slane %v5974, %v6095
    %v6097 = vsel %vm1057, %v6096, %v6092
    %v6098 = vlaneseq
    %v6099 = vshrl.u32 %v6098, 7
    %v6100 = vsub.s32 %v1047, %v6099
    %v6101 = vrot.slane %v5977, %v6100
    %v6102 = vlaneseq
    %v6103 = vshrl.u32 %v6102, 7
    %v6104 = vsub.s32 %v1052, %v6103
    %v6105 = vrot.slane %v5980, %v6104
    %v6106 = vsel %vm1057, %v6105, %v6101
    %v6107 = vlaneseq
    %v6108 = vshrl.u32 %v6107, 7
    %v6109 = vsub.s32 %v1047, %v6108
    %v6110 = vrot.slane %v5983, %v6109
    %v6111 = vlaneseq
    %v6112 = vshrl.u32 %v6111, 7
    %v6113 = vsub.s32 %v1052, %v6112
    %v6114 = vrot.slane %v5986, %v6113
    %v6115 = vsel %vm1057, %v6114, %v6110
    %v6116 = vlaneseq
    %v6117 = vshrl.u32 %v6116, 7
    %v6118 = vsub.s32 %v1047, %v6117
    %v6119 = vrot.slane %v5989, %v6118
    %v6120 = vlaneseq
    %v6121 = vshrl.u32 %v6120, 7
    %v6122 = vsub.s32 %v1052, %v6121
    %v6123 = vrot.slane %v5992, %v6122
    %v6124 = vsel %vm1057, %v6123, %v6119
    %v6125 = vlaneseq
    %v6126 = vshrl.u32 %v6125, 7
    %v6127 = vsub.s32 %v1047, %v6126
    %v6128 = vrot.slane %v5995, %v6127
    %v6129 = vlaneseq
    %v6130 = vshrl.u32 %v6129, 7
    %v6131 = vsub.s32 %v1052, %v6130
    %v6132 = vrot.slane %v5998, %v6131
    %v6133 = vsel %vm1057, %v6132, %v6128
    %v6134 = vlaneseq
    %v6135 = vshrl.u32 %v6134, 7
    %v6136 = vsub.s32 %v1047, %v6135
    %v6137 = vrot.slane %v6001, %v6136
    %v6138 = vlaneseq
    %v6139 = vshrl.u32 %v6138, 7
    %v6140 = vsub.s32 %v1052, %v6139
    %v6141 = vrot.slane %v6004, %v6140
    %v6142 = vsel %vm1057, %v6141, %v6137
    %v6143 = vlaneseq
    %v6144 = vshrl.u32 %v6143, 7
    %v6145 = vsub.s32 %v1047, %v6144
    %v6146 = vrot.slane %v6007, %v6145
    %v6147 = vlaneseq
    %v6148 = vshrl.u32 %v6147, 7
    %v6149 = vsub.s32 %v1052, %v6148
    %v6150 = vrot.slane %v6010, %v6149
    %v6151 = vsel %vm1057, %v6150, %v6146
    %v6152 = vlaneseq
    %v6153 = vshrl.u32 %v6152, 7
    %v6154 = vsub.s32 %v1047, %v6153
    %v6155 = vrot.slane %v6013, %v6154
    %v6156 = vlaneseq
    %v6157 = vshrl.u32 %v6156, 7
    %v6158 = vsub.s32 %v1052, %v6157
    %v6159 = vrot.slane %v6016, %v6158
    %v6160 = vsel %vm1057, %v6159, %v6155
    %v6161 = vsel %vm1194, %v6034, %v6025
    %v6162 = vsel %vm1196, %v6043, %v6161
    %v6163 = vsel %vm1198, %v6052, %v6162
    %v6164 = vsel %vm1200, %v6061, %v6163
    %v6165 = vsel %vm1202, %v6070, %v6164
    %v6166 = vsel %vm1204, %v6079, %v6165
    %v6167 = vsel %vm1206, %v6088, %v6166
    %v6168 = vsel %vm1194, %v6106, %v6097
    %v6169 = vsel %vm1196, %v6115, %v6168
    %v6170 = vsel %vm1198, %v6124, %v6169
    %v6171 = vsel %vm1200, %v6133, %v6170
    %v6172 = vsel %vm1202, %v6142, %v6171
    %v6173 = vsel %vm1204, %v6151, %v6172
    %v6174 = vsel %vm1206, %v6160, %v6173
    %v6177 = vsel %vm579, %v6167, -inf
    %6178 = vmax.xlane.f32.xlu0 %v6177
    %v6179 = vpop.xlane.xlu0 %6178
    %v6180 = vsel %vm579, %v6174, -inf
    %6181 = vmax.xlane.f32.xlu0 %v6180
    %v6182 = vpop.xlane.xlu0 %6181
    %v6185 = vlaneseq
    %v6186 = vshrl.u32 %v6185, 7
    %v6187 = vsub.s32 0, %v6186
    %v6188 = vrot.slane %v6179, %v6187
    %v6189 = vlaneseq
    %v6190 = vshrl.u32 %v6189, 7
    %v6191 = vsub.s32 1, %v6190
    %v6192 = vrot.slane %v6179, %v6191
    %v6193 = vlaneseq
    %v6194 = vshrl.u32 %v6193, 7
    %v6195 = vsub.s32 2, %v6194
    %v6196 = vrot.slane %v6179, %v6195
    %v6197 = vlaneseq
    %v6198 = vshrl.u32 %v6197, 7
    %v6199 = vsub.s32 3, %v6198
    %v6200 = vrot.slane %v6179, %v6199
    %v6201 = vlaneseq
    %v6202 = vshrl.u32 %v6201, 7
    %v6203 = vsub.s32 4, %v6202
    %v6204 = vrot.slane %v6179, %v6203
    %v6205 = vlaneseq
    %v6206 = vshrl.u32 %v6205, 7
    %v6207 = vsub.s32 5, %v6206
    %v6208 = vrot.slane %v6179, %v6207
    %v6209 = vlaneseq
    %v6210 = vshrl.u32 %v6209, 7
    %v6211 = vsub.s32 6, %v6210
    %v6212 = vrot.slane %v6179, %v6211
    %v6213 = vlaneseq
    %v6214 = vshrl.u32 %v6213, 7
    %v6215 = vsub.s32 7, %v6214
    %v6216 = vrot.slane %v6179, %v6215
    %v6217 = vlaneseq
    %v6218 = vshrl.u32 %v6217, 7
    %v6219 = vsub.s32 0, %v6218
    %v6220 = vrot.slane %v6182, %v6219
    %v6221 = vlaneseq
    %v6222 = vshrl.u32 %v6221, 7
    %v6223 = vsub.s32 1, %v6222
    %v6224 = vrot.slane %v6182, %v6223
    %v6225 = vlaneseq
    %v6226 = vshrl.u32 %v6225, 7
    %v6227 = vsub.s32 2, %v6226
    %v6228 = vrot.slane %v6182, %v6227
    %v6229 = vlaneseq
    %v6230 = vshrl.u32 %v6229, 7
    %v6231 = vsub.s32 3, %v6230
    %v6232 = vrot.slane %v6182, %v6231
    %v6233 = vlaneseq
    %v6234 = vshrl.u32 %v6233, 7
    %v6235 = vsub.s32 4, %v6234
    %v6236 = vrot.slane %v6182, %v6235
    %v6237 = vlaneseq
    %v6238 = vshrl.u32 %v6237, 7
    %v6239 = vsub.s32 5, %v6238
    %v6240 = vrot.slane %v6182, %v6239
    %v6241 = vlaneseq
    %v6242 = vshrl.u32 %v6241, 7
    %v6243 = vsub.s32 6, %v6242
    %v6244 = vrot.slane %v6182, %v6243
    %v6245 = vlaneseq
    %v6246 = vshrl.u32 %v6245, 7
    %v6247 = vsub.s32 7, %v6246
    %v6248 = vrot.slane %v6182, %v6247
    %v6265 = vsub.f32 %v5857, %v6188
    %v6266 = vsub.f32 %v5858, %v6188
    %v6267 = vsub.f32 %v5859, %v6192
    %v6268 = vsub.f32 %v5860, %v6192
    %v6269 = vsub.f32 %v5861, %v6196
    %v6270 = vsub.f32 %v5862, %v6196
    %v6271 = vsub.f32 %v5863, %v6200
    %v6272 = vsub.f32 %v5864, %v6200
    %v6273 = vsub.f32 %v5865, %v6204
    %v6274 = vsub.f32 %v5866, %v6204
    %v6275 = vsub.f32 %v5867, %v6208
    %v6276 = vsub.f32 %v5868, %v6208
    %v6277 = vsub.f32 %v5869, %v6212
    %v6278 = vsub.f32 %v5870, %v6212
    %v6279 = vsub.f32 %v5871, %v6216
    %v6280 = vsub.f32 %v5872, %v6216
    %v6281 = vsub.f32 %v5873, %v6220
    %v6282 = vsub.f32 %v5874, %v6220
    %v6283 = vsub.f32 %v5875, %v6224
    %v6284 = vsub.f32 %v5876, %v6224
    %v6285 = vsub.f32 %v5877, %v6228
    %v6286 = vsub.f32 %v5878, %v6228
    %v6287 = vsub.f32 %v5879, %v6232
    %v6288 = vsub.f32 %v5880, %v6232
    %v6289 = vsub.f32 %v5881, %v6236
    %v6290 = vsub.f32 %v5882, %v6236
    %v6291 = vsub.f32 %v5883, %v6240
    %v6292 = vsub.f32 %v5884, %v6240
    %v6293 = vsub.f32 %v5885, %v6244
    %v6294 = vsub.f32 %v5886, %v6244
    %v6295 = vsub.f32 %v5887, %v6248
    %v6296 = vsub.f32 %v5888, %v6248
    %v6297 = vmul.f32 %v6265, 1.442695
    %v6298 = vpow.pop %v6297
    %v6299 = vmul.f32 %v6266, 1.442695
    %v6300 = vpow.pop %v6299
    %v6301 = vmul.f32 %v6267, 1.442695
    %v6302 = vpow.pop %v6301
    %v6303 = vmul.f32 %v6268, 1.442695
    %v6304 = vpow.pop %v6303
    %v6305 = vmul.f32 %v6269, 1.442695
    %v6306 = vpow.pop %v6305
    %v6307 = vmul.f32 %v6270, 1.442695
    %v6308 = vpow.pop %v6307
    %v6309 = vmul.f32 %v6271, 1.442695
    %v6310 = vpow.pop %v6309
    %v6311 = vmul.f32 %v6272, 1.442695
    %v6312 = vpow.pop %v6311
    %v6313 = vmul.f32 %v6273, 1.442695
    %v6314 = vpow.pop %v6313
    %v6315 = vmul.f32 %v6274, 1.442695
    %v6316 = vpow.pop %v6315
    %v6317 = vmul.f32 %v6275, 1.442695
    %v6318 = vpow.pop %v6317
    %v6319 = vmul.f32 %v6276, 1.442695
    %v6320 = vpow.pop %v6319
    %v6321 = vmul.f32 %v6277, 1.442695
    %v6322 = vpow.pop %v6321
    %v6323 = vmul.f32 %v6278, 1.442695
    %v6324 = vpow.pop %v6323
    %v6325 = vmul.f32 %v6279, 1.442695
    %v6326 = vpow.pop %v6325
    %v6327 = vmul.f32 %v6280, 1.442695
    %v6328 = vpow.pop %v6327
    %v6329 = vmul.f32 %v6281, 1.442695
    %v6330 = vpow.pop %v6329
    %v6331 = vmul.f32 %v6282, 1.442695
    %v6332 = vpow.pop %v6331
    %v6333 = vmul.f32 %v6283, 1.442695
    %v6334 = vpow.pop %v6333
    %v6335 = vmul.f32 %v6284, 1.442695
    %v6336 = vpow.pop %v6335
    %v6337 = vmul.f32 %v6285, 1.442695
    %v6338 = vpow.pop %v6337
    %v6339 = vmul.f32 %v6286, 1.442695
    %v6340 = vpow.pop %v6339
    %v6341 = vmul.f32 %v6287, 1.442695
    %v6342 = vpow.pop %v6341
    %v6343 = vmul.f32 %v6288, 1.442695
    %v6344 = vpow.pop %v6343
    %v6345 = vmul.f32 %v6289, 1.442695
    %v6346 = vpow.pop %v6345
    %v6347 = vmul.f32 %v6290, 1.442695
    %v6348 = vpow.pop %v6347
    %v6349 = vmul.f32 %v6291, 1.442695
    %v6350 = vpow.pop %v6349
    %v6351 = vmul.f32 %v6292, 1.442695
    %v6352 = vpow.pop %v6351
    %v6353 = vmul.f32 %v6293, 1.442695
    %v6354 = vpow.pop %v6353
    %v6355 = vmul.f32 %v6294, 1.442695
    %v6356 = vpow.pop %v6355
    %v6357 = vmul.f32 %v6295, 1.442695
    %v6358 = vpow.pop %v6357
    %v6359 = vmul.f32 %v6296, 1.442695
    %v6360 = vpow.pop %v6359
    %6393 = vset.pattern.permute.xlu0 0
    %6394 = vperm.xlu0 %6393, %v6298
    %v6395 = vpop.permute.xlu0 %6394
    %6396 = vset.pattern.permute.xlu0 0
    %6397 = vperm.xlu0 %6396, %v6300
    %v6398 = vpop.permute.xlu0 %6397
    %6399 = vset.pattern.permute.xlu0 0
    %6400 = vperm.xlu0 %6399, %v6302
    %v6401 = vpop.permute.xlu0 %6400
    %6402 = vset.pattern.permute.xlu0 0
    %6403 = vperm.xlu0 %6402, %v6304
    %v6404 = vpop.permute.xlu0 %6403
    %6405 = vset.pattern.permute.xlu0 0
    %6406 = vperm.xlu0 %6405, %v6306
    %v6407 = vpop.permute.xlu0 %6406
    %6408 = vset.pattern.permute.xlu0 0
    %6409 = vperm.xlu0 %6408, %v6308
    %v6410 = vpop.permute.xlu0 %6409
    %6411 = vset.pattern.permute.xlu0 0
    %6412 = vperm.xlu0 %6411, %v6310
    %v6413 = vpop.permute.xlu0 %6412
    %6414 = vset.pattern.permute.xlu0 0
    %6415 = vperm.xlu0 %6414, %v6312
    %v6416 = vpop.permute.xlu0 %6415
    %6417 = vset.pattern.permute.xlu0 0
    %6418 = vperm.xlu0 %6417, %v6314
    %v6419 = vpop.permute.xlu0 %6418
    %6420 = vset.pattern.permute.xlu0 0
    %6421 = vperm.xlu0 %6420, %v6316
    %v6422 = vpop.permute.xlu0 %6421
    %6423 = vset.pattern.permute.xlu0 0
    %6424 = vperm.xlu0 %6423, %v6318
    %v6425 = vpop.permute.xlu0 %6424
    %6426 = vset.pattern.permute.xlu0 0
    %6427 = vperm.xlu0 %6426, %v6320
    %v6428 = vpop.permute.xlu0 %6427
    %6429 = vset.pattern.permute.xlu0 0
    %6430 = vperm.xlu0 %6429, %v6322
    %v6431 = vpop.permute.xlu0 %6430
    %6432 = vset.pattern.permute.xlu0 0
    %6433 = vperm.xlu0 %6432, %v6324
    %v6434 = vpop.permute.xlu0 %6433
    %6435 = vset.pattern.permute.xlu0 0
    %6436 = vperm.xlu0 %6435, %v6326
    %v6437 = vpop.permute.xlu0 %6436
    %6438 = vset.pattern.permute.xlu0 0
    %6439 = vperm.xlu0 %6438, %v6328
    %v6440 = vpop.permute.xlu0 %6439
    %6441 = vset.pattern.permute.xlu0 0
    %6442 = vperm.xlu0 %6441, %v6330
    %v6443 = vpop.permute.xlu0 %6442
    %6444 = vset.pattern.permute.xlu0 0
    %6445 = vperm.xlu0 %6444, %v6332
    %v6446 = vpop.permute.xlu0 %6445
    %6447 = vset.pattern.permute.xlu0 0
    %6448 = vperm.xlu0 %6447, %v6334
    %v6449 = vpop.permute.xlu0 %6448
    %6450 = vset.pattern.permute.xlu0 0
    %6451 = vperm.xlu0 %6450, %v6336
    %v6452 = vpop.permute.xlu0 %6451
    %6453 = vset.pattern.permute.xlu0 0
    %6454 = vperm.xlu0 %6453, %v6338
    %v6455 = vpop.permute.xlu0 %6454
    %6456 = vset.pattern.permute.xlu0 0
    %6457 = vperm.xlu0 %6456, %v6340
    %v6458 = vpop.permute.xlu0 %6457
    %6459 = vset.pattern.permute.xlu0 0
    %6460 = vperm.xlu0 %6459, %v6342
    %v6461 = vpop.permute.xlu0 %6460
    %6462 = vset.pattern.permute.xlu0 0
    %6463 = vperm.xlu0 %6462, %v6344
    %v6464 = vpop.permute.xlu0 %6463
    %6465 = vset.pattern.permute.xlu0 0
    %6466 = vperm.xlu0 %6465, %v6346
    %v6467 = vpop.permute.xlu0 %6466
    %6468 = vset.pattern.permute.xlu0 0
    %6469 = vperm.xlu0 %6468, %v6348
    %v6470 = vpop.permute.xlu0 %6469
    %6471 = vset.pattern.permute.xlu0 0
    %6472 = vperm.xlu0 %6471, %v6350
    %v6473 = vpop.permute.xlu0 %6472
    %6474 = vset.pattern.permute.xlu0 0
    %6475 = vperm.xlu0 %6474, %v6352
    %v6476 = vpop.permute.xlu0 %6475
    %6477 = vset.pattern.permute.xlu0 0
    %6478 = vperm.xlu0 %6477, %v6354
    %v6479 = vpop.permute.xlu0 %6478
    %6480 = vset.pattern.permute.xlu0 0
    %6481 = vperm.xlu0 %6480, %v6356
    %v6482 = vpop.permute.xlu0 %6481
    %6483 = vset.pattern.permute.xlu0 0
    %6484 = vperm.xlu0 %6483, %v6358
    %v6485 = vpop.permute.xlu0 %6484
    %6486 = vset.pattern.permute.xlu0 0
    %6487 = vperm.xlu0 %6486, %v6360
    %v6488 = vpop.permute.xlu0 %6487
    %v6489 = vlaneseq
    %v6490 = vshrl.u32 %v6489, 7
    %v6491 = vsub.s32 %v1047, %v6490
    %v6492 = vrot.slane %v6395, %v6491
    %v6493 = vlaneseq
    %v6494 = vshrl.u32 %v6493, 7
    %v6495 = vsub.s32 %v1052, %v6494
    %v6496 = vrot.slane %v6398, %v6495
    %v6497 = vsel %vm1057, %v6496, %v6492
    %v6498 = vlaneseq
    %v6499 = vshrl.u32 %v6498, 7
    %v6500 = vsub.s32 %v1047, %v6499
    %v6501 = vrot.slane %v6401, %v6500
    %v6502 = vlaneseq
    %v6503 = vshrl.u32 %v6502, 7
    %v6504 = vsub.s32 %v1052, %v6503
    %v6505 = vrot.slane %v6404, %v6504
    %v6506 = vsel %vm1057, %v6505, %v6501
    %v6507 = vlaneseq
    %v6508 = vshrl.u32 %v6507, 7
    %v6509 = vsub.s32 %v1047, %v6508
    %v6510 = vrot.slane %v6407, %v6509
    %v6511 = vlaneseq
    %v6512 = vshrl.u32 %v6511, 7
    %v6513 = vsub.s32 %v1052, %v6512
    %v6514 = vrot.slane %v6410, %v6513
    %v6515 = vsel %vm1057, %v6514, %v6510
    %v6516 = vlaneseq
    %v6517 = vshrl.u32 %v6516, 7
    %v6518 = vsub.s32 %v1047, %v6517
    %v6519 = vrot.slane %v6413, %v6518
    %v6520 = vlaneseq
    %v6521 = vshrl.u32 %v6520, 7
    %v6522 = vsub.s32 %v1052, %v6521
    %v6523 = vrot.slane %v6416, %v6522
    %v6524 = vsel %vm1057, %v6523, %v6519
    %v6525 = vlaneseq
    %v6526 = vshrl.u32 %v6525, 7
    %v6527 = vsub.s32 %v1047, %v6526
    %v6528 = vrot.slane %v6419, %v6527
    %v6529 = vlaneseq
    %v6530 = vshrl.u32 %v6529, 7
    %v6531 = vsub.s32 %v1052, %v6530
    %v6532 = vrot.slane %v6422, %v6531
    %v6533 = vsel %vm1057, %v6532, %v6528
    %v6534 = vlaneseq
    %v6535 = vshrl.u32 %v6534, 7
    %v6536 = vsub.s32 %v1047, %v6535
    %v6537 = vrot.slane %v6425, %v6536
    %v6538 = vlaneseq
    %v6539 = vshrl.u32 %v6538, 7
    %v6540 = vsub.s32 %v1052, %v6539
    %v6541 = vrot.slane %v6428, %v6540
    %v6542 = vsel %vm1057, %v6541, %v6537
    %v6543 = vlaneseq
    %v6544 = vshrl.u32 %v6543, 7
    %v6545 = vsub.s32 %v1047, %v6544
    %v6546 = vrot.slane %v6431, %v6545
    %v6547 = vlaneseq
    %v6548 = vshrl.u32 %v6547, 7
    %v6549 = vsub.s32 %v1052, %v6548
    %v6550 = vrot.slane %v6434, %v6549
    %v6551 = vsel %vm1057, %v6550, %v6546
    %v6552 = vlaneseq
    %v6553 = vshrl.u32 %v6552, 7
    %v6554 = vsub.s32 %v1047, %v6553
    %v6555 = vrot.slane %v6437, %v6554
    %v6556 = vlaneseq
    %v6557 = vshrl.u32 %v6556, 7
    %v6558 = vsub.s32 %v1052, %v6557
    %v6559 = vrot.slane %v6440, %v6558
    %v6560 = vsel %vm1057, %v6559, %v6555
    %v6561 = vlaneseq
    %v6562 = vshrl.u32 %v6561, 7
    %v6563 = vsub.s32 %v1047, %v6562
    %v6564 = vrot.slane %v6443, %v6563
    %v6565 = vlaneseq
    %v6566 = vshrl.u32 %v6565, 7
    %v6567 = vsub.s32 %v1052, %v6566
    %v6568 = vrot.slane %v6446, %v6567
    %v6569 = vsel %vm1057, %v6568, %v6564
    %v6570 = vlaneseq
    %v6571 = vshrl.u32 %v6570, 7
    %v6572 = vsub.s32 %v1047, %v6571
    %v6573 = vrot.slane %v6449, %v6572
    %v6574 = vlaneseq
    %v6575 = vshrl.u32 %v6574, 7
    %v6576 = vsub.s32 %v1052, %v6575
    %v6577 = vrot.slane %v6452, %v6576
    %v6578 = vsel %vm1057, %v6577, %v6573
    %v6579 = vlaneseq
    %v6580 = vshrl.u32 %v6579, 7
    %v6581 = vsub.s32 %v1047, %v6580
    %v6582 = vrot.slane %v6455, %v6581
    %v6583 = vlaneseq
    %v6584 = vshrl.u32 %v6583, 7
    %v6585 = vsub.s32 %v1052, %v6584
    %v6586 = vrot.slane %v6458, %v6585
    %v6587 = vsel %vm1057, %v6586, %v6582
    %v6588 = vlaneseq
    %v6589 = vshrl.u32 %v6588, 7
    %v6590 = vsub.s32 %v1047, %v6589
    %v6591 = vrot.slane %v6461, %v6590
    %v6592 = vlaneseq
    %v6593 = vshrl.u32 %v6592, 7
    %v6594 = vsub.s32 %v1052, %v6593
    %v6595 = vrot.slane %v6464, %v6594
    %v6596 = vsel %vm1057, %v6595, %v6591
    %v6597 = vlaneseq
    %v6598 = vshrl.u32 %v6597, 7
    %v6599 = vsub.s32 %v1047, %v6598
    %v6600 = vrot.slane %v6467, %v6599
    %v6601 = vlaneseq
    %v6602 = vshrl.u32 %v6601, 7
    %v6603 = vsub.s32 %v1052, %v6602
    %v6604 = vrot.slane %v6470, %v6603
    %v6605 = vsel %vm1057, %v6604, %v6600
    %v6606 = vlaneseq
    %v6607 = vshrl.u32 %v6606, 7
    %v6608 = vsub.s32 %v1047, %v6607
    %v6609 = vrot.slane %v6473, %v6608
    %v6610 = vlaneseq
    %v6611 = vshrl.u32 %v6610, 7
    %v6612 = vsub.s32 %v1052, %v6611
    %v6613 = vrot.slane %v6476, %v6612
    %v6614 = vsel %vm1057, %v6613, %v6609
    %v6615 = vlaneseq
    %v6616 = vshrl.u32 %v6615, 7
    %v6617 = vsub.s32 %v1047, %v6616
    %v6618 = vrot.slane %v6479, %v6617
    %v6619 = vlaneseq
    %v6620 = vshrl.u32 %v6619, 7
    %v6621 = vsub.s32 %v1052, %v6620
    %v6622 = vrot.slane %v6482, %v6621
    %v6623 = vsel %vm1057, %v6622, %v6618
    %v6624 = vlaneseq
    %v6625 = vshrl.u32 %v6624, 7
    %v6626 = vsub.s32 %v1047, %v6625
    %v6627 = vrot.slane %v6485, %v6626
    %v6628 = vlaneseq
    %v6629 = vshrl.u32 %v6628, 7
    %v6630 = vsub.s32 %v1052, %v6629
    %v6631 = vrot.slane %v6488, %v6630
    %v6632 = vsel %vm1057, %v6631, %v6627
    %v6633 = vsel %vm1194, %v6506, %v6497
    %v6634 = vsel %vm1196, %v6515, %v6633
    %v6635 = vsel %vm1198, %v6524, %v6634
    %v6636 = vsel %vm1200, %v6533, %v6635
    %v6637 = vsel %vm1202, %v6542, %v6636
    %v6638 = vsel %vm1204, %v6551, %v6637
    %v6639 = vsel %vm1206, %v6560, %v6638
    %v6640 = vsel %vm1194, %v6578, %v6569
    %v6641 = vsel %vm1196, %v6587, %v6640
    %v6642 = vsel %vm1198, %v6596, %v6641
    %v6643 = vsel %vm1200, %v6605, %v6642
    %v6644 = vsel %vm1202, %v6614, %v6643
    %v6645 = vsel %vm1204, %v6623, %v6644
    %v6646 = vsel %vm1206, %v6632, %v6645
    %v6649 = vsel %vm579, %v6639, 0.0
    %6650 = vadd.xlane.f32.xlu0 %v6649
    %v6651 = vpop.xlane.xlu0 %6650
    %v6652 = vsel %vm579, %v6646, 0.0
    %6653 = vadd.xlane.f32.xlu0 %v6652
    %v6654 = vpop.xlane.xlu0 %6653
    %v6655 = vrcp.pop %v6651
    %v6656 = vrcp.pop %v6654
    %v6659 = vlaneseq
    %v6660 = vshrl.u32 %v6659, 7
    %v6661 = vsub.s32 0, %v6660
    %v6662 = vrot.slane %v6655, %v6661
    %v6663 = vlaneseq
    %v6664 = vshrl.u32 %v6663, 7
    %v6665 = vsub.s32 1, %v6664
    %v6666 = vrot.slane %v6655, %v6665
    %v6667 = vlaneseq
    %v6668 = vshrl.u32 %v6667, 7
    %v6669 = vsub.s32 2, %v6668
    %v6670 = vrot.slane %v6655, %v6669
    %v6671 = vlaneseq
    %v6672 = vshrl.u32 %v6671, 7
    %v6673 = vsub.s32 3, %v6672
    %v6674 = vrot.slane %v6655, %v6673
    %v6675 = vlaneseq
    %v6676 = vshrl.u32 %v6675, 7
    %v6677 = vsub.s32 4, %v6676
    %v6678 = vrot.slane %v6655, %v6677
    %v6679 = vlaneseq
    %v6680 = vshrl.u32 %v6679, 7
    %v6681 = vsub.s32 5, %v6680
    %v6682 = vrot.slane %v6655, %v6681
    %v6683 = vlaneseq
    %v6684 = vshrl.u32 %v6683, 7
    %v6685 = vsub.s32 6, %v6684
    %v6686 = vrot.slane %v6655, %v6685
    %v6687 = vlaneseq
    %v6688 = vshrl.u32 %v6687, 7
    %v6689 = vsub.s32 7, %v6688
    %v6690 = vrot.slane %v6655, %v6689
    %v6691 = vlaneseq
    %v6692 = vshrl.u32 %v6691, 7
    %v6693 = vsub.s32 0, %v6692
    %v6694 = vrot.slane %v6656, %v6693
    %v6695 = vlaneseq
    %v6696 = vshrl.u32 %v6695, 7
    %v6697 = vsub.s32 1, %v6696
    %v6698 = vrot.slane %v6656, %v6697
    %v6699 = vlaneseq
    %v6700 = vshrl.u32 %v6699, 7
    %v6701 = vsub.s32 2, %v6700
    %v6702 = vrot.slane %v6656, %v6701
    %v6703 = vlaneseq
    %v6704 = vshrl.u32 %v6703, 7
    %v6705 = vsub.s32 3, %v6704
    %v6706 = vrot.slane %v6656, %v6705
    %v6707 = vlaneseq
    %v6708 = vshrl.u32 %v6707, 7
    %v6709 = vsub.s32 4, %v6708
    %v6710 = vrot.slane %v6656, %v6709
    %v6711 = vlaneseq
    %v6712 = vshrl.u32 %v6711, 7
    %v6713 = vsub.s32 5, %v6712
    %v6714 = vrot.slane %v6656, %v6713
    %v6715 = vlaneseq
    %v6716 = vshrl.u32 %v6715, 7
    %v6717 = vsub.s32 6, %v6716
    %v6718 = vrot.slane %v6656, %v6717
    %v6719 = vlaneseq
    %v6720 = vshrl.u32 %v6719, 7
    %v6721 = vsub.s32 7, %v6720
    %v6722 = vrot.slane %v6656, %v6721
    %v6739 = vmul.f32 %v6298, %v6662
    %v6740 = vmul.f32 %v6300, %v6662
    %v6741 = vmul.f32 %v6302, %v6666
    %v6742 = vmul.f32 %v6304, %v6666
    %v6743 = vmul.f32 %v6306, %v6670
    %v6744 = vmul.f32 %v6308, %v6670
    %v6745 = vmul.f32 %v6310, %v6674
    %v6746 = vmul.f32 %v6312, %v6674
    %v6747 = vmul.f32 %v6314, %v6678
    %v6748 = vmul.f32 %v6316, %v6678
    %v6749 = vmul.f32 %v6318, %v6682
    %v6750 = vmul.f32 %v6320, %v6682
    %v6751 = vmul.f32 %v6322, %v6686
    %v6752 = vmul.f32 %v6324, %v6686
    %v6753 = vmul.f32 %v6326, %v6690
    %v6754 = vmul.f32 %v6328, %v6690
    %v6755 = vmul.f32 %v6330, %v6694
    %v6756 = vmul.f32 %v6332, %v6694
    %v6757 = vmul.f32 %v6334, %v6698
    %v6758 = vmul.f32 %v6336, %v6698
    %v6759 = vmul.f32 %v6338, %v6702
    %v6760 = vmul.f32 %v6340, %v6702
    %v6761 = vmul.f32 %v6342, %v6706
    %v6762 = vmul.f32 %v6344, %v6706
    %v6763 = vmul.f32 %v6346, %v6710
    %v6764 = vmul.f32 %v6348, %v6710
    %v6765 = vmul.f32 %v6350, %v6714
    %v6766 = vmul.f32 %v6352, %v6714
    %v6767 = vmul.f32 %v6354, %v6718
    %v6768 = vmul.f32 %v6356, %v6718
    %v6769 = vmul.f32 %v6358, %v6722
    %v6770 = vmul.f32 %v6360, %v6722
    %v6771 = vpack.c.bf16 %v6740, %v6739
    %v6772 = vpack.c.bf16 %v6742, %v6741
    %v6773 = vpack.c.bf16 %v6744, %v6743
    %v6774 = vpack.c.bf16 %v6746, %v6745
    %v6775 = vpack.c.bf16 %v6748, %v6747
    %v6776 = vpack.c.bf16 %v6750, %v6749
    %v6777 = vpack.c.bf16 %v6752, %v6751
    %v6778 = vpack.c.bf16 %v6754, %v6753
    %v6779 = vpack.c.bf16 %v6756, %v6755
    %v6780 = vpack.c.bf16 %v6758, %v6757
    %v6781 = vpack.c.bf16 %v6760, %v6759
    %v6782 = vpack.c.bf16 %v6762, %v6761
    %v6783 = vpack.c.bf16 %v6764, %v6763
    %v6784 = vpack.c.bf16 %v6766, %v6765
    %v6785 = vpack.c.bf16 %v6768, %v6767
    %v6786 = vpack.c.bf16 %v6770, %v6769
    %v6803 = vunpack.c.l.b16 %v6771
    %v6804 = vunpack.c.h.b16 %v6771
    %v6805 = vunpack.c.l.b16 %v6772
    %v6806 = vunpack.c.h.b16 %v6772
    %v6807 = vunpack.c.l.b16 %v6773
    %v6808 = vunpack.c.h.b16 %v6773
    %v6809 = vunpack.c.l.b16 %v6774
    %v6810 = vunpack.c.h.b16 %v6774
    %v6811 = vunpack.c.l.b16 %v6775
    %v6812 = vunpack.c.h.b16 %v6775
    %v6813 = vunpack.c.l.b16 %v6776
    %v6814 = vunpack.c.h.b16 %v6776
    %v6815 = vunpack.c.l.b16 %v6777
    %v6816 = vunpack.c.h.b16 %v6777
    %v6817 = vunpack.c.l.b16 %v6778
    %v6818 = vunpack.c.h.b16 %v6778
    %v6819 = vunpack.c.l.b16 %v6779
    %v6820 = vunpack.c.h.b16 %v6779
    %v6821 = vunpack.c.l.b16 %v6780
    %v6822 = vunpack.c.h.b16 %v6780
    %v6823 = vunpack.c.l.b16 %v6781
    %v6824 = vunpack.c.h.b16 %v6781
    %v6825 = vunpack.c.l.b16 %v6782
    %v6826 = vunpack.c.h.b16 %v6782
    %v6827 = vunpack.c.l.b16 %v6783
    %v6828 = vunpack.c.h.b16 %v6783
    %v6829 = vunpack.c.l.b16 %v6784
    %v6830 = vunpack.c.h.b16 %v6784
    %v6831 = vunpack.c.l.b16 %v6785
    %v6832 = vunpack.c.h.b16 %v6785
    %v6833 = vunpack.c.l.b16 %v6786
    %v6834 = vunpack.c.h.b16 %v6786
    %6835 = vset.pattern.permute.xlu0 0
    %6836 = vperm.xlu0 %6835, %v6803
    %v6837 = vpop.permute.xlu0 %6836
    %6838 = vset.pattern.permute.xlu0 0
    %6839 = vperm.xlu0 %6838, %v6804
    %v6840 = vpop.permute.xlu0 %6839
    %6841 = vset.pattern.permute.xlu0 0
    %6842 = vperm.xlu0 %6841, %v6805
    %v6843 = vpop.permute.xlu0 %6842
    %6844 = vset.pattern.permute.xlu0 0
    %6845 = vperm.xlu0 %6844, %v6806
    %v6846 = vpop.permute.xlu0 %6845
    %6847 = vset.pattern.permute.xlu0 0
    %6848 = vperm.xlu0 %6847, %v6807
    %v6849 = vpop.permute.xlu0 %6848
    %6850 = vset.pattern.permute.xlu0 0
    %6851 = vperm.xlu0 %6850, %v6808
    %v6852 = vpop.permute.xlu0 %6851
    %6853 = vset.pattern.permute.xlu0 0
    %6854 = vperm.xlu0 %6853, %v6809
    %v6855 = vpop.permute.xlu0 %6854
    %6856 = vset.pattern.permute.xlu0 0
    %6857 = vperm.xlu0 %6856, %v6810
    %v6858 = vpop.permute.xlu0 %6857
    %6859 = vset.pattern.permute.xlu0 0
    %6860 = vperm.xlu0 %6859, %v6811
    %v6861 = vpop.permute.xlu0 %6860
    %6862 = vset.pattern.permute.xlu0 0
    %6863 = vperm.xlu0 %6862, %v6812
    %v6864 = vpop.permute.xlu0 %6863
    %6865 = vset.pattern.permute.xlu0 0
    %6866 = vperm.xlu0 %6865, %v6813
    %v6867 = vpop.permute.xlu0 %6866
    %6868 = vset.pattern.permute.xlu0 0
    %6869 = vperm.xlu0 %6868, %v6814
    %v6870 = vpop.permute.xlu0 %6869
    %6871 = vset.pattern.permute.xlu0 0
    %6872 = vperm.xlu0 %6871, %v6815
    %v6873 = vpop.permute.xlu0 %6872
    %6874 = vset.pattern.permute.xlu0 0
    %6875 = vperm.xlu0 %6874, %v6816
    %v6876 = vpop.permute.xlu0 %6875
    %6877 = vset.pattern.permute.xlu0 0
    %6878 = vperm.xlu0 %6877, %v6817
    %v6879 = vpop.permute.xlu0 %6878
    %6880 = vset.pattern.permute.xlu0 0
    %6881 = vperm.xlu0 %6880, %v6818
    %v6882 = vpop.permute.xlu0 %6881
    %6883 = vset.pattern.permute.xlu0 0
    %6884 = vperm.xlu0 %6883, %v6819
    %v6885 = vpop.permute.xlu0 %6884
    %6886 = vset.pattern.permute.xlu0 0
    %6887 = vperm.xlu0 %6886, %v6820
    %v6888 = vpop.permute.xlu0 %6887
    %6889 = vset.pattern.permute.xlu0 0
    %6890 = vperm.xlu0 %6889, %v6821
    %v6891 = vpop.permute.xlu0 %6890
    %6892 = vset.pattern.permute.xlu0 0
    %6893 = vperm.xlu0 %6892, %v6822
    %v6894 = vpop.permute.xlu0 %6893
    %6895 = vset.pattern.permute.xlu0 0
    %6896 = vperm.xlu0 %6895, %v6823
    %v6897 = vpop.permute.xlu0 %6896
    %6898 = vset.pattern.permute.xlu0 0
    %6899 = vperm.xlu0 %6898, %v6824
    %v6900 = vpop.permute.xlu0 %6899
    %6901 = vset.pattern.permute.xlu0 0
    %6902 = vperm.xlu0 %6901, %v6825
    %v6903 = vpop.permute.xlu0 %6902
    %6904 = vset.pattern.permute.xlu0 0
    %6905 = vperm.xlu0 %6904, %v6826
    %v6906 = vpop.permute.xlu0 %6905
    %6907 = vset.pattern.permute.xlu0 0
    %6908 = vperm.xlu0 %6907, %v6827
    %v6909 = vpop.permute.xlu0 %6908
    %6910 = vset.pattern.permute.xlu0 0
    %6911 = vperm.xlu0 %6910, %v6828
    %v6912 = vpop.permute.xlu0 %6911
    %6913 = vset.pattern.permute.xlu0 0
    %6914 = vperm.xlu0 %6913, %v6829
    %v6915 = vpop.permute.xlu0 %6914
    %6916 = vset.pattern.permute.xlu0 0
    %6917 = vperm.xlu0 %6916, %v6830
    %v6918 = vpop.permute.xlu0 %6917
    %6919 = vset.pattern.permute.xlu0 0
    %6920 = vperm.xlu0 %6919, %v6831
    %v6921 = vpop.permute.xlu0 %6920
    %6922 = vset.pattern.permute.xlu0 0
    %6923 = vperm.xlu0 %6922, %v6832
    %v6924 = vpop.permute.xlu0 %6923
    %6925 = vset.pattern.permute.xlu0 0
    %6926 = vperm.xlu0 %6925, %v6833
    %v6927 = vpop.permute.xlu0 %6926
    %6928 = vset.pattern.permute.xlu0 0
    %6929 = vperm.xlu0 %6928, %v6834
    %v6930 = vpop.permute.xlu0 %6929
    %v6931 = vlaneseq
    %v6932 = vshrl.u32 %v6931, 7
    %v6933 = vsub.s32 %v1047, %v6932
    %v6934 = vrot.slane %v6837, %v6933
    %v6935 = vlaneseq
    %v6936 = vshrl.u32 %v6935, 7
    %v6937 = vsub.s32 %v1052, %v6936
    %v6938 = vrot.slane %v6840, %v6937
    %v6939 = vsel %vm1057, %v6938, %v6934
    %v6940 = vlaneseq
    %v6941 = vshrl.u32 %v6940, 7
    %v6942 = vsub.s32 %v1047, %v6941
    %v6943 = vrot.slane %v6843, %v6942
    %v6944 = vlaneseq
    %v6945 = vshrl.u32 %v6944, 7
    %v6946 = vsub.s32 %v1052, %v6945
    %v6947 = vrot.slane %v6846, %v6946
    %v6948 = vsel %vm1057, %v6947, %v6943
    %v6949 = vlaneseq
    %v6950 = vshrl.u32 %v6949, 7
    %v6951 = vsub.s32 %v1047, %v6950
    %v6952 = vrot.slane %v6849, %v6951
    %v6953 = vlaneseq
    %v6954 = vshrl.u32 %v6953, 7
    %v6955 = vsub.s32 %v1052, %v6954
    %v6956 = vrot.slane %v6852, %v6955
    %v6957 = vsel %vm1057, %v6956, %v6952
    %v6958 = vlaneseq
    %v6959 = vshrl.u32 %v6958, 7
    %v6960 = vsub.s32 %v1047, %v6959
    %v6961 = vrot.slane %v6855, %v6960
    %v6962 = vlaneseq
    %v6963 = vshrl.u32 %v6962, 7
    %v6964 = vsub.s32 %v1052, %v6963
    %v6965 = vrot.slane %v6858, %v6964
    %v6966 = vsel %vm1057, %v6965, %v6961
    %v6967 = vlaneseq
    %v6968 = vshrl.u32 %v6967, 7
    %v6969 = vsub.s32 %v1047, %v6968
    %v6970 = vrot.slane %v6861, %v6969
    %v6971 = vlaneseq
    %v6972 = vshrl.u32 %v6971, 7
    %v6973 = vsub.s32 %v1052, %v6972
    %v6974 = vrot.slane %v6864, %v6973
    %v6975 = vsel %vm1057, %v6974, %v6970
    %v6976 = vlaneseq
    %v6977 = vshrl.u32 %v6976, 7
    %v6978 = vsub.s32 %v1047, %v6977
    %v6979 = vrot.slane %v6867, %v6978
    %v6980 = vlaneseq
    %v6981 = vshrl.u32 %v6980, 7
    %v6982 = vsub.s32 %v1052, %v6981
    %v6983 = vrot.slane %v6870, %v6982
    %v6984 = vsel %vm1057, %v6983, %v6979
    %v6985 = vlaneseq
    %v6986 = vshrl.u32 %v6985, 7
    %v6987 = vsub.s32 %v1047, %v6986
    %v6988 = vrot.slane %v6873, %v6987
    %v6989 = vlaneseq
    %v6990 = vshrl.u32 %v6989, 7
    %v6991 = vsub.s32 %v1052, %v6990
    %v6992 = vrot.slane %v6876, %v6991
    %v6993 = vsel %vm1057, %v6992, %v6988
    %v6994 = vlaneseq
    %v6995 = vshrl.u32 %v6994, 7
    %v6996 = vsub.s32 %v1047, %v6995
    %v6997 = vrot.slane %v6879, %v6996
    %v6998 = vlaneseq
    %v6999 = vshrl.u32 %v6998, 7
    %v7000 = vsub.s32 %v1052, %v6999
    %v7001 = vrot.slane %v6882, %v7000
    %v7002 = vsel %vm1057, %v7001, %v6997
    %v7003 = vlaneseq
    %v7004 = vshrl.u32 %v7003, 7
    %v7005 = vsub.s32 %v1047, %v7004
    %v7006 = vrot.slane %v6885, %v7005
    %v7007 = vlaneseq
    %v7008 = vshrl.u32 %v7007, 7
    %v7009 = vsub.s32 %v1052, %v7008
    %v7010 = vrot.slane %v6888, %v7009
    %v7011 = vsel %vm1057, %v7010, %v7006
    %v7012 = vlaneseq
    %v7013 = vshrl.u32 %v7012, 7
    %v7014 = vsub.s32 %v1047, %v7013
    %v7015 = vrot.slane %v6891, %v7014
    %v7016 = vlaneseq
    %v7017 = vshrl.u32 %v7016, 7
    %v7018 = vsub.s32 %v1052, %v7017
    %v7019 = vrot.slane %v6894, %v7018
    %v7020 = vsel %vm1057, %v7019, %v7015
    %v7021 = vlaneseq
    %v7022 = vshrl.u32 %v7021, 7
    %v7023 = vsub.s32 %v1047, %v7022
    %v7024 = vrot.slane %v6897, %v7023
    %v7025 = vlaneseq
    %v7026 = vshrl.u32 %v7025, 7
    %v7027 = vsub.s32 %v1052, %v7026
    %v7028 = vrot.slane %v6900, %v7027
    %v7029 = vsel %vm1057, %v7028, %v7024
    %v7030 = vlaneseq
    %v7031 = vshrl.u32 %v7030, 7
    %v7032 = vsub.s32 %v1047, %v7031
    %v7033 = vrot.slane %v6903, %v7032
    %v7034 = vlaneseq
    %v7035 = vshrl.u32 %v7034, 7
    %v7036 = vsub.s32 %v1052, %v7035
    %v7037 = vrot.slane %v6906, %v7036
    %v7038 = vsel %vm1057, %v7037, %v7033
    %v7039 = vlaneseq
    %v7040 = vshrl.u32 %v7039, 7
    %v7041 = vsub.s32 %v1047, %v7040
    %v7042 = vrot.slane %v6909, %v7041
    %v7043 = vlaneseq
    %v7044 = vshrl.u32 %v7043, 7
    %v7045 = vsub.s32 %v1052, %v7044
    %v7046 = vrot.slane %v6912, %v7045
    %v7047 = vsel %vm1057, %v7046, %v7042
    %v7048 = vlaneseq
    %v7049 = vshrl.u32 %v7048, 7
    %v7050 = vsub.s32 %v1047, %v7049
    %v7051 = vrot.slane %v6915, %v7050
    %v7052 = vlaneseq
    %v7053 = vshrl.u32 %v7052, 7
    %v7054 = vsub.s32 %v1052, %v7053
    %v7055 = vrot.slane %v6918, %v7054
    %v7056 = vsel %vm1057, %v7055, %v7051
    %v7057 = vlaneseq
    %v7058 = vshrl.u32 %v7057, 7
    %v7059 = vsub.s32 %v1047, %v7058
    %v7060 = vrot.slane %v6921, %v7059
    %v7061 = vlaneseq
    %v7062 = vshrl.u32 %v7061, 7
    %v7063 = vsub.s32 %v1052, %v7062
    %v7064 = vrot.slane %v6924, %v7063
    %v7065 = vsel %vm1057, %v7064, %v7060
    %v7066 = vlaneseq
    %v7067 = vshrl.u32 %v7066, 7
    %v7068 = vsub.s32 %v1047, %v7067
    %v7069 = vrot.slane %v6927, %v7068
    %v7070 = vlaneseq
    %v7071 = vshrl.u32 %v7070, 7
    %v7072 = vsub.s32 %v1052, %v7071
    %v7073 = vrot.slane %v6930, %v7072
    %v7074 = vsel %vm1057, %v7073, %v7069
    %v7075 = vsel %vm1194, %v6948, %v6939
    %v7076 = vsel %vm1196, %v6957, %v7075
    %v7077 = vsel %vm1198, %v6966, %v7076
    %v7078 = vsel %vm1200, %v6975, %v7077
    %v7079 = vsel %vm1202, %v6984, %v7078
    %v7080 = vsel %vm1204, %v6993, %v7079
    %v7081 = vsel %vm1206, %v7002, %v7080
    %v7082 = vsel %vm1194, %v7020, %v7011
    %v7083 = vsel %vm1196, %v7029, %v7082
    %v7084 = vsel %vm1198, %v7038, %v7083
    %v7085 = vsel %vm1200, %v7047, %v7084
    %v7086 = vsel %vm1202, %v7056, %v7085
    %v7087 = vsel %vm1204, %v7065, %v7086
    %v7088 = vsel %vm1206, %v7074, %v7087
    %v7089 = vpack.c.b16 %v7088, %v7081
    %7091 = vrot.lane.b32.xlu0 %v5245, 112
    %v7092 = vpop.permute.xlu0 %7091
    %v7095 = vsel %vm579, %v7089, 0
    %7097 = vmatprep.subr.bf16.mxu0 0
    %7098 = vmatpush1.bf16.msra.mxu0 0
    %7099 = vmatprep.subr.bf16.mxu0 0
    %7100 = vmatpush1.bf16.msra.mxu0 0
    %7101 = vmatprep.subr.bf16.mxu0 0
    %7102 = vmatpush1.bf16.msra.mxu0 0
    %7103 = vmatprep.subr.bf16.mxu0 0
    %7104 = vmatpush1.bf16.msra.mxu0 0
    %7105 = vmatprep.subr.bf16.mxu0 0
    %7106 = vmatpush1.bf16.msra.mxu0 0
    %7107 = vmatprep.subr.bf16.mxu0 0
    %7108 = vmatpush1.bf16.msra.mxu0 0
    %7109 = vmatprep.subr.bf16.mxu0 0
    %7110 = vmatpush1.bf16.msra.mxu0 0
    %7111 = vmatprep.subr.bf16.mxu0 0
    %7112 = vmatpush1.bf16.msra.mxu0 %v7092
    %7113 = vmatprep.subr.bf16.mxu0 0
    %7114 = vmatpush2.bf16.msra.mxu0 0
    %7115 = vmatprep.subr.bf16.mxu0 0
    %7116 = vmatpush2.bf16.msra.mxu0 0
    %7117 = vmatprep.subr.bf16.mxu0 0
    %7118 = vmatpush2.bf16.msra.mxu0 0
    %7119 = vmatprep.subr.bf16.mxu0 0
    %7120 = vmatpush2.bf16.msra.mxu0 0
    %7121 = vmatprep.subr.bf16.mxu0 0
    %7122 = vmatpush2.bf16.msra.mxu0 0
    %7123 = vmatprep.subr.bf16.mxu0 0
    %7124 = vmatpush2.bf16.msra.mxu0 0
    %7125 = vmatprep.subr.bf16.mxu0 0
    %7126 = vmatpush2.bf16.msra.mxu0 0
    %7127 = vmatprep.subr.bf16.mxu0 0
    %7128 = vmatpush2.bf16.msra.mxu0 0
    %7129 = vmatprep.mubr.bf16.mxu0 0
    %7130 = vmatmul.mubr.bf16.gmra.mxu0 %v7095
    %v7131 = vpop.f32.mrf.mxu0
    %v7132 = vadd.f32 0.0, %v7131
    %v7133 = vpop.f32.mrf.mxu0
    %v7134 = vpop.f32.mrf.mxu0
    %v7135 = vadd.f32 0.0, %v7134
    %v7136 = vpop.f32.mrf.mxu0
    %7137 = vdwg.mxu0
    %7140 = vrot.lane.b32.xlu0 %v7132, 16
    %v7141 = vpop.permute.xlu0 %7140
    %7142 = vrot.lane.b32.xlu0 %v7135, 16
    %v7143 = vpop.permute.xlu0 %7142
    %v7146 = vsel %vm579, %v5587, %v7141
    %v7147 = vsel %vm579, %v5590, %v7143
    %v7149 = vlaneseq
    %v7150 = vshrl.u32 %v7149, 7
    %v7151 = vsub.s32 0, %v7150
    %v7152 = vrot.slane %v3751, %v7151
    %v7154 = vadd.f32 %v7146, %v7152
    %v7155 = vadd.f32 %v7147, %v7152
    %v7156 = vmax.f32 %v7154, 0.0
    %v7157 = vmax.f32 %v7155, 0.0
    %v7158 = vmul.f32 %v7156, 0.5
    %v7159 = vmul.f32 %v7157, 0.5
    %v7160 = vmul.f32 %v3738, 0.5
    %v7161 = vmul.f32 %v3739, 0.5
    %v7162 = vadd.f32 %v7158, %v7160
    %v7163 = vadd.f32 %v7159, %v7161
    %v7164 = vpack.c.bf16 %v7163, %v7162
    %v7165 = vld [vmem:[%s14] sm:$0xf]
    %v7166 = vld [vmem:[%s14 + $0x4] sm:$0xf]
    %v7167 = vld [vmem:[%s14 + $0x8] sm:$0xf]
    %v7168 = vld [vmem:[%s14 + $0xc] sm:$0xf]
    %v7169 = vld [vmem:[%s15] sm:$0x1]
    %v7171 = vlaneseq
    %v7172 = vshrl.u32 %v7171, 7
    %v7173 = vsub.s32 0, %v7172
    %v7174 = vrot.slane %v7169, %v7173
    %v7180 = vunpack.c.l.b16 %v7165
    %v7181 = vunpack.c.l.b16 %v7166
    %v7182 = vunpack.c.l.b16 %v7167
    %v7183 = vunpack.c.l.b16 %v7168
    %v7184 = vpack.c.b16 %v7181, %v7180
    %v7185 = vpack.c.b16 %v7183, %v7182
    %v7189 = vsel %vm3771, %v7164, 0
    %7191 = vmatprep.subr.bf16.mxu0 0
    %7192 = vmatpush1.bf16.msra.mxu0 0
    %7193 = vmatprep.subr.bf16.mxu0 0
    %7194 = vmatpush1.bf16.msra.mxu0 0
    %7195 = vmatprep.subr.bf16.mxu0 0
    %7196 = vmatpush1.bf16.msra.mxu0 0
    %7197 = vmatprep.subr.bf16.mxu0 0
    %7198 = vmatpush1.bf16.msra.mxu0 0
    %7199 = vmatprep.subr.bf16.mxu0 0
    %7200 = vmatpush1.bf16.msra.mxu0 0
    %7201 = vmatprep.subr.bf16.mxu0 0
    %7202 = vmatpush1.bf16.msra.mxu0 0
    %7203 = vmatprep.subr.bf16.mxu0 0
    %7204 = vmatpush1.bf16.msra.mxu0 %v7185
    %7205 = vmatprep.subr.bf16.mxu0 0
    %7206 = vmatpush1.bf16.msra.mxu0 %v7184
    %7207 = vmatprep.subr.bf16.mxu0 0
    %7208 = vmatpush2.bf16.msra.mxu0 0
    %7209 = vmatprep.subr.bf16.mxu0 0
    %7210 = vmatpush2.bf16.msra.mxu0 0
    %7211 = vmatprep.subr.bf16.mxu0 0
    %7212 = vmatpush2.bf16.msra.mxu0 0
    %7213 = vmatprep.subr.bf16.mxu0 0
    %7214 = vmatpush2.bf16.msra.mxu0 0
    %7215 = vmatprep.subr.bf16.mxu0 0
    %7216 = vmatpush2.bf16.msra.mxu0 0
    %7217 = vmatprep.subr.bf16.mxu0 0
    %7218 = vmatpush2.bf16.msra.mxu0 0
    %7219 = vmatprep.subr.bf16.mxu0 0
    %7220 = vmatpush2.bf16.msra.mxu0 0
    %7221 = vmatprep.subr.bf16.mxu0 0
    %7222 = vmatpush2.bf16.msra.mxu0 0
    %7223 = vmatprep.mubr.bf16.mxu0 0
    %7224 = vmatmul.mubr.bf16.gmra.mxu0 %v7189
    %v7225 = vpop.f32.mrf.mxu0
    %v7226 = vadd.f32 %v7174, %v7225
    %v7227 = vpop.f32.mrf.mxu0
    %v7228 = vpop.f32.mrf.mxu0
    %v7229 = vadd.f32 %v7174, %v7228
    %v7230 = vpop.f32.mrf.mxu0
    %7231 = vdwg.mxu0
    %v7232 = vmax.f32 %v7226, 0.0
    %v7233 = vmax.f32 %v7229, 0.0
    %v7234 = vpack.c.bf16 %v7233, %v7232
    %v7235 = vld [vmem:[%s16] sm:$0x3]
    %v7236 = vld [vmem:[%s17] sm:$0x1]
    %v7238 = vlaneseq
    %v7239 = vshrl.u32 %v7238, 7
    %v7240 = vsub.s32 0, %v7239
    %v7241 = vrot.slane %v7236, %v7240
    %vm7243 = vcmask 31744
    %v7245 = vsel %vm7243, %v7234, 0
    %vm7247 = vcmask 1041408
    %v7249 = vsel %vm7247, %v7235, 0
    %7251 = vmatprep.subr.bf16.mxu0 0
    %7252 = vmatpush1.bf16.msra.mxu0 0
    %7253 = vmatprep.subr.bf16.mxu0 0
    %7254 = vmatpush1.bf16.msra.mxu0 0
    %7255 = vmatprep.subr.bf16.mxu0 0
    %7256 = vmatpush1.bf16.msra.mxu0 0
    %7257 = vmatprep.subr.bf16.mxu0 0
    %7258 = vmatpush1.bf16.msra.mxu0 0
    %7259 = vmatprep.subr.bf16.mxu0 0
    %7260 = vmatpush1.bf16.msra.mxu0 0
    %7261 = vmatprep.subr.bf16.mxu0 0
    %7262 = vmatpush1.bf16.msra.mxu0 0
    %7263 = vmatprep.subr.bf16.mxu0 0
    %7264 = vmatpush1.bf16.msra.mxu0 0
    %7265 = vmatprep.subr.bf16.mxu0 0
    %7266 = vmatpush1.bf16.msra.mxu0 %v7249
    %7267 = vmatprep.subr.bf16.mxu0 0
    %7268 = vmatpush2.bf16.msra.mxu0 0
    %7269 = vmatprep.subr.bf16.mxu0 0
    %7270 = vmatpush2.bf16.msra.mxu0 0
    %7271 = vmatprep.subr.bf16.mxu0 0
    %7272 = vmatpush2.bf16.msra.mxu0 0
    %7273 = vmatprep.subr.bf16.mxu0 0
    %7274 = vmatpush2.bf16.msra.mxu0 0
    %7275 = vmatprep.subr.bf16.mxu0 0
    %7276 = vmatpush2.bf16.msra.mxu0 0
    %7277 = vmatprep.subr.bf16.mxu0 0
    %7278 = vmatpush2.bf16.msra.mxu0 0
    %7279 = vmatprep.subr.bf16.mxu0 0
    %7280 = vmatpush2.bf16.msra.mxu0 0
    %7281 = vmatprep.subr.bf16.mxu0 0
    %7282 = vmatpush2.bf16.msra.mxu0 0
    %7283 = vmatprep.mubr.bf16.mxu0 0
    %7284 = vmatmul.mubr.bf16.gmra.mxu0 %v7245
    %v7285 = vpop.f32.mrf.mxu0
    %v7286 = vadd.f32 %v7241, %v7285
    %v7287 = vpop.f32.mrf.mxu0
    %v7288 = vpop.f32.mrf.mxu0
    %v7289 = vadd.f32 %v7241, %v7288
    %v7290 = vpop.f32.mrf.mxu0
    %7291 = vdwg.mxu0
    %v7292 = vsub.f32 0.0, %v7286
    %v7293 = vsub.f32 0.0, %v7289
    %v7294 = vmul.f32 %v7292, 1.442695
    %v7295 = vpow.pop %v7294
    %v7296 = vmul.f32 %v7293, 1.442695
    %v7297 = vpow.pop %v7296
    %v7298 = vadd.f32 %v7295, 1.0
    %v7299 = vadd.f32 %v7297, 1.0
    %v7300 = vrcp.pop %v7298
    %v7301 = vrcp.pop %v7299
    %7302 = vst [vmem:[#allocation11] sm:$0xff] %v7300
    %7303 = vst [vmem:[#allocation11 + $0x8] sm:$0xff] %v7301
    // Predicated region
    $region94: #{tpu_custom_call.1} parent=1 // pred_check
      _
    $region95: #{tpu_custom_call.1} parent=1 // pred_check_branch
      %7305 = sbr.rel (0) target = $region97
    $region96: #{tpu_custom_call.1} parent=1 // pred_region
      %s7307 = ssub.s32 256, 256
      %7308 = vsyncadd [#allocation4], %s7307
      %s7309 = sshll.u32 [#allocation11], 4
      %s7310 = int_to_ptr.vmem [resolvable:$true] %s7309
      %7315 = dma.vmem_to_hbm [thread:$0]  %s7310, 256, %s18, [#allocation4], 128, 128, 8
    $region97: #{tpu_custom_call.1} parent=1 // pred_fallthru
      _
    // Predicated region
    $region98: #{tpu_custom_call.1} parent=1 // pred_check
      _
    $region99: #{tpu_custom_call.1} parent=1 // pred_check_branch
      %7317 = sbr.rel (0) target = $region101
    $region100: #{tpu_custom_call.1} parent=1 // pred_region
      %7318 = dma.done [#allocation4], 256
    $region101: #{tpu_custom_call.1} parent=1 // pred_fallthru
      _
    %7319 = vsyncpa [#allocation3], 1
    %7320 = vsyncpa [#allocation6], 1
    %7321 = vsyncpa [#allocation9], 1
    %7322 = vsyncpa [#allocation4], 1

</llo_original>
